<compile_context>
chip_gen: v7x
topology: tpu7x:2x2x1
jax: 0.10.0
libtpu: 0.0.40
codegen_flags: <defaults>
</compile_context>

<pallas_src>
import functools

import jax
import jax.numpy as jnp
from jax import lax
from jax.experimental import pallas as pl
from jax.experimental.pallas import tpu as pltpu


# A @ B^T: contract the last (lane) axis of both operands -> native MXU form,
# no materialized transpose of either operand.
_DN_LAST = (((1,), (1,)), ((), ()))


def _fused_cross_attn_kernel(pal_ref, xkv_ref, xres_ref,
                             wq_ref, bq_ref, wk_ref, bk_ref,
                             wv_ref, bv_ref, wo_ref, bo_ref,
                             o_ref,
                             kT_sc, vT_sc, attnT_sc,
                             *, num_heads, scale, batch, kv_chunk, mm_dtype):
    """Grid = (attention batch, query tile).  Everything stays in VMEM.

    Layout convention: activations are feature-major, i.e. (E, rows) with the
    embed dim on sublanes, so per-head slices are cheap sublane slices and all
    stores are lane-dense.
    """
    f32 = jnp.float32
    qt = pl.program_id(1)

    # ---- K / V projections: once per attention batch, stashed in scratch ----
    # xkv_ref holds spatial chunk i of ALL true batches: (b, E, kv_chunk).
    # K^T / V^T are built batch-major along lanes (order is irrelevant for the
    # key axis of a softmax as long as K and V agree).
    @pl.when(qt == 0)
    def _stash_kv():
        wk = wk_ref[...].astype(mm_dtype)
        wv = wv_ref[...].astype(mm_dtype)
        for p in range(batch):  # static, tiny
            xp = xkv_ref[p].astype(mm_dtype)                       # (E, kv_chunk)
            kT = jnp.dot(wk, xp, preferred_element_type=f32) + bk_ref[...]
            vT = jnp.dot(wv, xp, preferred_element_type=f32) + bv_ref[...]
            kT_sc[:, pl.ds(p * kv_chunk, kv_chunk)] = kT
            vT_sc[:, pl.ds(p * kv_chunk, kv_chunk)] = vT

    # ---- Q projection for this query tile, feature-major (E, TQ) ----------
    # pal_ref is (TQ, cp) seq-major rows; contract cp of both operands.
    qT = lax.dot_general(wq_ref[...].astype(mm_dtype),
                         pal_ref[...].astype(mm_dtype),
                         _DN_LAST, preferred_element_type=f32)      # (E, TQ)
    qT = (qT + bq_ref[...]) * scale        # fold softmax scale into Q

    E, TQ = qT.shape
    Dh = E // num_heads

    # ---- Per-head attention: sublane slices, no lane cuts, no concat -------
    for hh in range(num_heads):
        r0 = hh * Dh
        q_h = jnp.transpose(qT[r0:r0 + Dh, :])                      # (TQ, Dh)
        kT_h = kT_sc[pl.ds(r0, Dh), :]                              # (Dh, Lk)
        s = jnp.dot(q_h.astype(mm_dtype), kT_h.astype(mm_dtype),
                    preferred_element_type=f32)                     # (TQ, Lk)
        m = jnp.max(s, axis=-1, keepdims=True)
        e = jnp.exp(s - m)
        den = jnp.sum(e, axis=-1, keepdims=True)                    # (TQ, 1)
        p_mat = e * pl.reciprocal(den, approx=True)                 # EUP, not VALU
        vT_h = vT_sc[pl.ds(r0, Dh), :]                              # (Dh, Lk)
        pvT = lax.dot_general(vT_h.astype(mm_dtype), p_mat.astype(mm_dtype),
                              _DN_LAST, preferred_element_type=f32)  # (Dh, TQ)
        attnT_sc[pl.ds(r0, Dh), :] = pvT   # static row offset, 8-aligned

    # ---- Output projection + bias + fused residual, lane-dense store -------
    outT = jnp.dot(wo_ref[...].astype(mm_dtype),
                   attnT_sc[...].astype(mm_dtype),
                   preferred_element_type=f32)                      # (E, TQ)
    outT = outT + bo_ref[...]
    o_ref[0] = (xres_ref[0] + outT).astype(o_ref.dtype)


def cross_attention(params, x, palette_embedding, num_heads, *,
                    q_tile=128, use_bf16_matmul=False):
    b, c, h, w = x.shape
    bp, cp, hp, wp = palette_embedding.shape
    E = c
    S = h * w
    Sp = hp * wp
    if bp != b:
        raise ValueError(f"palette batch {bp} != x batch {b}")
    if Sp != S:
        raise ValueError(f"palette spatial size {Sp} must equal h*w={S} "
                         "(required by the module's final reshape)")
    if E % num_heads:
        raise ValueError("embed_dim must be divisible by num_heads")
    if q_tile % 128 or S % q_tile:
        # TODO(synk): pad S up to the next multiple of 128 instead of raising.
        raise ValueError(f"h*w={S} must be a multiple of q_tile={q_tile} "
                         "(itself a multiple of 128) for lane-dense stores")
    if S % b or (b > 1 and (S // b) % 128):
        # TODO(synk): fall back to a seq-major x layout for these shapes.
        raise ValueError(f"h*w={S} must be divisible by batch={b} with "
                         "(h*w)//batch a multiple of 128 when batch > 1")

    Dh = E // num_heads
    scale = float(Dh) ** -0.5
    TQ = q_tile
    nq = S // TQ
    Spc = S // b                     # keys per true batch per attention batch
    mm_dtype = jnp.bfloat16 if use_bf16_matmul else jnp.float32

    # x stays in its native NCHW-flat layout; reshape is free (no data motion).
    x3 = x.reshape(b, E, S)
    # Palette is the only wrapper-side relayout left: the raw-.view query order
    # interleaves true batches (see header), and that order fixes which output
    # column each query writes.  cp*S*b elements -- the smallest tensor here.
    pal_sb = jnp.transpose(palette_embedding.reshape(b, cp, Sp),
                           (2, 0, 1)).reshape(Sp * b, cp)

    # Biases as column vectors (everything in-kernel is feature-major).
    bq = params["b_q"].reshape(E, 1)
    bk = params["b_k"].reshape(E, 1)
    bv = params["b_v"].reshape(E, 1)
    bo = params["b_out"].reshape(E, 1)

    kern = functools.partial(_fused_cross_attn_kernel,
                             num_heads=num_heads, scale=scale, batch=b,
                             kv_chunk=Spc, mm_dtype=mm_dtype)

    out3 = pl.pallas_call(
        kern,
        out_shape=jax.ShapeDtypeStruct((b, E, S), x.dtype),
        grid=(b, nq),
        in_specs=[
            # seq-major palette rows for this (attention batch, query tile)
            pl.BlockSpec((TQ, cp), lambda i, qt: (i * nq + qt, 0)),
            # K/V source: spatial chunk i of x across ALL true batches.
            # Index is invariant in qt -> fetched once per attention batch.
            pl.BlockSpec((b, E, Spc), lambda i, qt: (0, 0, i)),
            # residual slab for this output tile (same array, different block)
            pl.BlockSpec((1, E, TQ), lambda i, qt: (i, 0, qt)),
            # weights / biases: block-index invariant, resident in VMEM
            pl.BlockSpec((E, cp), lambda i, qt: (0, 0)),   # W_q
            pl.BlockSpec((E, 1), lambda i, qt: (0, 0)),    # b_q
            pl.BlockSpec((E, E), lambda i, qt: (0, 0)),    # W_k
            pl.BlockSpec((E, 1), lambda i, qt: (0, 0)),    # b_k
            pl.BlockSpec((E, E), lambda i, qt: (0, 0)),    # W_v
            pl.BlockSpec((E, 1), lambda i, qt: (0, 0)),    # b_v
            pl.BlockSpec((E, E), lambda i, qt: (0, 0)),    # W_out
            pl.BlockSpec((E, 1), lambda i, qt: (0, 0)),    # b_out
        ],
        out_specs=pl.BlockSpec((1, E, TQ), lambda i, qt: (i, 0, qt)),
        scratch_shapes=[
            pltpu.VMEM((E, S), jnp.float32),    # K^T, resident across q tiles
            pltpu.VMEM((E, S), jnp.float32),    # V^T, resident across q tiles
            pltpu.VMEM((E, TQ), jnp.float32),   # per-step head-merge accumulator
        ],
        compiler_params=pltpu.CompilerParams(
            # batch axis may be sharded across TensorCores; the query-tile axis
            # is sequential per core because of the qt==0 K/V stash.
            dimension_semantics=("parallel", "arbitrary"),
            vmem_limit_bytes=48 * 1024 * 1024,
        ),
    )(pal_sb, x3, x3,
      params["W_q"], bq, params["W_k"], bk,
      params["W_v"], bv, params["W_out"], bo)

    return out3.reshape(b, c, h, w)


def cross_attention_ref(params, x, palette_embedding, num_heads):
    """Pure-JAX mirror of the PyTorch forward (sanity check only)."""
    b, c, h, w = x.shape
    E = c
    S = h * w
    x_flat = jnp.transpose(x.reshape(b, c, S), (2, 0, 1))             # (S, b, E)
    k = x_flat @ params["W_k"].T + params["b_k"]
    v = x_flat @ params["W_v"].T + params["b_v"]
    bp, cp, hp, wp = palette_embedding.shape
    p_flat = jnp.transpose(palette_embedding.reshape(bp, cp, hp * wp), (2, 0, 1))
    q = p_flat @ params["W_q"].T + params["b_q"]
    H = num_heads
    Dh = E // H
    scale = Dh ** -0.5
    q4 = q.reshape(b, -1, H, Dh).transpose(0, 2, 1, 3)   # raw .view semantics
    k4 = k.reshape(b, -1, H, Dh).transpose(0, 2, 1, 3)
    v4 = v.reshape(b, -1, H, Dh).transpose(0, 2, 1, 3)
    s = jnp.einsum("bhqd,bhkd->bhqk", q4, k4) * scale
    p = jax.nn.softmax(s, axis=-1)
    o = jnp.einsum("bhqk,bhkd->bhqd", p, v4)
    o = o.transpose(0, 2, 1, 3).reshape(b, -1, E)
    o = o @ params["W_out"].T + params["b_out"]
    o = jnp.transpose(o, (0, 2, 1)).reshape(b, c, h, w)
    return x + o


def init_params(key, embed_dim, palette_embed):
    ks = jax.random.split(key, 8)
    sc = 0.1
    return {
        "W_q":   sc * jax.random.normal(ks[0], (embed_dim, palette_embed), jnp.float32),
        "b_q":   sc * jax.random.normal(ks[1], (embed_dim,), jnp.float32),
        "W_k":   sc * jax.random.normal(ks[2], (embed_dim, embed_dim), jnp.float32),
        "b_k":   sc * jax.random.normal(ks[3], (embed_dim,), jnp.float32),
        "W_v":   sc * jax.random.normal(ks[4], (embed_dim, embed_dim), jnp.float32),
        "b_v":   sc * jax.random.normal(ks[5], (embed_dim,), jnp.float32),
        "W_out": sc * jax.random.normal(ks[6], (embed_dim, embed_dim), jnp.float32),
        "b_out": sc * jax.random.normal(ks[7], (embed_dim,), jnp.float32),
    }


if __name__ == "__main__":
    key = jax.random.PRNGKey(0)
    k_x, k_p, k_w = jax.random.split(key, 3)

    # Small, lane-friendly shapes consistent with the module:
    #   c == embed_dim, palette channels == palette_embed, palette spatial == h*w.
    batch, embed_dim, h, w = 2, 128, 16, 16      # S = 256 -> 2 query tiles of 128
    palette_embed = 64
    num_heads = 4                                # head_dim = 32
    hp, wp = 16, 16                              # Sp = 256 == h*w

    x = jax.random.normal(k_x, (batch, embed_dim, h, w), jnp.float32)
    palette = jax.random.normal(k_p, (batch, palette_embed, hp, wp), jnp.float32)
    params = init_params(k_w, embed_dim, palette_embed)

    fwd = jax.jit(functools.partial(cross_attention, num_heads=num_heads))
    out = fwd(params, x, palette)
    jax.block_until_ready(out)
    assert out.shape == x.shape and out.dtype == x.dtype

    # Loose-tolerance sanity check against the pure-JAX mirror of the torch
    # code (loose because of the approximate EUP reciprocal and MXU precision).
    ref = cross_attention_ref(params, x, palette, num_heads)
    max_err = float(jnp.max(jnp.abs(out - ref)))
    assert jnp.allclose(out, ref, atol=2e-2, rtol=2e-2), max_err

    print("KERNEL_OK")
</pallas_src>

<mosaic_0001>
module attributes {stable_mosaic.version = 11 : i64} {
  func.func @_fused_cross_attn_kernel(%arg0: i32, %arg1: i32, %arg2: memref<128x64xf32, #tpu.memory_space<vmem>>, %arg3: memref<2x128x128xf32, #tpu.memory_space<vmem>>, %arg4: memref<1x128x128xf32, #tpu.memory_space<vmem>>, %arg5: memref<128x64xf32, #tpu.memory_space<vmem>>, %arg6: memref<128x1xf32, #tpu.memory_space<vmem>>, %arg7: memref<128x128xf32, #tpu.memory_space<vmem>>, %arg8: memref<128x1xf32, #tpu.memory_space<vmem>>, %arg9: memref<128x128xf32, #tpu.memory_space<vmem>>, %arg10: memref<128x1xf32, #tpu.memory_space<vmem>>, %arg11: memref<128x128xf32, #tpu.memory_space<vmem>>, %arg12: memref<128x1xf32, #tpu.memory_space<vmem>>, %arg13: memref<1x128x128xf32, #tpu.memory_space<vmem>>, %arg14: memref<128x256xf32, #tpu.memory_space<vmem>>, %arg15: memref<128x256xf32, #tpu.memory_space<vmem>>, %arg16: memref<128x128xf32, #tpu.memory_space<vmem>>) attributes {dimension_semantics = [#tpu.dimension_semantics<parallel>, #tpu.dimension_semantics<arbitrary>], iteration_bounds = array<i64: 2, 2>, scalar_prefetch = 0 : i64, scratch_operands = 3 : i64, tpu.core_type = #tpu.core_type<tc>, window_params = [{transform_indices = @transform_0, window_bounds = array<i64: 128, 64>}, {transform_indices = @transform_1, window_bounds = array<i64: 2, 128, 128>}, {transform_indices = @transform_2, window_bounds = array<i64: 1, 128, 128>}, {pipeline_mode = #tpu.pipeline_mode<synchronous>, transform_indices = @transform_3, window_bounds = array<i64: 128, 64>}, {pipeline_mode = #tpu.pipeline_mode<synchronous>, transform_indices = @transform_4, window_bounds = array<i64: 128, 1>}, {pipeline_mode = #tpu.pipeline_mode<synchronous>, transform_indices = @transform_5, window_bounds = array<i64: 128, 128>}, {pipeline_mode = #tpu.pipeline_mode<synchronous>, transform_indices = @transform_6, window_bounds = array<i64: 128, 1>}, {pipeline_mode = #tpu.pipeline_mode<synchronous>, transform_indices = @transform_7, window_bounds = array<i64: 128, 128>}, {pipeline_mode = #tpu.pipeline_mode<synchronous>, transform_indices = @transform_8, window_bounds = array<i64: 128, 1>}, {pipeline_mode = #tpu.pipeline_mode<synchronous>, transform_indices = @transform_9, window_bounds = array<i64: 128, 128>}, {pipeline_mode = #tpu.pipeline_mode<synchronous>, transform_indices = @transform_10, window_bounds = array<i64: 128, 1>}, {transform_indices = @transform_11, window_bounds = array<i64: 1, 128, 128>}]} {
    %c0_i32 = arith.constant 0 : i32
    %0 = arith.cmpi eq, %arg1, %c0_i32 : i32
    %1 = arith.extui %0 : i1 to i32
    %c0_i32_0 = arith.constant 0 : i32
    %2 = arith.cmpi ne, %1, %c0_i32_0 : i32
    scf.if %2 {
      %c0_57 = arith.constant 0 : index
      %c0_58 = arith.constant 0 : index
      %91 = vector.load %arg7[%c0_57, %c0_58] : memref<128x128xf32, #tpu.memory_space<vmem>>, vector<128x128xf32>
      %c0_59 = arith.constant 0 : index
      %c0_60 = arith.constant 0 : index
      %92 = vector.load %arg9[%c0_59, %c0_60] : memref<128x128xf32, #tpu.memory_space<vmem>>, vector<128x128xf32>
      %c0_61 = arith.constant 0 : index
      %c0_62 = arith.constant 0 : index
      %c0_63 = arith.constant 0 : index
      %93 = vector.load %arg3[%c0_61, %c0_62, %c0_63] : memref<2x128x128xf32, #tpu.memory_space<vmem>>, vector<1x128x128xf32>
      %94 = vector.shape_cast %93 : vector<1x128x128xf32> to vector<128x128xf32>
      %cst_64 = arith.constant dense<0.000000e+00> : vector<128x128xf32>
      %95 = tpu.matmul %91, %94, %cst_64 {dimension_numbers = #tpu.dot_dimension_numbers<[1], [0], [0], [1], [0, 0, 1, 1], [], []>} : vector<128x128xf32>, vector<128x128xf32>, vector<128x128xf32> -> vector<128x128xf32>
      %c0_65 = arith.constant 0 : index
      %c0_66 = arith.constant 0 : index
      %96 = vector.load %arg8[%c0_65, %c0_66] : memref<128x1xf32, #tpu.memory_space<vmem>>, vector<128x1xf32>
      %97 = vector.broadcast %96 : vector<128x1xf32> to vector<128x128xf32>
      %98 = arith.addf %95, %97 : vector<128x128xf32>
      %cst_67 = arith.constant dense<0.000000e+00> : vector<128x128xf32>
      %99 = tpu.matmul %92, %94, %cst_67 {dimension_numbers = #tpu.dot_dimension_numbers<[1], [0], [0], [1], [0, 0, 1, 1], [], []>} : vector<128x128xf32>, vector<128x128xf32>, vector<128x128xf32> -> vector<128x128xf32>
      %c0_68 = arith.constant 0 : index
      %c0_69 = arith.constant 0 : index
      %100 = vector.load %arg10[%c0_68, %c0_69] : memref<128x1xf32, #tpu.memory_space<vmem>>, vector<128x1xf32>
      %101 = vector.broadcast %100 : vector<128x1xf32> to vector<128x128xf32>
      %102 = arith.addf %99, %101 : vector<128x128xf32>
      %c0_70 = arith.constant 0 : index
      %c0_71 = arith.constant 0 : index
      %103 = vector.load %arg14[%c0_70, %c0_71] : memref<128x256xf32, #tpu.memory_space<vmem>>, vector<128x128xf32>
      tpu.vector_store %arg14[%c0_70, %c0_71], %98 {strides = array<i32>} : memref<128x256xf32, #tpu.memory_space<vmem>>, vector<128x128xf32>,
      %c0_72 = arith.constant 0 : index
      %c0_73 = arith.constant 0 : index
      %104 = vector.load %arg15[%c0_72, %c0_73] : memref<128x256xf32, #tpu.memory_space<vmem>>, vector<128x128xf32>
      tpu.vector_store %arg15[%c0_72, %c0_73], %102 {strides = array<i32>} : memref<128x256xf32, #tpu.memory_space<vmem>>, vector<128x128xf32>,
      %c1 = arith.constant 1 : index
      %c0_74 = arith.constant 0 : index
      %c0_75 = arith.constant 0 : index
      %105 = vector.load %arg3[%c1, %c0_74, %c0_75] : memref<2x128x128xf32, #tpu.memory_space<vmem>>, vector<1x128x128xf32>
      %106 = vector.shape_cast %105 : vector<1x128x128xf32> to vector<128x128xf32>
      %cst_76 = arith.constant dense<0.000000e+00> : vector<128x128xf32>
      %107 = tpu.matmul %91, %106, %cst_76 {dimension_numbers = #tpu.dot_dimension_numbers<[1], [0], [0], [1], [0, 0, 1, 1], [], []>} : vector<128x128xf32>, vector<128x128xf32>, vector<128x128xf32> -> vector<128x128xf32>
      %c0_77 = arith.constant 0 : index
      %c0_78 = arith.constant 0 : index
      %108 = vector.load %arg8[%c0_77, %c0_78] : memref<128x1xf32, #tpu.memory_space<vmem>>, vector<128x1xf32>
      %109 = vector.broadcast %108 : vector<128x1xf32> to vector<128x128xf32>
      %110 = arith.addf %107, %109 : vector<128x128xf32>
      %cst_79 = arith.constant dense<0.000000e+00> : vector<128x128xf32>
      %111 = tpu.matmul %92, %106, %cst_79 {dimension_numbers = #tpu.dot_dimension_numbers<[1], [0], [0], [1], [0, 0, 1, 1], [], []>} : vector<128x128xf32>, vector<128x128xf32>, vector<128x128xf32> -> vector<128x128xf32>
      %c0_80 = arith.constant 0 : index
      %c0_81 = arith.constant 0 : index
      %112 = vector.load %arg10[%c0_80, %c0_81] : memref<128x1xf32, #tpu.memory_space<vmem>>, vector<128x1xf32>
      %113 = vector.broadcast %112 : vector<128x1xf32> to vector<128x128xf32>
      %114 = arith.addf %111, %113 : vector<128x128xf32>
      %c0_82 = arith.constant 0 : index
      %c128 = arith.constant 128 : index
      %115 = vector.load %arg14[%c0_82, %c128] : memref<128x256xf32, #tpu.memory_space<vmem>>, vector<128x128xf32>
      tpu.vector_store %arg14[%c0_82, %c128], %110 {strides = array<i32>} : memref<128x256xf32, #tpu.memory_space<vmem>>, vector<128x128xf32>,
      %c0_83 = arith.constant 0 : index
      %c128_84 = arith.constant 128 : index
      %116 = vector.load %arg15[%c0_83, %c128_84] : memref<128x256xf32, #tpu.memory_space<vmem>>, vector<128x128xf32>
      tpu.vector_store %arg15[%c0_83, %c128_84], %114 {strides = array<i32>} : memref<128x256xf32, #tpu.memory_space<vmem>>, vector<128x128xf32>,
    } else {
    }
    %c0 = arith.constant 0 : index
    %c0_1 = arith.constant 0 : index
    %3 = vector.load %arg5[%c0, %c0_1] : memref<128x64xf32, #tpu.memory_space<vmem>>, vector<128x64xf32>
    %c0_2 = arith.constant 0 : index
    %c0_3 = arith.constant 0 : index
    %4 = vector.load %arg2[%c0_2, %c0_3] : memref<128x64xf32, #tpu.memory_space<vmem>>, vector<128x64xf32>
    %cst = arith.constant dense<0.000000e+00> : vector<128x128xf32>
    %5 = tpu.matmul %3, %4, %cst {dimension_numbers = #tpu.dot_dimension_numbers<[1], [1], [0], [0], [0, 0, 1, 0], [], []>} : vector<128x64xf32>, vector<128x64xf32>, vector<128x128xf32> -> vector<128x128xf32>
    %c0_4 = arith.constant 0 : index
    %c0_5 = arith.constant 0 : index
    %6 = vector.load %arg6[%c0_4, %c0_5] : memref<128x1xf32, #tpu.memory_space<vmem>>, vector<128x1xf32>
    %7 = vector.broadcast %6 : vector<128x1xf32> to vector<128x128xf32>
    %8 = arith.addf %5, %7 : vector<128x128xf32>
    %cst_6 = arith.constant 0.176776692 : f32
    %9 = vector.broadcast %cst_6 : f32 to vector<128x128xf32>
    %10 = arith.mulf %8, %9 : vector<128x128xf32>
    %11 = vector.extract_strided_slice %10 {offsets = [0, 0], sizes = [32, 128], strides = [1, 1]} : vector<128x128xf32> to vector<32x128xf32>
    %12 = tpu.transpose %11, [1, 0] : vector<32x128xf32> -> vector<128x32xf32>
    %c0_7 = arith.constant 0 : index
    %c0_8 = arith.constant 0 : index
    %13 = vector.load %arg14[%c0_7, %c0_8] : memref<128x256xf32, #tpu.memory_space<vmem>>, vector<32x256xf32>
    %cst_9 = arith.constant dense<0.000000e+00> : vector<128x256xf32>
    %14 = tpu.matmul %12, %13, %cst_9 {dimension_numbers = #tpu.dot_dimension_numbers<[1], [0], [0], [1], [0, 0, 1, 1], [], []>} : vector<128x32xf32>, vector<32x256xf32>, vector<128x256xf32> -> vector<128x256xf32>
    %cst_10 = arith.constant dense<0xFF800000> : vector<128xf32>
    %15 = vector.multi_reduction <maximumf>, %14, %cst_10 [1] : vector<128x256xf32> to vector<128xf32>
    %16 = vector.shape_cast %15 : vector<128xf32> to vector<128x1xf32>
    %17 = vector.broadcast %16 : vector<128x1xf32> to vector<128x256xf32>
    %18 = arith.subf %14, %17 : vector<128x256xf32>
    %19 = math.exp %18 : vector<128x256xf32>
    %cst_11 = arith.constant dense<0.000000e+00> : vector<128xf32>
    %20 = vector.multi_reduction <add>, %19, %cst_11 [1] : vector<128x256xf32> to vector<128xf32>
    %21 = vector.shape_cast %20 : vector<128xf32> to vector<128x1xf32>
    %22 = tpu.reciprocal %21 {approx = true} : vector<128x1xf32> -> vector<128x1xf32>
    %23 = vector.broadcast %22 : vector<128x1xf32> to vector<128x256xf32>
    %24 = arith.mulf %19, %23 : vector<128x256xf32>
    %c0_12 = arith.constant 0 : index
    %c0_13 = arith.constant 0 : index
    %25 = vector.load %arg15[%c0_12, %c0_13] : memref<128x256xf32, #tpu.memory_space<vmem>>, vector<32x256xf32>
    %cst_14 = arith.constant dense<0.000000e+00> : vector<32x128xf32>
    %26 = tpu.matmul %25, %24, %cst_14 {dimension_numbers = #tpu.dot_dimension_numbers<[1], [1], [0], [0], [0, 0, 1, 0], [], []>} : vector<32x256xf32>, vector<128x256xf32>, vector<32x128xf32> -> vector<32x128xf32>
    %c0_15 = arith.constant 0 : index
    %c0_16 = arith.constant 0 : index
    %27 = vector.load %arg16[%c0_15, %c0_16] : memref<128x128xf32, #tpu.memory_space<vmem>>, vector<32x128xf32>
    tpu.vector_store %arg16[%c0_15, %c0_16], %26 {strides = array<i32>} : memref<128x128xf32, #tpu.memory_space<vmem>>, vector<32x128xf32>,
    %28 = vector.extract_strided_slice %10 {offsets = [32, 0], sizes = [32, 128], strides = [1, 1]} : vector<128x128xf32> to vector<32x128xf32>
    %29 = tpu.transpose %28, [1, 0] : vector<32x128xf32> -> vector<128x32xf32>
    %c32 = arith.constant 32 : index
    %c0_17 = arith.constant 0 : index
    %30 = vector.load %arg14[%c32, %c0_17] : memref<128x256xf32, #tpu.memory_space<vmem>>, vector<32x256xf32>
    %cst_18 = arith.constant dense<0.000000e+00> : vector<128x256xf32>
    %31 = tpu.matmul %29, %30, %cst_18 {dimension_numbers = #tpu.dot_dimension_numbers<[1], [0], [0], [1], [0, 0, 1, 1], [], []>} : vector<128x32xf32>, vector<32x256xf32>, vector<128x256xf32> -> vector<128x256xf32>
    %cst_19 = arith.constant dense<0xFF800000> : vector<128xf32>
    %32 = vector.multi_reduction <maximumf>, %31, %cst_19 [1] : vector<128x256xf32> to vector<128xf32>
    %33 = vector.shape_cast %32 : vector<128xf32> to vector<128x1xf32>
    %34 = vector.broadcast %33 : vector<128x1xf32> to vector<128x256xf32>
    %35 = arith.subf %31, %34 : vector<128x256xf32>
    %36 = math.exp %35 : vector<128x256xf32>
    %cst_20 = arith.constant dense<0.000000e+00> : vector<128xf32>
    %37 = vector.multi_reduction <add>, %36, %cst_20 [1] : vector<128x256xf32> to vector<128xf32>
    %38 = vector.shape_cast %37 : vector<128xf32> to vector<128x1xf32>
    %39 = tpu.reciprocal %38 {approx = true} : vector<128x1xf32> -> vector<128x1xf32>
    %40 = vector.broadcast %39 : vector<128x1xf32> to vector<128x256xf32>
    %41 = arith.mulf %36, %40 : vector<128x256xf32>
    %c32_21 = arith.constant 32 : index
    %c0_22 = arith.constant 0 : index
    %42 = vector.load %arg15[%c32_21, %c0_22] : memref<128x256xf32, #tpu.memory_space<vmem>>, vector<32x256xf32>
    %cst_23 = arith.constant dense<0.000000e+00> : vector<32x128xf32>
    %43 = tpu.matmul %42, %41, %cst_23 {dimension_numbers = #tpu.dot_dimension_numbers<[1], [1], [0], [0], [0, 0, 1, 0], [], []>} : vector<32x256xf32>, vector<128x256xf32>, vector<32x128xf32> -> vector<32x128xf32>
    %c32_24 = arith.constant 32 : index
    %c0_25 = arith.constant 0 : index
    %44 = vector.load %arg16[%c32_24, %c0_25] : memref<128x128xf32, #tpu.memory_space<vmem>>, vector<32x128xf32>
    tpu.vector_store %arg16[%c32_24, %c0_25], %43 {strides = array<i32>} : memref<128x128xf32, #tpu.memory_space<vmem>>, vector<32x128xf32>,
    %45 = vector.extract_strided_slice %10 {offsets = [64, 0], sizes = [32, 128], strides = [1, 1]} : vector<128x128xf32> to vector<32x128xf32>
    %46 = tpu.transpose %45, [1, 0] : vector<32x128xf32> -> vector<128x32xf32>
    %c64 = arith.constant 64 : index
    %c0_26 = arith.constant 0 : index
    %47 = vector.load %arg14[%c64, %c0_26] : memref<128x256xf32, #tpu.memory_space<vmem>>, vector<32x256xf32>
    %cst_27 = arith.constant dense<0.000000e+00> : vector<128x256xf32>
    %48 = tpu.matmul %46, %47, %cst_27 {dimension_numbers = #tpu.dot_dimension_numbers<[1], [0], [0], [1], [0, 0, 1, 1], [], []>} : vector<128x32xf32>, vector<32x256xf32>, vector<128x256xf32> -> vector<128x256xf32>
    %cst_28 = arith.constant dense<0xFF800000> : vector<128xf32>
    %49 = vector.multi_reduction <maximumf>, %48, %cst_28 [1] : vector<128x256xf32> to vector<128xf32>
    %50 = vector.shape_cast %49 : vector<128xf32> to vector<128x1xf32>
    %51 = vector.broadcast %50 : vector<128x1xf32> to vector<128x256xf32>
    %52 = arith.subf %48, %51 : vector<128x256xf32>
    %53 = math.exp %52 : vector<128x256xf32>
    %cst_29 = arith.constant dense<0.000000e+00> : vector<128xf32>
    %54 = vector.multi_reduction <add>, %53, %cst_29 [1] : vector<128x256xf32> to vector<128xf32>
    %55 = vector.shape_cast %54 : vector<128xf32> to vector<128x1xf32>
    %56 = tpu.reciprocal %55 {approx = true} : vector<128x1xf32> -> vector<128x1xf32>
    %57 = vector.broadcast %56 : vector<128x1xf32> to vector<128x256xf32>
    %58 = arith.mulf %53, %57 : vector<128x256xf32>
    %c64_30 = arith.constant 64 : index
    %c0_31 = arith.constant 0 : index
    %59 = vector.load %arg15[%c64_30, %c0_31] : memref<128x256xf32, #tpu.memory_space<vmem>>, vector<32x256xf32>
    %cst_32 = arith.constant dense<0.000000e+00> : vector<32x128xf32>
    %60 = tpu.matmul %59, %58, %cst_32 {dimension_numbers = #tpu.dot_dimension_numbers<[1], [1], [0], [0], [0, 0, 1, 0], [], []>} : vector<32x256xf32>, vector<128x256xf32>, vector<32x128xf32> -> vector<32x128xf32>
    %c64_33 = arith.constant 64 : index
    %c0_34 = arith.constant 0 : index
    %61 = vector.load %arg16[%c64_33, %c0_34] : memref<128x128xf32, #tpu.memory_space<vmem>>, vector<32x128xf32>
    tpu.vector_store %arg16[%c64_33, %c0_34], %60 {strides = array<i32>} : memref<128x128xf32, #tpu.memory_space<vmem>>, vector<32x128xf32>,
    %62 = vector.extract_strided_slice %10 {offsets = [96, 0], sizes = [32, 128], strides = [1, 1]} : vector<128x128xf32> to vector<32x128xf32>
    %63 = tpu.transpose %62, [1, 0] : vector<32x128xf32> -> vector<128x32xf32>
    %c96 = arith.constant 96 : index
    %c0_35 = arith.constant 0 : index
    %64 = vector.load %arg14[%c96, %c0_35] : memref<128x256xf32, #tpu.memory_space<vmem>>, vector<32x256xf32>
    %cst_36 = arith.constant dense<0.000000e+00> : vector<128x256xf32>
    %65 = tpu.matmul %63, %64, %cst_36 {dimension_numbers = #tpu.dot_dimension_numbers<[1], [0], [0], [1], [0, 0, 1, 1], [], []>} : vector<128x32xf32>, vector<32x256xf32>, vector<128x256xf32> -> vector<128x256xf32>
    %cst_37 = arith.constant dense<0xFF800000> : vector<128xf32>
    %66 = vector.multi_reduction <maximumf>, %65, %cst_37 [1] : vector<128x256xf32> to vector<128xf32>
    %67 = vector.shape_cast %66 : vector<128xf32> to vector<128x1xf32>
    %68 = vector.broadcast %67 : vector<128x1xf32> to vector<128x256xf32>
    %69 = arith.subf %65, %68 : vector<128x256xf32>
    %70 = math.exp %69 : vector<128x256xf32>
    %cst_38 = arith.constant dense<0.000000e+00> : vector<128xf32>
    %71 = vector.multi_reduction <add>, %70, %cst_38 [1] : vector<128x256xf32> to vector<128xf32>
    %72 = vector.shape_cast %71 : vector<128xf32> to vector<128x1xf32>
    %73 = tpu.reciprocal %72 {approx = true} : vector<128x1xf32> -> vector<128x1xf32>
    %74 = vector.broadcast %73 : vector<128x1xf32> to vector<128x256xf32>
    %75 = arith.mulf %70, %74 : vector<128x256xf32>
    %c96_39 = arith.constant 96 : index
    %c0_40 = arith.constant 0 : index
    %76 = vector.load %arg15[%c96_39, %c0_40] : memref<128x256xf32, #tpu.memory_space<vmem>>, vector<32x256xf32>
    %cst_41 = arith.constant dense<0.000000e+00> : vector<32x128xf32>
    %77 = tpu.matmul %76, %75, %cst_41 {dimension_numbers = #tpu.dot_dimension_numbers<[1], [1], [0], [0], [0, 0, 1, 0], [], []>} : vector<32x256xf32>, vector<128x256xf32>, vector<32x128xf32> -> vector<32x128xf32>
    %c96_42 = arith.constant 96 : index
    %c0_43 = arith.constant 0 : index
    %78 = vector.load %arg16[%c96_42, %c0_43] : memref<128x128xf32, #tpu.memory_space<vmem>>, vector<32x128xf32>
    tpu.vector_store %arg16[%c96_42, %c0_43], %77 {strides = array<i32>} : memref<128x128xf32, #tpu.memory_space<vmem>>, vector<32x128xf32>,
    %c0_44 = arith.constant 0 : index
    %c0_45 = arith.constant 0 : index
    %79 = vector.load %arg11[%c0_44, %c0_45] : memref<128x128xf32, #tpu.memory_space<vmem>>, vector<128x128xf32>
    %c0_46 = arith.constant 0 : index
    %c0_47 = arith.constant 0 : index
    %80 = vector.load %arg16[%c0_46, %c0_47] : memref<128x128xf32, #tpu.memory_space<vmem>>, vector<128x128xf32>
    %cst_48 = arith.constant dense<0.000000e+00> : vector<128x128xf32>
    %81 = tpu.matmul %79, %80, %cst_48 {dimension_numbers = #tpu.dot_dimension_numbers<[1], [0], [0], [1], [0, 0, 1, 1], [], []>} : vector<128x128xf32>, vector<128x128xf32>, vector<128x128xf32> -> vector<128x128xf32>
    %c0_49 = arith.constant 0 : index
    %c0_50 = arith.constant 0 : index
    %82 = vector.load %arg12[%c0_49, %c0_50] : memref<128x1xf32, #tpu.memory_space<vmem>>, vector<128x1xf32>
    %83 = vector.broadcast %82 : vector<128x1xf32> to vector<128x128xf32>
    %84 = arith.addf %81, %83 : vector<128x128xf32>
    %c0_51 = arith.constant 0 : index
    %c0_52 = arith.constant 0 : index
    %c0_53 = arith.constant 0 : index
    %85 = vector.load %arg4[%c0_51, %c0_52, %c0_53] : memref<1x128x128xf32, #tpu.memory_space<vmem>>, vector<1x128x128xf32>
    %86 = vector.shape_cast %85 : vector<1x128x128xf32> to vector<128x128xf32>
    %87 = arith.addf %86, %84 : vector<128x128xf32>
    %c0_54 = arith.constant 0 : index
    %c0_55 = arith.constant 0 : index
    %c0_56 = arith.constant 0 : index
    %88 = vector.load %arg13[%c0_54, %c0_55, %c0_56] : memref<1x128x128xf32, #tpu.memory_space<vmem>>, vector<1x128x128xf32>
    %89 = vector.shape_cast %88 : vector<1x128x128xf32> to vector<128x128xf32>
    %90 = vector.shape_cast %87 : vector<128x128xf32> to vector<1x128x128xf32>
    tpu.vector_store %arg13[%c0_54, %c0_55, %c0_56], %90 {strides = array<i32>} : memref<1x128x128xf32, #tpu.memory_space<vmem>>, vector<1x128x128xf32>,
    return
  }
  func.func @transform_0(%arg0: i32, %arg1: i32) -> (i32, i32) {
    %c2_i32 = arith.constant 2 : i32
    %0 = arith.muli %arg0, %c2_i32 : i32
    %1 = arith.addi %0, %arg1 : i32
    %c0_i32 = arith.constant 0 : i32
    %c0_i32_0 = arith.constant 0 : i32
    return %1, %c0_i32 : i32, i32
  }
  func.func @transform_1(%arg0: i32, %arg1: i32) -> (i32, i32, i32) {
    %c0_i32 = arith.constant 0 : i32
    %c0_i32_0 = arith.constant 0 : i32
    %c0_i32_1 = arith.constant 0 : i32
    return %c0_i32, %c0_i32_0, %arg0 : i32, i32, i32
  }
  func.func @transform_2(%arg0: i32, %arg1: i32) -> (i32, i32, i32) {
    %c0_i32 = arith.constant 0 : i32
    %c0_i32_0 = arith.constant 0 : i32
    return %arg0, %c0_i32, %arg1 : i32, i32, i32
  }
  func.func @transform_3(%arg0: i32, %arg1: i32) -> (i32, i32) {
    %c0_i32 = arith.constant 0 : i32
    %c0_i32_0 = arith.constant 0 : i32
    %c0_i32_1 = arith.constant 0 : i32
    return %c0_i32, %c0_i32_0 : i32, i32
  }
  func.func @transform_4(%arg0: i32, %arg1: i32) -> (i32, i32) {
    %c0_i32 = arith.constant 0 : i32
    %c0_i32_0 = arith.constant 0 : i32
    %c0_i32_1 = arith.constant 0 : i32
    return %c0_i32, %c0_i32_0 : i32, i32
  }
  func.func @transform_5(%arg0: i32, %arg1: i32) -> (i32, i32) {
    %c0_i32 = arith.constant 0 : i32
    %c0_i32_0 = arith.constant 0 : i32
    %c0_i32_1 = arith.constant 0 : i32
    return %c0_i32, %c0_i32_0 : i32, i32
  }
  func.func @transform_6(%arg0: i32, %arg1: i32) -> (i32, i32) {
    %c0_i32 = arith.constant 0 : i32
    %c0_i32_0 = arith.constant 0 : i32
    %c0_i32_1 = arith.constant 0 : i32
    return %c0_i32, %c0_i32_0 : i32, i32
  }
  func.func @transform_7(%arg0: i32, %arg1: i32) -> (i32, i32) {
    %c0_i32 = arith.constant 0 : i32
    %c0_i32_0 = arith.constant 0 : i32
    %c0_i32_1 = arith.constant 0 : i32
    return %c0_i32, %c0_i32_0 : i32, i32
  }
  func.func @transform_8(%arg0: i32, %arg1: i32) -> (i32, i32) {
    %c0_i32 = arith.constant 0 : i32
    %c0_i32_0 = arith.constant 0 : i32
    %c0_i32_1 = arith.constant 0 : i32
    return %c0_i32, %c0_i32_0 : i32, i32
  }
  func.func @transform_9(%arg0: i32, %arg1: i32) -> (i32, i32) {
    %c0_i32 = arith.constant 0 : i32
    %c0_i32_0 = arith.constant 0 : i32
    %c0_i32_1 = arith.constant 0 : i32
    return %c0_i32, %c0_i32_0 : i32, i32
  }
  func.func @transform_10(%arg0: i32, %arg1: i32) -> (i32, i32) {
    %c0_i32 = arith.constant 0 : i32
    %c0_i32_0 = arith.constant 0 : i32
    %c0_i32_1 = arith.constant 0 : i32
    return %c0_i32, %c0_i32_0 : i32, i32
  }
  func.func @transform_11(%arg0: i32, %arg1: i32) -> (i32, i32, i32) {
    %c0_i32 = arith.constant 0 : i32
    %c0_i32_0 = arith.constant 0 : i32
    return %arg0, %c0_i32, %arg1 : i32, i32, i32
  }
}

</mosaic_0001>

<llo_original>
// kernel: cross_attention.1
$region0: #{cross_attention.1}
  #allocation0 [shape = 'u32[]', space=smem, size = 0x4, offset = 0x4, fixed_abs, tag = 'smem constant byte address 0x4 - core index']
  #allocation1 [shape = 'u32[144,128]{1,0:T(1,128)}', space=vmem, size = 0x12000, scoped, tag = 'internal scratch']
  #allocation2 [shape = 'f32[128,256]{1,0:T(8,128)}', space=vmem, size = 0x20000, scoped, tag = 'scratch operand']
  #allocation3 [shape = 'f32[128,256]{1,0:T(8,128)}', space=vmem, size = 0x20000, scoped, tag = 'scratch operand']
  #allocation4 [shape = 'f32[128,128]{1,0:T(8,128)}', space=vmem, size = 0x10000, scoped, tag = 'scratch operand']
  %s0 = inlined_call_operand.vmem [shape: f32[512,64], index: 0, kind: input, shape index: {}]
  %s1 = inlined_call_operand.vmem [shape: f32[2,128,256], index: 1, kind: input, shape index: {}, may-alias: {1,2}]
  %s2 = inlined_call_operand.vmem [shape: f32[2,128,256], index: 2, kind: input, shape index: {}, may-alias: {1,2}]
  %s3 = inlined_call_operand.vmem [shape: f32[128,64], index: 3, kind: input, shape index: {}]
  %s4 = inlined_call_operand.vmem [shape: f32[128,1], index: 4, kind: input, shape index: {}]
  %s5 = inlined_call_operand.vmem [shape: f32[128,128], index: 5, kind: input, shape index: {}]
  %s6 = inlined_call_operand.vmem [shape: f32[128,1], index: 6, kind: input, shape index: {}]
  %s7 = inlined_call_operand.vmem [shape: f32[128,128], index: 7, kind: input, shape index: {}]
  %s8 = inlined_call_operand.vmem [shape: f32[128,1], index: 8, kind: input, shape index: {}]
  %s9 = inlined_call_operand.vmem [shape: f32[128,128], index: 9, kind: input, shape index: {}]
  %s10 = inlined_call_operand.vmem [shape: f32[128,1], index: 10, kind: input, shape index: {}]
  %s11 = inlined_call_operand.vmem [shape: f32[2,128,256], index: 11, kind: output, shape index: {}]
  %s12 = sld [smem:[#allocation0]]
  $region191: #{cross_attention.1} parent=0
    _
  %s14 = ssub.s32 1, %s12
  %s15 = scalar_select 0, %s14, %s12
  $region1: #{cross_attention.1} parent=0
    #allocation5 [shape = 'u8[262144]{0}', space=vmem, size = 0x40000, scoped, tag = 'input window, operand 1']
    #allocation6 [shape = 'u8[131072]{0}', space=vmem, size = 0x20000, scoped, tag = 'input window, operand 2']
    #allocation7 [shape = 'u8[131072]{0}', space=vmem, size = 0x20000, scoped, tag = 'output window, operand 0']
    loop: start=0, step=1, limit=6
    $region2: #{cross_attention.1} parent=1 // loop_pre_header
      _
    $region3: #{cross_attention.1} parent=1 // loop_header
      %s17 = sphi 0, %s21
      %p18 = scmp.ge.s32.totalorder %s17, 6
      %s24 = sphi 0, %s36
      %s25 = sphi 0, %s32
      %s26 = sphi 0, %s24
      %s27 = sphi 0, %s25
      %s28 = sphi 0, %s26
      %s29 = sphi 0, %s27
      %s43 = sphi 0, %s45
      %s46 = sphi 0, %s43
      %s47 = sphi 0, %s46
      %s63 = sphi 0, %s47
      %s69 = sphi 0, %s71
      %s72 = sphi 0, %s69
      %s73 = sphi 0, %s72
      %s89 = sphi 0, %s73
      %s97 = sphi 0, %s99
      %s100 = sphi 0, %s97
      %s101 = sphi 0, %s100
      %s117 = sphi 0, %s101
      %s121 = sphi 0, %s121
      %s123 = sphi 0, %s121
      %s124 = sphi 0, %s123
      %s138 = sphi 0, %s124
      %s142 = sphi 0, %s142
      %s144 = sphi 0, %s142
      %s145 = sphi 0, %s144
      %s159 = sphi 0, %s145
      %s163 = sphi 0, %s163
      %s165 = sphi 0, %s163
      %s166 = sphi 0, %s165
      %s180 = sphi 0, %s166
      %s184 = sphi 0, %s184
      %s186 = sphi 0, %s184
      %s187 = sphi 0, %s186
      %s201 = sphi 0, %s187
      %s205 = sphi 0, %s205
      %s207 = sphi 0, %s205
      %s208 = sphi 0, %s207
      %s222 = sphi 0, %s208
      %s226 = sphi 0, %s226
      %s228 = sphi 0, %s226
      %s229 = sphi 0, %s228
      %s243 = sphi 0, %s229
      %s247 = sphi 0, %s247
      %s249 = sphi 0, %s247
      %s250 = sphi 0, %s249
      %s264 = sphi 0, %s250
      %s268 = sphi 0, %s268
      %s270 = sphi 0, %s268
      %s271 = sphi 0, %s270
      %s285 = sphi 0, %s271
      %s293 = sphi 0, %s295
      %s296 = sphi 0, %s293
      %s297 = sphi 0, %s296
      %s313 = sphi 0, %s297
    $region4: #{cross_attention.1} parent=1 // loop_header_branch
      %20 = sbr.rel (%p18) target = $region8
    $region5: #{cross_attention.1} parent=1 // loop_body
      %s22 = ssub.s32 %s17, 1
      %s23 = ssub.s32 %s17, 2
      %s30 = sadd.s32 1, %s25
      %p31 = scmp.ge.s32.totalorder %s30, 2
      %s32 = scalar_select %p31, 0, %s30
      %s33 = sadd.s32 1, %s24
      %s34 = scalar_select %p31, %s33, %s24
      %p35 = scmp.ge.s32.totalorder %s34, 2
      %s36 = scalar_select %p35, 0, %s34
      %s37 = smul.u32 %s24, 2
      %s38 = sadd.s32 %s37, %s25
      %s39 = smul.u32 %s36, 2
      %s40 = sadd.s32 %s39, %s32
      %s41 = ssub.s32 %s38, %s40
      %p42 = scmp.eq.s32.totalorder %s41, 0
      %s44 = sadd.s32 %s43, 1
      %s45 = scalar_select %p42, %s43, %s44
      %p48 = pneg %p42
      %p49 = scmp.eq.s32.totalorder %s17, 3
      %p50 = por %p48, %p49
      %p51 = scmp.ne.s32.totalorder %s43, %s46
      %p52 = scmp.eq.s32.totalorder %s17, 0
      %p53 = por %p51, %p52
      %p54 = scmp.ne.s32.totalorder %s43, %s46
      %p55 = scmp.eq.s32.totalorder %s22, 3
      %p56 = por %p54, %p55
      %p57 = scmp.ne.s32.totalorder %s46, %s47
      %p58 = scmp.eq.s32.totalorder %s22, 0
      %p59 = por %p57, %p58
      %p60 = scmp.ne.s32.totalorder %s46, %s47
      %p61 = scmp.eq.s32.totalorder %s23, 3
      %p62 = por %p60, %p61
      %p64 = scmp.ne.s32.totalorder %s47, %s63
      %p65 = scmp.eq.s32.totalorder %s23, 0
      %p66 = por %p64, %p65
      %s67 = ssub.s32 %s24, %s36
      %p68 = scmp.eq.s32.totalorder %s67, 0
      %s70 = sadd.s32 %s69, 1
      %s71 = scalar_select %p68, %s69, %s70
      %p74 = pneg %p68
      %p75 = scmp.eq.s32.totalorder %s17, 3
      %p76 = por %p74, %p75
      %p77 = scmp.ne.s32.totalorder %s69, %s72
      %p78 = scmp.eq.s32.totalorder %s17, 0
      %p79 = por %p77, %p78
      %p80 = scmp.ne.s32.totalorder %s69, %s72
      %p81 = scmp.eq.s32.totalorder %s22, 3
      %p82 = por %p80, %p81
      %p83 = scmp.ne.s32.totalorder %s72, %s73
      %p84 = scmp.eq.s32.totalorder %s22, 0
      %p85 = por %p83, %p84
      %p86 = scmp.ne.s32.totalorder %s72, %s73
      %p87 = scmp.eq.s32.totalorder %s23, 3
      %p88 = por %p86, %p87
      %p90 = scmp.ne.s32.totalorder %s73, %s89
      %p91 = scmp.eq.s32.totalorder %s23, 0
      %p92 = por %p90, %p91
      %s93 = ssub.s32 %s24, %s36
      %s94 = ssub.s32 %s25, %s32
      %s95 = sor.u32 %s93, %s94
      %p96 = scmp.eq.s32.totalorder %s95, 0
      %s98 = sadd.s32 %s97, 1
      %s99 = scalar_select %p96, %s97, %s98
      %p102 = pneg %p96
      %p103 = scmp.eq.s32.totalorder %s17, 3
      %p104 = por %p102, %p103
      %p105 = scmp.ne.s32.totalorder %s97, %s100
      %p106 = scmp.eq.s32.totalorder %s17, 0
      %p107 = por %p105, %p106
      %p108 = scmp.ne.s32.totalorder %s97, %s100
      %p109 = scmp.eq.s32.totalorder %s22, 3
      %p110 = por %p108, %p109
      %p111 = scmp.ne.s32.totalorder %s100, %s101
      %p112 = scmp.eq.s32.totalorder %s22, 0
      %p113 = por %p111, %p112
      %p114 = scmp.ne.s32.totalorder %s100, %s101
      %p115 = scmp.eq.s32.totalorder %s23, 3
      %p116 = por %p114, %p115
      %p118 = scmp.ne.s32.totalorder %s101, %s117
      %p119 = scmp.eq.s32.totalorder %s23, 0
      %p120 = por %p118, %p119
      %s122 = sadd.s32 %s121, 1
      %p125 = scmp.eq.s32.totalorder %s17, 3
      %p126 = scmp.ne.s32.totalorder %s121, %s123
      %p127 = scmp.eq.s32.totalorder %s17, 0
      %p128 = por %p126, %p127
      %p129 = scmp.ne.s32.totalorder %s121, %s123
      %p130 = scmp.eq.s32.totalorder %s22, 3
      %p131 = por %p129, %p130
      %p132 = scmp.ne.s32.totalorder %s123, %s124
      %p133 = scmp.eq.s32.totalorder %s22, 0
      %p134 = por %p132, %p133
      %p135 = scmp.ne.s32.totalorder %s123, %s124
      %p136 = scmp.eq.s32.totalorder %s23, 3
      %p137 = por %p135, %p136
      %p139 = scmp.ne.s32.totalorder %s124, %s138
      %p140 = scmp.eq.s32.totalorder %s23, 0
      %p141 = por %p139, %p140
      %s143 = sadd.s32 %s142, 1
      %p146 = scmp.eq.s32.totalorder %s17, 3
      %p147 = scmp.ne.s32.totalorder %s142, %s144
      %p148 = scmp.eq.s32.totalorder %s17, 0
      %p149 = por %p147, %p148
      %p150 = scmp.ne.s32.totalorder %s142, %s144
      %p151 = scmp.eq.s32.totalorder %s22, 3
      %p152 = por %p150, %p151
      %p153 = scmp.ne.s32.totalorder %s144, %s145
      %p154 = scmp.eq.s32.totalorder %s22, 0
      %p155 = por %p153, %p154
      %p156 = scmp.ne.s32.totalorder %s144, %s145
      %p157 = scmp.eq.s32.totalorder %s23, 3
      %p158 = por %p156, %p157
      %p160 = scmp.ne.s32.totalorder %s145, %s159
      %p161 = scmp.eq.s32.totalorder %s23, 0
      %p162 = por %p160, %p161
      %s164 = sadd.s32 %s163, 1
      %p167 = scmp.eq.s32.totalorder %s17, 3
      %p168 = scmp.ne.s32.totalorder %s163, %s165
      %p169 = scmp.eq.s32.totalorder %s17, 0
      %p170 = por %p168, %p169
      %p171 = scmp.ne.s32.totalorder %s163, %s165
      %p172 = scmp.eq.s32.totalorder %s22, 3
      %p173 = por %p171, %p172
      %p174 = scmp.ne.s32.totalorder %s165, %s166
      %p175 = scmp.eq.s32.totalorder %s22, 0
      %p176 = por %p174, %p175
      %p177 = scmp.ne.s32.totalorder %s165, %s166
      %p178 = scmp.eq.s32.totalorder %s23, 3
      %p179 = por %p177, %p178
      %p181 = scmp.ne.s32.totalorder %s166, %s180
      %p182 = scmp.eq.s32.totalorder %s23, 0
      %p183 = por %p181, %p182
      %s185 = sadd.s32 %s184, 1
      %p188 = scmp.eq.s32.totalorder %s17, 3
      %p189 = scmp.ne.s32.totalorder %s184, %s186
      %p190 = scmp.eq.s32.totalorder %s17, 0
      %p191 = por %p189, %p190
      %p192 = scmp.ne.s32.totalorder %s184, %s186
      %p193 = scmp.eq.s32.totalorder %s22, 3
      %p194 = por %p192, %p193
      %p195 = scmp.ne.s32.totalorder %s186, %s187
      %p196 = scmp.eq.s32.totalorder %s22, 0
      %p197 = por %p195, %p196
      %p198 = scmp.ne.s32.totalorder %s186, %s187
      %p199 = scmp.eq.s32.totalorder %s23, 3
      %p200 = por %p198, %p199
      %p202 = scmp.ne.s32.totalorder %s187, %s201
      %p203 = scmp.eq.s32.totalorder %s23, 0
      %p204 = por %p202, %p203
      %s206 = sadd.s32 %s205, 1
      %p209 = scmp.eq.s32.totalorder %s17, 3
      %p210 = scmp.ne.s32.totalorder %s205, %s207
      %p211 = scmp.eq.s32.totalorder %s17, 0
      %p212 = por %p210, %p211
      %p213 = scmp.ne.s32.totalorder %s205, %s207
      %p214 = scmp.eq.s32.totalorder %s22, 3
      %p215 = por %p213, %p214
      %p216 = scmp.ne.s32.totalorder %s207, %s208
      %p217 = scmp.eq.s32.totalorder %s22, 0
      %p218 = por %p216, %p217
      %p219 = scmp.ne.s32.totalorder %s207, %s208
      %p220 = scmp.eq.s32.totalorder %s23, 3
      %p221 = por %p219, %p220
      %p223 = scmp.ne.s32.totalorder %s208, %s222
      %p224 = scmp.eq.s32.totalorder %s23, 0
      %p225 = por %p223, %p224
      %s227 = sadd.s32 %s226, 1
      %p230 = scmp.eq.s32.totalorder %s17, 3
      %p231 = scmp.ne.s32.totalorder %s226, %s228
      %p232 = scmp.eq.s32.totalorder %s17, 0
      %p233 = por %p231, %p232
      %p234 = scmp.ne.s32.totalorder %s226, %s228
      %p235 = scmp.eq.s32.totalorder %s22, 3
      %p236 = por %p234, %p235
      %p237 = scmp.ne.s32.totalorder %s228, %s229
      %p238 = scmp.eq.s32.totalorder %s22, 0
      %p239 = por %p237, %p238
      %p240 = scmp.ne.s32.totalorder %s228, %s229
      %p241 = scmp.eq.s32.totalorder %s23, 3
      %p242 = por %p240, %p241
      %p244 = scmp.ne.s32.totalorder %s229, %s243
      %p245 = scmp.eq.s32.totalorder %s23, 0
      %p246 = por %p244, %p245
      %s248 = sadd.s32 %s247, 1
      %p251 = scmp.eq.s32.totalorder %s17, 3
      %p252 = scmp.ne.s32.totalorder %s247, %s249
      %p253 = scmp.eq.s32.totalorder %s17, 0
      %p254 = por %p252, %p253
      %p255 = scmp.ne.s32.totalorder %s247, %s249
      %p256 = scmp.eq.s32.totalorder %s22, 3
      %p257 = por %p255, %p256
      %p258 = scmp.ne.s32.totalorder %s249, %s250
      %p259 = scmp.eq.s32.totalorder %s22, 0
      %p260 = por %p258, %p259
      %p261 = scmp.ne.s32.totalorder %s249, %s250
      %p262 = scmp.eq.s32.totalorder %s23, 3
      %p263 = por %p261, %p262
      %p265 = scmp.ne.s32.totalorder %s250, %s264
      %p266 = scmp.eq.s32.totalorder %s23, 0
      %p267 = por %p265, %p266
      %s269 = sadd.s32 %s268, 1
      %p272 = scmp.eq.s32.totalorder %s17, 3
      %p273 = scmp.ne.s32.totalorder %s268, %s270
      %p274 = scmp.eq.s32.totalorder %s17, 0
      %p275 = por %p273, %p274
      %p276 = scmp.ne.s32.totalorder %s268, %s270
      %p277 = scmp.eq.s32.totalorder %s22, 3
      %p278 = por %p276, %p277
      %p279 = scmp.ne.s32.totalorder %s270, %s271
      %p280 = scmp.eq.s32.totalorder %s22, 0
      %p281 = por %p279, %p280
      %p282 = scmp.ne.s32.totalorder %s270, %s271
      %p283 = scmp.eq.s32.totalorder %s23, 3
      %p284 = por %p282, %p283
      %p286 = scmp.ne.s32.totalorder %s271, %s285
      %p287 = scmp.eq.s32.totalorder %s23, 0
      %p288 = por %p286, %p287
      %s289 = ssub.s32 %s24, %s36
      %s290 = ssub.s32 %s25, %s32
      %s291 = sor.u32 %s289, %s290
      %p292 = scmp.eq.s32.totalorder %s291, 0
      %s294 = sadd.s32 %s293, 1
      %s295 = scalar_select %p292, %s293, %s294
      %p298 = pneg %p292
      %p299 = scmp.eq.s32.totalorder %s17, 3
      %p300 = por %p298, %p299
      %p301 = scmp.ne.s32.totalorder %s293, %s296
      %p302 = scmp.eq.s32.totalorder %s17, 0
      %p303 = por %p301, %p302
      %p304 = scmp.ne.s32.totalorder %s293, %s296
      %p305 = scmp.eq.s32.totalorder %s22, 3
      %p306 = por %p304, %p305
      %p307 = scmp.ne.s32.totalorder %s296, %s297
      %p308 = scmp.eq.s32.totalorder %s22, 0
      %p309 = por %p307, %p308
      %p310 = scmp.ne.s32.totalorder %s296, %s297
      %p311 = scmp.eq.s32.totalorder %s23, 3
      %p312 = por %p310, %p311
      %p314 = scmp.ne.s32.totalorder %s297, %s313
      %p315 = scmp.eq.s32.totalorder %s23, 0
      %p316 = por %p314, %p315
      %p317 = scmp.le.s32.totalorder 1, %s17
      %p318 = scmp.lt.s32.totalorder %s17, 5
      %p319 = pnand %p317, %p318
      %p320 = pneg %p319
      // Predicated region
      $region9: #{cross_attention.1} parent=5 // pred_check
        _
      $region10: #{cross_attention.1} parent=5 // pred_check_branch
        %322 = sbr.rel (%p319) target = $region12
      $region11: #{cross_attention.1} parent=5 // pred_region
        %s323 = ssub.s32 %s17, 1
        // Predicated region
        $region13: #{cross_attention.1} parent=11 // pred_check
          %p324 = pneg %p134
        $region14: #{cross_attention.1} parent=11 // pred_check_branch
          %326 = sbr.rel (%p324) target = $region16
        $region15: #{cross_attention.1} parent=11 // pred_region
          _
        $region16: #{cross_attention.1} parent=11 // pred_fallthru
          _
        // Predicated region
        $region17: #{cross_attention.1} parent=11 // pred_check
          %p327 = pneg %p155
        $region18: #{cross_attention.1} parent=11 // pred_check_branch
          %329 = sbr.rel (%p327) target = $region20
        $region19: #{cross_attention.1} parent=11 // pred_region
          _
        $region20: #{cross_attention.1} parent=11 // pred_fallthru
          _
        // Predicated region
        $region21: #{cross_attention.1} parent=11 // pred_check
          %p330 = pneg %p176
        $region22: #{cross_attention.1} parent=11 // pred_check_branch
          %332 = sbr.rel (%p330) target = $region24
        $region23: #{cross_attention.1} parent=11 // pred_region
          _
        $region24: #{cross_attention.1} parent=11 // pred_fallthru
          _
        // Predicated region
        $region25: #{cross_attention.1} parent=11 // pred_check
          %p333 = pneg %p197
        $region26: #{cross_attention.1} parent=11 // pred_check_branch
          %335 = sbr.rel (%p333) target = $region28
        $region27: #{cross_attention.1} parent=11 // pred_region
          _
        $region28: #{cross_attention.1} parent=11 // pred_fallthru
          _
        // Predicated region
        $region29: #{cross_attention.1} parent=11 // pred_check
          %p336 = pneg %p218
        $region30: #{cross_attention.1} parent=11 // pred_check_branch
          %338 = sbr.rel (%p336) target = $region32
        $region31: #{cross_attention.1} parent=11 // pred_region
          _
        $region32: #{cross_attention.1} parent=11 // pred_fallthru
          _
        // Predicated region
        $region33: #{cross_attention.1} parent=11 // pred_check
          %p339 = pneg %p239
        $region34: #{cross_attention.1} parent=11 // pred_check_branch
          %341 = sbr.rel (%p339) target = $region36
        $region35: #{cross_attention.1} parent=11 // pred_region
          _
        $region36: #{cross_attention.1} parent=11 // pred_fallthru
          _
        // Predicated region
        $region37: #{cross_attention.1} parent=11 // pred_check
          %p342 = pneg %p260
        $region38: #{cross_attention.1} parent=11 // pred_check_branch
          %344 = sbr.rel (%p342) target = $region40
        $region39: #{cross_attention.1} parent=11 // pred_region
          _
        $region40: #{cross_attention.1} parent=11 // pred_fallthru
          _
        // Predicated region
        $region41: #{cross_attention.1} parent=11 // pred_check
          %p345 = pneg %p281
        $region42: #{cross_attention.1} parent=11 // pred_check_branch
          %347 = sbr.rel (%p345) target = $region44
        $region43: #{cross_attention.1} parent=11 // pred_region
          _
        $region44: #{cross_attention.1} parent=11 // pred_fallthru
          _
      $region12: #{cross_attention.1} parent=5 // pred_fallthru
        _
      %p348 = scmp.lt.s32.totalorder %s17, 4
      // Predicated region
      $region45: #{cross_attention.1} parent=5 // pred_check
        %p349 = pneg %p348
      $region46: #{cross_attention.1} parent=5 // pred_check_branch
        %351 = sbr.rel (%p349) target = $region48
      $region47: #{cross_attention.1} parent=5 // pred_region
        // Predicated region
        $region49: #{cross_attention.1} parent=47 // pred_check
          %p352 = pneg %p53
        $region50: #{cross_attention.1} parent=47 // pred_check_branch
          %354 = sbr.rel (%p352) target = $region52
        $region51: #{cross_attention.1} parent=47 // pred_region
          %s355 = smul.u32 %s24, 2
          %s356 = sadd.s32 %s355, %s25
          %s357 = smul.u32 16, %s356
          %p358 = scmp.lt.s32.totalorder %s357, 63
          %s359 = scalar_select %p358, %s357, 63
          %s360 = smul.addr %s359, 8
          %s361 = scalar_lea.vmem %s0, %s360
          %s362 = smul.u32 %s24, 2
          %s363 = sadd.s32 %s362, %s25
          %s364 = smul.u32 16, %s363
        $region52: #{cross_attention.1} parent=47 // pred_fallthru
          _
        // Predicated region
        $region53: #{cross_attention.1} parent=47 // pred_check
          %p365 = pneg %p79
        $region54: #{cross_attention.1} parent=47 // pred_check_branch
          %367 = sbr.rel (%p365) target = $region56
        $region55: #{cross_attention.1} parent=47 // pred_region
          %s368 = sand.u32 %s69, 1
          %s369 = sand.u32 %s69, 1
          %s370 = smul.addr %s369, 256
          %s371 = scalar_lea.vmem [#allocation5], %s370
          %s372 = smul.addr %s24, 8
          %s373 = scalar_lea.vmem %s1, %s372
          // Predicated region
          $region57: #{cross_attention.1} parent=55 // pred_check
            _
          $region58: #{cross_attention.1} parent=55 // pred_check_branch
            %375 = sbr.rel (0) target = $region60
          $region59: #{cross_attention.1} parent=55 // pred_region
            // Predicated region
            $region61: #{cross_attention.1} parent=59 // pred_check
              _
            $region62: #{cross_attention.1} parent=59 // pred_check_branch
              %377 = sbr.rel (0) target = $region64
            $region63: #{cross_attention.1} parent=59 // pred_region
              // Predicated region
              $region76: #{cross_attention.1} parent=63 // pred_check
                _
              $region77: #{cross_attention.1} parent=63 // pred_check_branch
                %454 = sbr.rel (0) target = $region79
              $region78: #{cross_attention.1} parent=63 // pred_region
                loop: start=0, step=1, limit=1
                $region80: #{cross_attention.1} parent=78 // loop_pre_header
                  _
                $region81: #{cross_attention.1} parent=78 // loop_header
                  %s456 = sphi 0, %s460
                  %p457 = scmp.ge.s32.totalorder %s456, 1
                  %s461 = sphi %s373, %s373
                  %s462 = sphi %s371, %s371
                $region82: #{cross_attention.1} parent=78 // loop_header_branch
                  %459 = sbr.rel (%p457) target = $region86
                $region83: #{cross_attention.1} parent=78 // loop_body
                  %v463 = vld [vmem:[%s461] sm:$0xff]
                  %464 = vst [vmem:[%s462] sm:$0xff] %v463
                  %v465 = vld [vmem:[%s461 + $0x10] sm:$0xff]
                  %466 = vst [vmem:[%s462 + $0x8] sm:$0xff] %v465
                  %v467 = vld [vmem:[%s461 + $0x20] sm:$0xff]
                  %468 = vst [vmem:[%s462 + $0x10] sm:$0xff] %v467
                  %v469 = vld [vmem:[%s461 + $0x30] sm:$0xff]
                  %470 = vst [vmem:[%s462 + $0x18] sm:$0xff] %v469
                  %v471 = vld [vmem:[%s461 + $0x40] sm:$0xff]
                  %472 = vst [vmem:[%s462 + $0x20] sm:$0xff] %v471
                  %v473 = vld [vmem:[%s461 + $0x50] sm:$0xff]
                  %474 = vst [vmem:[%s462 + $0x28] sm:$0xff] %v473
                  %v475 = vld [vmem:[%s461 + $0x60] sm:$0xff]
                  %476 = vst [vmem:[%s462 + $0x30] sm:$0xff] %v475
                  %v477 = vld [vmem:[%s461 + $0x70] sm:$0xff]
                  %478 = vst [vmem:[%s462 + $0x38] sm:$0xff] %v477
                  %v479 = vld [vmem:[%s461 + $0x80] sm:$0xff]
                  %480 = vst [vmem:[%s462 + $0x40] sm:$0xff] %v479
                  %v481 = vld [vmem:[%s461 + $0x90] sm:$0xff]
                  %482 = vst [vmem:[%s462 + $0x48] sm:$0xff] %v481
                  %v483 = vld [vmem:[%s461 + $0xa0] sm:$0xff]
                  %484 = vst [vmem:[%s462 + $0x50] sm:$0xff] %v483
                  %v485 = vld [vmem:[%s461 + $0xb0] sm:$0xff]
                  %486 = vst [vmem:[%s462 + $0x58] sm:$0xff] %v485
                  %v487 = vld [vmem:[%s461 + $0xc0] sm:$0xff]
                  %488 = vst [vmem:[%s462 + $0x60] sm:$0xff] %v487
                  %v489 = vld [vmem:[%s461 + $0xd0] sm:$0xff]
                  %490 = vst [vmem:[%s462 + $0x68] sm:$0xff] %v489
                  %v491 = vld [vmem:[%s461 + $0xe0] sm:$0xff]
                  %492 = vst [vmem:[%s462 + $0x70] sm:$0xff] %v491
                  %v493 = vld [vmem:[%s461 + $0xf0] sm:$0xff]
                  %494 = vst [vmem:[%s462 + $0x78] sm:$0xff] %v493
                  %v495 = vld [vmem:[%s461 + $0x100] sm:$0xff]
                  %496 = vst [vmem:[%s462 + $0x80] sm:$0xff] %v495
                  %v497 = vld [vmem:[%s461 + $0x110] sm:$0xff]
                  %498 = vst [vmem:[%s462 + $0x88] sm:$0xff] %v497
                  %v499 = vld [vmem:[%s461 + $0x120] sm:$0xff]
                  %500 = vst [vmem:[%s462 + $0x90] sm:$0xff] %v499
                  %v501 = vld [vmem:[%s461 + $0x130] sm:$0xff]
                  %502 = vst [vmem:[%s462 + $0x98] sm:$0xff] %v501
                  %v503 = vld [vmem:[%s461 + $0x140] sm:$0xff]
                  %504 = vst [vmem:[%s462 + $0xa0] sm:$0xff] %v503
                  %v505 = vld [vmem:[%s461 + $0x150] sm:$0xff]
                  %506 = vst [vmem:[%s462 + $0xa8] sm:$0xff] %v505
                  %v507 = vld [vmem:[%s461 + $0x160] sm:$0xff]
                  %508 = vst [vmem:[%s462 + $0xb0] sm:$0xff] %v507
                  %v509 = vld [vmem:[%s461 + $0x170] sm:$0xff]
                  %510 = vst [vmem:[%s462 + $0xb8] sm:$0xff] %v509
                  %v511 = vld [vmem:[%s461 + $0x180] sm:$0xff]
                  %512 = vst [vmem:[%s462 + $0xc0] sm:$0xff] %v511
                  %v513 = vld [vmem:[%s461 + $0x190] sm:$0xff]
                  %514 = vst [vmem:[%s462 + $0xc8] sm:$0xff] %v513
                  %v515 = vld [vmem:[%s461 + $0x1a0] sm:$0xff]
                  %516 = vst [vmem:[%s462 + $0xd0] sm:$0xff] %v515
                  %v517 = vld [vmem:[%s461 + $0x1b0] sm:$0xff]
                  %518 = vst [vmem:[%s462 + $0xd8] sm:$0xff] %v517
                  %v519 = vld [vmem:[%s461 + $0x1c0] sm:$0xff]
                  %520 = vst [vmem:[%s462 + $0xe0] sm:$0xff] %v519
                  %v521 = vld [vmem:[%s461 + $0x1d0] sm:$0xff]
                  %522 = vst [vmem:[%s462 + $0xe8] sm:$0xff] %v521
                  %v523 = vld [vmem:[%s461 + $0x1e0] sm:$0xff]
                  %524 = vst [vmem:[%s462 + $0xf0] sm:$0xff] %v523
                  %v525 = vld [vmem:[%s461 + $0x1f0] sm:$0xff]
                  %526 = vst [vmem:[%s462 + $0xf8] sm:$0xff] %v525
                $region84: #{cross_attention.1} parent=78 // loop_footer
                  %s460 = sadd.s32 1, %s456
                $region85: #{cross_attention.1} parent=78 // loop_footer_branch
                  %455 = sbr.rel target = $region81
                $region86: #{cross_attention.1} parent=78 // loop_exit
                  _
              $region79: #{cross_attention.1} parent=63 // pred_fallthru
                _
              // Predicated region
              $region87: #{cross_attention.1} parent=63 // pred_check
                _
              $region88: #{cross_attention.1} parent=63 // pred_check_branch
                %528 = sbr.rel target = $region90
              $region89: #{cross_attention.1} parent=63 // pred_region
                _
              $region90: #{cross_attention.1} parent=63 // pred_fallthru
                _
            $region64: #{cross_attention.1} parent=59 // pred_fallthru
              _
            // Predicated region
            $region65: #{cross_attention.1} parent=59 // pred_check
              _
            $region66: #{cross_attention.1} parent=59 // pred_check_branch
              %379 = sbr.rel target = $region68
            $region67: #{cross_attention.1} parent=59 // pred_region
              loop: start=0, step=1, limit=1
              $region69: #{cross_attention.1} parent=67 // loop_pre_header
                _
              $region70: #{cross_attention.1} parent=67 // loop_header
                %s382 = sphi 0, %s386
                %p383 = scmp.ge.s32.totalorder %s382, 1
                %s387 = sphi %s373, %s373
                %s388 = sphi %s371, %s371
              $region71: #{cross_attention.1} parent=67 // loop_header_branch
                %385 = sbr.rel (%p383) target = $region75
              $region72: #{cross_attention.1} parent=67 // loop_body
                %v389 = vld [vmem:[%s387] sm:$0xff]
                %390 = vst [vmem:[%s388] sm:$0xff] %v389
                %v391 = vld [vmem:[%s387 + $0x10] sm:$0xff]
                %392 = vst [vmem:[%s388 + $0x8] sm:$0xff] %v391
                %v393 = vld [vmem:[%s387 + $0x20] sm:$0xff]
                %394 = vst [vmem:[%s388 + $0x10] sm:$0xff] %v393
                %v395 = vld [vmem:[%s387 + $0x30] sm:$0xff]
                %396 = vst [vmem:[%s388 + $0x18] sm:$0xff] %v395
                %v397 = vld [vmem:[%s387 + $0x40] sm:$0xff]
                %398 = vst [vmem:[%s388 + $0x20] sm:$0xff] %v397
                %v399 = vld [vmem:[%s387 + $0x50] sm:$0xff]
                %400 = vst [vmem:[%s388 + $0x28] sm:$0xff] %v399
                %v401 = vld [vmem:[%s387 + $0x60] sm:$0xff]
                %402 = vst [vmem:[%s388 + $0x30] sm:$0xff] %v401
                %v403 = vld [vmem:[%s387 + $0x70] sm:$0xff]
                %404 = vst [vmem:[%s388 + $0x38] sm:$0xff] %v403
                %v405 = vld [vmem:[%s387 + $0x80] sm:$0xff]
                %406 = vst [vmem:[%s388 + $0x40] sm:$0xff] %v405
                %v407 = vld [vmem:[%s387 + $0x90] sm:$0xff]
                %408 = vst [vmem:[%s388 + $0x48] sm:$0xff] %v407
                %v409 = vld [vmem:[%s387 + $0xa0] sm:$0xff]
                %410 = vst [vmem:[%s388 + $0x50] sm:$0xff] %v409
                %v411 = vld [vmem:[%s387 + $0xb0] sm:$0xff]
                %412 = vst [vmem:[%s388 + $0x58] sm:$0xff] %v411
                %v413 = vld [vmem:[%s387 + $0xc0] sm:$0xff]
                %414 = vst [vmem:[%s388 + $0x60] sm:$0xff] %v413
                %v415 = vld [vmem:[%s387 + $0xd0] sm:$0xff]
                %416 = vst [vmem:[%s388 + $0x68] sm:$0xff] %v415
                %v417 = vld [vmem:[%s387 + $0xe0] sm:$0xff]
                %418 = vst [vmem:[%s388 + $0x70] sm:$0xff] %v417
                %v419 = vld [vmem:[%s387 + $0xf0] sm:$0xff]
                %420 = vst [vmem:[%s388 + $0x78] sm:$0xff] %v419
                %v421 = vld [vmem:[%s387 + $0x100] sm:$0xff]
                %422 = vst [vmem:[%s388 + $0x80] sm:$0xff] %v421
                %v423 = vld [vmem:[%s387 + $0x110] sm:$0xff]
                %424 = vst [vmem:[%s388 + $0x88] sm:$0xff] %v423
                %v425 = vld [vmem:[%s387 + $0x120] sm:$0xff]
                %426 = vst [vmem:[%s388 + $0x90] sm:$0xff] %v425
                %v427 = vld [vmem:[%s387 + $0x130] sm:$0xff]
                %428 = vst [vmem:[%s388 + $0x98] sm:$0xff] %v427
                %v429 = vld [vmem:[%s387 + $0x140] sm:$0xff]
                %430 = vst [vmem:[%s388 + $0xa0] sm:$0xff] %v429
                %v431 = vld [vmem:[%s387 + $0x150] sm:$0xff]
                %432 = vst [vmem:[%s388 + $0xa8] sm:$0xff] %v431
                %v433 = vld [vmem:[%s387 + $0x160] sm:$0xff]
                %434 = vst [vmem:[%s388 + $0xb0] sm:$0xff] %v433
                %v435 = vld [vmem:[%s387 + $0x170] sm:$0xff]
                %436 = vst [vmem:[%s388 + $0xb8] sm:$0xff] %v435
                %v437 = vld [vmem:[%s387 + $0x180] sm:$0xff]
                %438 = vst [vmem:[%s388 + $0xc0] sm:$0xff] %v437
                %v439 = vld [vmem:[%s387 + $0x190] sm:$0xff]
                %440 = vst [vmem:[%s388 + $0xc8] sm:$0xff] %v439
                %v441 = vld [vmem:[%s387 + $0x1a0] sm:$0xff]
                %442 = vst [vmem:[%s388 + $0xd0] sm:$0xff] %v441
                %v443 = vld [vmem:[%s387 + $0x1b0] sm:$0xff]
                %444 = vst [vmem:[%s388 + $0xd8] sm:$0xff] %v443
                %v445 = vld [vmem:[%s387 + $0x1c0] sm:$0xff]
                %446 = vst [vmem:[%s388 + $0xe0] sm:$0xff] %v445
                %v447 = vld [vmem:[%s387 + $0x1d0] sm:$0xff]
                %448 = vst [vmem:[%s388 + $0xe8] sm:$0xff] %v447
                %v449 = vld [vmem:[%s387 + $0x1e0] sm:$0xff]
                %450 = vst [vmem:[%s388 + $0xf0] sm:$0xff] %v449
                %v451 = vld [vmem:[%s387 + $0x1f0] sm:$0xff]
                %452 = vst [vmem:[%s388 + $0xf8] sm:$0xff] %v451
              $region73: #{cross_attention.1} parent=67 // loop_footer
                %s386 = sadd.s32 1, %s382
              $region74: #{cross_attention.1} parent=67 // loop_footer_branch
                %381 = sbr.rel target = $region70
              $region75: #{cross_attention.1} parent=67 // loop_exit
                _
            $region68: #{cross_attention.1} parent=59 // pred_fallthru
              _
          $region60: #{cross_attention.1} parent=55 // pred_fallthru
            _
          %529 = vnop
        $region56: #{cross_attention.1} parent=47 // pred_fallthru
          _
        // Predicated region
        $region91: #{cross_attention.1} parent=47 // pred_check
          %p530 = pneg %p107
        $region92: #{cross_attention.1} parent=47 // pred_check_branch
          %532 = sbr.rel (%p530) target = $region94
        $region93: #{cross_attention.1} parent=47 // pred_region
          %s533 = sand.u32 %s97, 1
          %s534 = sand.u32 %s97, 1
          %s535 = smul.addr %s534, 128
          %s536 = scalar_lea.vmem [#allocation6], %s535
          %s537 = smul.addr %s24, 32
          %s538 = sadd.s32 %s25, %s537
          %s539 = smul.addr %s538, 8
          %s540 = scalar_lea.vmem %s2, %s539
          // Predicated region
          $region95: #{cross_attention.1} parent=93 // pred_check
            _
          $region96: #{cross_attention.1} parent=93 // pred_check_branch
            %542 = sbr.rel (0) target = $region98
          $region97: #{cross_attention.1} parent=93 // pred_region
            // Predicated region
            $region99: #{cross_attention.1} parent=97 // pred_check
              _
            $region100: #{cross_attention.1} parent=97 // pred_check_branch
              %544 = sbr.rel (0) target = $region102
            $region101: #{cross_attention.1} parent=97 // pred_region
              // Predicated region
              $region114: #{cross_attention.1} parent=101 // pred_check
                _
              $region115: #{cross_attention.1} parent=101 // pred_check_branch
                %589 = sbr.rel (0) target = $region117
              $region116: #{cross_attention.1} parent=101 // pred_region
                loop: start=0, step=1, limit=1
                $region118: #{cross_attention.1} parent=116 // loop_pre_header
                  _
                $region119: #{cross_attention.1} parent=116 // loop_header
                  %s591 = sphi 0, %s595
                  %p592 = scmp.ge.s32.totalorder %s591, 1
                  %s596 = sphi %s540, %s540
                  %s597 = sphi %s536, %s536
                $region120: #{cross_attention.1} parent=116 // loop_header_branch
                  %594 = sbr.rel (%p592) target = $region124
                $region121: #{cross_attention.1} parent=116 // loop_body
                  %v598 = vld [vmem:[%s596] sm:$0xff]
                  %599 = vst [vmem:[%s597] sm:$0xff] %v598
                  %v600 = vld [vmem:[%s596 + $0x10] sm:$0xff]
                  %601 = vst [vmem:[%s597 + $0x8] sm:$0xff] %v600
                  %v602 = vld [vmem:[%s596 + $0x20] sm:$0xff]
                  %603 = vst [vmem:[%s597 + $0x10] sm:$0xff] %v602
                  %v604 = vld [vmem:[%s596 + $0x30] sm:$0xff]
                  %605 = vst [vmem:[%s597 + $0x18] sm:$0xff] %v604
                  %v606 = vld [vmem:[%s596 + $0x40] sm:$0xff]
                  %607 = vst [vmem:[%s597 + $0x20] sm:$0xff] %v606
                  %v608 = vld [vmem:[%s596 + $0x50] sm:$0xff]
                  %609 = vst [vmem:[%s597 + $0x28] sm:$0xff] %v608
                  %v610 = vld [vmem:[%s596 + $0x60] sm:$0xff]
                  %611 = vst [vmem:[%s597 + $0x30] sm:$0xff] %v610
                  %v612 = vld [vmem:[%s596 + $0x70] sm:$0xff]
                  %613 = vst [vmem:[%s597 + $0x38] sm:$0xff] %v612
                  %v614 = vld [vmem:[%s596 + $0x80] sm:$0xff]
                  %615 = vst [vmem:[%s597 + $0x40] sm:$0xff] %v614
                  %v616 = vld [vmem:[%s596 + $0x90] sm:$0xff]
                  %617 = vst [vmem:[%s597 + $0x48] sm:$0xff] %v616
                  %v618 = vld [vmem:[%s596 + $0xa0] sm:$0xff]
                  %619 = vst [vmem:[%s597 + $0x50] sm:$0xff] %v618
                  %v620 = vld [vmem:[%s596 + $0xb0] sm:$0xff]
                  %621 = vst [vmem:[%s597 + $0x58] sm:$0xff] %v620
                  %v622 = vld [vmem:[%s596 + $0xc0] sm:$0xff]
                  %623 = vst [vmem:[%s597 + $0x60] sm:$0xff] %v622
                  %v624 = vld [vmem:[%s596 + $0xd0] sm:$0xff]
                  %625 = vst [vmem:[%s597 + $0x68] sm:$0xff] %v624
                  %v626 = vld [vmem:[%s596 + $0xe0] sm:$0xff]
                  %627 = vst [vmem:[%s597 + $0x70] sm:$0xff] %v626
                  %v628 = vld [vmem:[%s596 + $0xf0] sm:$0xff]
                  %629 = vst [vmem:[%s597 + $0x78] sm:$0xff] %v628
                $region122: #{cross_attention.1} parent=116 // loop_footer
                  %s595 = sadd.s32 1, %s591
                $region123: #{cross_attention.1} parent=116 // loop_footer_branch
                  %590 = sbr.rel target = $region119
                $region124: #{cross_attention.1} parent=116 // loop_exit
                  _
              $region117: #{cross_attention.1} parent=101 // pred_fallthru
                _
              // Predicated region
              $region125: #{cross_attention.1} parent=101 // pred_check
                _
              $region126: #{cross_attention.1} parent=101 // pred_check_branch
                %631 = sbr.rel target = $region128
              $region127: #{cross_attention.1} parent=101 // pred_region
                _
              $region128: #{cross_attention.1} parent=101 // pred_fallthru
                _
            $region102: #{cross_attention.1} parent=97 // pred_fallthru
              _
            // Predicated region
            $region103: #{cross_attention.1} parent=97 // pred_check
              _
            $region104: #{cross_attention.1} parent=97 // pred_check_branch
              %546 = sbr.rel target = $region106
            $region105: #{cross_attention.1} parent=97 // pred_region
              loop: start=0, step=1, limit=1
              $region107: #{cross_attention.1} parent=105 // loop_pre_header
                _
              $region108: #{cross_attention.1} parent=105 // loop_header
                %s549 = sphi 0, %s553
                %p550 = scmp.ge.s32.totalorder %s549, 1
                %s554 = sphi %s540, %s540
                %s555 = sphi %s536, %s536
              $region109: #{cross_attention.1} parent=105 // loop_header_branch
                %552 = sbr.rel (%p550) target = $region113
              $region110: #{cross_attention.1} parent=105 // loop_body
                %v556 = vld [vmem:[%s554] sm:$0xff]
                %557 = vst [vmem:[%s555] sm:$0xff] %v556
                %v558 = vld [vmem:[%s554 + $0x10] sm:$0xff]
                %559 = vst [vmem:[%s555 + $0x8] sm:$0xff] %v558
                %v560 = vld [vmem:[%s554 + $0x20] sm:$0xff]
                %561 = vst [vmem:[%s555 + $0x10] sm:$0xff] %v560
                %v562 = vld [vmem:[%s554 + $0x30] sm:$0xff]
                %563 = vst [vmem:[%s555 + $0x18] sm:$0xff] %v562
                %v564 = vld [vmem:[%s554 + $0x40] sm:$0xff]
                %565 = vst [vmem:[%s555 + $0x20] sm:$0xff] %v564
                %v566 = vld [vmem:[%s554 + $0x50] sm:$0xff]
                %567 = vst [vmem:[%s555 + $0x28] sm:$0xff] %v566
                %v568 = vld [vmem:[%s554 + $0x60] sm:$0xff]
                %569 = vst [vmem:[%s555 + $0x30] sm:$0xff] %v568
                %v570 = vld [vmem:[%s554 + $0x70] sm:$0xff]
                %571 = vst [vmem:[%s555 + $0x38] sm:$0xff] %v570
                %v572 = vld [vmem:[%s554 + $0x80] sm:$0xff]
                %573 = vst [vmem:[%s555 + $0x40] sm:$0xff] %v572
                %v574 = vld [vmem:[%s554 + $0x90] sm:$0xff]
                %575 = vst [vmem:[%s555 + $0x48] sm:$0xff] %v574
                %v576 = vld [vmem:[%s554 + $0xa0] sm:$0xff]
                %577 = vst [vmem:[%s555 + $0x50] sm:$0xff] %v576
                %v578 = vld [vmem:[%s554 + $0xb0] sm:$0xff]
                %579 = vst [vmem:[%s555 + $0x58] sm:$0xff] %v578
                %v580 = vld [vmem:[%s554 + $0xc0] sm:$0xff]
                %581 = vst [vmem:[%s555 + $0x60] sm:$0xff] %v580
                %v582 = vld [vmem:[%s554 + $0xd0] sm:$0xff]
                %583 = vst [vmem:[%s555 + $0x68] sm:$0xff] %v582
                %v584 = vld [vmem:[%s554 + $0xe0] sm:$0xff]
                %585 = vst [vmem:[%s555 + $0x70] sm:$0xff] %v584
                %v586 = vld [vmem:[%s554 + $0xf0] sm:$0xff]
                %587 = vst [vmem:[%s555 + $0x78] sm:$0xff] %v586
              $region111: #{cross_attention.1} parent=105 // loop_footer
                %s553 = sadd.s32 1, %s549
              $region112: #{cross_attention.1} parent=105 // loop_footer_branch
                %548 = sbr.rel target = $region108
              $region113: #{cross_attention.1} parent=105 // loop_exit
                _
            $region106: #{cross_attention.1} parent=97 // pred_fallthru
              _
          $region98: #{cross_attention.1} parent=93 // pred_fallthru
            _
          %632 = vnop
        $region94: #{cross_attention.1} parent=47 // pred_fallthru
          _
      $region48: #{cross_attention.1} parent=5 // pred_fallthru
        _
      %p633 = scmp.le.s32.totalorder 1, %s17
      %p634 = scmp.lt.s32.totalorder %s17, 5
      %p635 = pnand %p633, %p634
      %p636 = pneg %p635
      // Predicated region
      $region129: #{cross_attention.1} parent=5 // pred_check
        _
      $region130: #{cross_attention.1} parent=5 // pred_check_branch
        %638 = sbr.rel (%p635) target = $region132
      $region131: #{cross_attention.1} parent=5 // pred_region
        %s639 = ssub.s32 %s17, 1
        %s640 = sand.u32 %s72, 1
        %s641 = sand.u32 %s72, 1
        %s642 = smul.addr %s641, 256
        %s643 = scalar_lea.vmem [#allocation5], %s642
        // Predicated region
        $region133: #{cross_attention.1} parent=131 // pred_check
          %p644 = pneg %p85
        $region134: #{cross_attention.1} parent=131 // pred_check_branch
          %646 = sbr.rel (%p644) target = $region136
        $region135: #{cross_attention.1} parent=131 // pred_region
          _
        $region136: #{cross_attention.1} parent=131 // pred_fallthru
          _
        %s647 = sand.u32 %s100, 1
        %s648 = sand.u32 %s100, 1
        %s649 = smul.addr %s648, 128
        %s650 = scalar_lea.vmem [#allocation6], %s649
        // Predicated region
        $region137: #{cross_attention.1} parent=131 // pred_check
          %p651 = pneg %p113
        $region138: #{cross_attention.1} parent=131 // pred_check_branch
          %653 = sbr.rel (%p651) target = $region140
        $region139: #{cross_attention.1} parent=131 // pred_region
          _
        $region140: #{cross_attention.1} parent=131 // pred_fallthru
          _
        %s654 = smul.u32 %s26, 2
        %s655 = sadd.s32 %s654, %s27
        %s656 = smul.u32 16, %s655
        %p657 = scmp.lt.s32.totalorder %s656, 63
        %s658 = scalar_select %p657, %s656, 63
        %s659 = smul.addr %s658, 8
        %s660 = scalar_lea.vmem %s0, %s659
        %p661 = pneg %p59
        %p662 = pneg %p56
        %s663 = sand.u32 %s72, 1
        %s664 = sand.u32 %s72, 1
        %s665 = smul.addr %s664, 256
        %s666 = scalar_lea.vmem [#allocation5], %s665
        %p667 = pneg %p85
        %p668 = pneg %p82
        %s669 = sand.u32 %s100, 1
        %s670 = sand.u32 %s100, 1
        %s671 = smul.addr %s670, 128
        %s672 = scalar_lea.vmem [#allocation6], %s671
        %p673 = pneg %p113
        %p674 = pneg %p110
        %p675 = pneg %p134
        %p676 = pneg %p131
        %p677 = pneg %p155
        %p678 = pneg %p152
        %p679 = pneg %p176
        %p680 = pneg %p173
        %p681 = pneg %p197
        %p682 = pneg %p194
        %p683 = pneg %p218
        %p684 = pneg %p215
        %p685 = pneg %p239
        %p686 = pneg %p236
        %p687 = pneg %p260
        %p688 = pneg %p257
        %p689 = pneg %p281
        %p690 = pneg %p278
        %p691 = pneg %p309
        %p692 = pneg %p306
        %s693 = sand.u32 %s296, 1
        %s694 = sand.u32 %s296, 1
        %s695 = smul.addr %s694, 128
        %s696 = scalar_lea.vmem [#allocation7], %s695
        %s697 = smul.u32 %s26, 2
        %s698 = sadd.s32 %s697, %s27
        %s699 = smul.u32 16, %s698
        %p700 = scmp.lt.s32.totalorder %s699, 63
        %s701 = scalar_select %p700, %s699, 63
        %s702 = smul.addr %s701, 8
        %s703 = scalar_lea.vmem %s0, %s702
        %s704 = smul.u32 %s26, 2
        %s705 = sadd.s32 %s704, %s27
        %s706 = smul.u32 16, %s705
        %p707 = scmp.eq.s32.totalorder %s27, 0
        // Predicated region
        $region141: #{cross_attention.1} parent=131 // pred_check
          %p708 = pneg %p707
        $region142: #{cross_attention.1} parent=131 // pred_check_branch
          %710 = sbr.rel (%p708) target = $region144
        $region143: #{cross_attention.1} parent=131 // pred_region
          %v711 = vld [vmem:[%s5] sm:$0xff]
          %v712 = vld [vmem:[%s5 + $0x8] sm:$0xff]
          %v713 = vld [vmem:[%s5 + $0x10] sm:$0xff]
          %v714 = vld [vmem:[%s5 + $0x18] sm:$0xff]
          %v715 = vld [vmem:[%s5 + $0x20] sm:$0xff]
          %v716 = vld [vmem:[%s5 + $0x28] sm:$0xff]
          %v717 = vld [vmem:[%s5 + $0x30] sm:$0xff]
          %v718 = vld [vmem:[%s5 + $0x38] sm:$0xff]
          %v719 = vld [vmem:[%s5 + $0x40] sm:$0xff]
          %v720 = vld [vmem:[%s5 + $0x48] sm:$0xff]
          %v721 = vld [vmem:[%s5 + $0x50] sm:$0xff]
          %v722 = vld [vmem:[%s5 + $0x58] sm:$0xff]
          %v723 = vld [vmem:[%s5 + $0x60] sm:$0xff]
          %v724 = vld [vmem:[%s5 + $0x68] sm:$0xff]
          %v725 = vld [vmem:[%s5 + $0x70] sm:$0xff]
          %v726 = vld [vmem:[%s5 + $0x78] sm:$0xff]
          %v727 = vld [vmem:[%s7] sm:$0xff]
          %v728 = vld [vmem:[%s7 + $0x8] sm:$0xff]
          %v729 = vld [vmem:[%s7 + $0x10] sm:$0xff]
          %v730 = vld [vmem:[%s7 + $0x18] sm:$0xff]
          %v731 = vld [vmem:[%s7 + $0x20] sm:$0xff]
          %v732 = vld [vmem:[%s7 + $0x28] sm:$0xff]
          %v733 = vld [vmem:[%s7 + $0x30] sm:$0xff]
          %v734 = vld [vmem:[%s7 + $0x38] sm:$0xff]
          %v735 = vld [vmem:[%s7 + $0x40] sm:$0xff]
          %v736 = vld [vmem:[%s7 + $0x48] sm:$0xff]
          %v737 = vld [vmem:[%s7 + $0x50] sm:$0xff]
          %v738 = vld [vmem:[%s7 + $0x58] sm:$0xff]
          %v739 = vld [vmem:[%s7 + $0x60] sm:$0xff]
          %v740 = vld [vmem:[%s7 + $0x68] sm:$0xff]
          %v741 = vld [vmem:[%s7 + $0x70] sm:$0xff]
          %v742 = vld [vmem:[%s7 + $0x78] sm:$0xff]
          %v743 = vld [vmem:[%s643] sm:$0xff]
          %v744 = vld [vmem:[%s643 + $0x8] sm:$0xff]
          %v745 = vld [vmem:[%s643 + $0x10] sm:$0xff]
          %v746 = vld [vmem:[%s643 + $0x18] sm:$0xff]
          %v747 = vld [vmem:[%s643 + $0x20] sm:$0xff]
          %v748 = vld [vmem:[%s643 + $0x28] sm:$0xff]
          %v749 = vld [vmem:[%s643 + $0x30] sm:$0xff]
          %v750 = vld [vmem:[%s643 + $0x38] sm:$0xff]
          %v751 = vld [vmem:[%s643 + $0x40] sm:$0xff]
          %v752 = vld [vmem:[%s643 + $0x48] sm:$0xff]
          %v753 = vld [vmem:[%s643 + $0x50] sm:$0xff]
          %v754 = vld [vmem:[%s643 + $0x58] sm:$0xff]
          %v755 = vld [vmem:[%s643 + $0x60] sm:$0xff]
          %v756 = vld [vmem:[%s643 + $0x68] sm:$0xff]
          %v757 = vld [vmem:[%s643 + $0x70] sm:$0xff]
          %v758 = vld [vmem:[%s643 + $0x78] sm:$0xff]
          %v759 = vld [vmem:[%s6] sm:$0xff]
          %v760 = vld [vmem:[%s6 + $0x8] sm:$0xff]
          %v761 = vld [vmem:[%s6 + $0x10] sm:$0xff]
          %v762 = vld [vmem:[%s6 + $0x18] sm:$0xff]
          %v763 = vld [vmem:[%s6 + $0x20] sm:$0xff]
          %v764 = vld [vmem:[%s6 + $0x28] sm:$0xff]
          %v765 = vld [vmem:[%s6 + $0x30] sm:$0xff]
          %v766 = vld [vmem:[%s6 + $0x38] sm:$0xff]
          %v767 = vld [vmem:[%s6 + $0x40] sm:$0xff]
          %v768 = vld [vmem:[%s6 + $0x48] sm:$0xff]
          %v769 = vld [vmem:[%s6 + $0x50] sm:$0xff]
          %v770 = vld [vmem:[%s6 + $0x58] sm:$0xff]
          %v771 = vld [vmem:[%s6 + $0x60] sm:$0xff]
          %v772 = vld [vmem:[%s6 + $0x68] sm:$0xff]
          %v773 = vld [vmem:[%s6 + $0x70] sm:$0xff]
          %v774 = vld [vmem:[%s6 + $0x78] sm:$0xff]
          %776 = vset.pattern.permute.xlu0 0
          %777 = vperm.xlu0 %776, %v759
          %v778 = vpop.permute.xlu0 %777
          %781 = vset.pattern.permute.xlu0 0
          %782 = vperm.xlu0 %781, %v760
          %v783 = vpop.permute.xlu0 %782
          %786 = vset.pattern.permute.xlu0 0
          %787 = vperm.xlu0 %786, %v761
          %v788 = vpop.permute.xlu0 %787
          %791 = vset.pattern.permute.xlu0 0
          %792 = vperm.xlu0 %791, %v762
          %v793 = vpop.permute.xlu0 %792
          %796 = vset.pattern.permute.xlu0 0
          %797 = vperm.xlu0 %796, %v763
          %v798 = vpop.permute.xlu0 %797
          %801 = vset.pattern.permute.xlu0 0
          %802 = vperm.xlu0 %801, %v764
          %v803 = vpop.permute.xlu0 %802
          %806 = vset.pattern.permute.xlu0 0
          %807 = vperm.xlu0 %806, %v765
          %v808 = vpop.permute.xlu0 %807
          %811 = vset.pattern.permute.xlu0 0
          %812 = vperm.xlu0 %811, %v766
          %v813 = vpop.permute.xlu0 %812
          %816 = vset.pattern.permute.xlu0 0
          %817 = vperm.xlu0 %816, %v767
          %v818 = vpop.permute.xlu0 %817
          %821 = vset.pattern.permute.xlu0 0
          %822 = vperm.xlu0 %821, %v768
          %v823 = vpop.permute.xlu0 %822
          %826 = vset.pattern.permute.xlu0 0
          %827 = vperm.xlu0 %826, %v769
          %v828 = vpop.permute.xlu0 %827
          %831 = vset.pattern.permute.xlu0 0
          %832 = vperm.xlu0 %831, %v770
          %v833 = vpop.permute.xlu0 %832
          %836 = vset.pattern.permute.xlu0 0
          %837 = vperm.xlu0 %836, %v771
          %v838 = vpop.permute.xlu0 %837
          %841 = vset.pattern.permute.xlu0 0
          %842 = vperm.xlu0 %841, %v772
          %v843 = vpop.permute.xlu0 %842
          %846 = vset.pattern.permute.xlu0 0
          %847 = vperm.xlu0 %846, %v773
          %v848 = vpop.permute.xlu0 %847
          %851 = vset.pattern.permute.xlu0 0
          %852 = vperm.xlu0 %851, %v774
          %v853 = vpop.permute.xlu0 %852
          %855 = vmatprep.subr.mxu0 0.0
          %856 = vmatpush1.msra.mxu0 %v743
          %857 = vmatprep.subr.mxu0 0.0
          %858 = vmatpush1.msra.mxu0 %v744
          %859 = vmatprep.subr.mxu0 0.0
          %860 = vmatpush1.msra.mxu0 %v745
          %861 = vmatprep.subr.mxu0 0.0
          %862 = vmatpush1.msra.mxu0 %v746
          %863 = vmatprep.subr.mxu0 0.0
          %864 = vmatpush1.msra.mxu0 %v747
          %865 = vmatprep.subr.mxu0 0.0
          %866 = vmatpush1.msra.mxu0 %v748
          %867 = vmatprep.subr.mxu0 0.0
          %868 = vmatpush1.msra.mxu0 %v749
          %869 = vmatprep.subr.mxu0 0.0
          %870 = vmatpush1.msra.mxu0 %v750
          %871 = vmatprep.subr.mxu0 0.0
          %872 = vmatpush1.msra.mxu0 %v751
          %873 = vmatprep.subr.mxu0 0.0
          %874 = vmatpush1.msra.mxu0 %v752
          %875 = vmatprep.subr.mxu0 0.0
          %876 = vmatpush1.msra.mxu0 %v753
          %877 = vmatprep.subr.mxu0 0.0
          %878 = vmatpush1.msra.mxu0 %v754
          %879 = vmatprep.subr.mxu0 0.0
          %880 = vmatpush1.msra.mxu0 %v755
          %881 = vmatprep.subr.mxu0 0.0
          %882 = vmatpush1.msra.mxu0 %v756
          %883 = vmatprep.subr.mxu0 0.0
          %884 = vmatpush1.msra.mxu0 %v757
          %885 = vmatprep.subr.mxu0 0.0
          %886 = vmatpush1.msra.mxu0 %v758
          %887 = vmatprep.subr.mxu0 0.0
          %888 = vmatpush1.msra.mxu0 0.0
          %889 = vmatprep.subr.mxu0 0.0
          %890 = vmatpush1.msra.mxu0 0.0
          %891 = vmatprep.subr.mxu0 0.0
          %892 = vmatpush1.msra.mxu0 0.0
          %893 = vmatprep.subr.mxu0 0.0
          %894 = vmatpush1.msra.mxu0 0.0
          %895 = vmatprep.subr.mxu0 0.0
          %896 = vmatpush1.msra.mxu0 0.0
          %897 = vmatprep.subr.mxu0 0.0
          %898 = vmatpush1.msra.mxu0 0.0
          %899 = vmatprep.subr.mxu0 0.0
          %900 = vmatpush1.msra.mxu0 0.0
          %901 = vmatprep.subr.mxu0 0.0
          %902 = vmatpush1.msra.mxu0 0.0
          %903 = vmatprep.subr.mxu0 0.0
          %904 = vmatpush1.msra.mxu0 0.0
          %905 = vmatprep.subr.mxu0 0.0
          %906 = vmatpush1.msra.mxu0 0.0
          %907 = vmatprep.subr.mxu0 0.0
          %908 = vmatpush1.msra.mxu0 0.0
          %909 = vmatprep.subr.mxu0 0.0
          %910 = vmatpush1.msra.mxu0 0.0
          %911 = vmatprep.subr.mxu0 0.0
          %912 = vmatpush1.msra.mxu0 0.0
          %913 = vmatprep.subr.mxu0 0.0
          %914 = vmatpush1.msra.mxu0 0.0
          %915 = vmatprep.subr.mxu0 0.0
          %916 = vmatpush1.msra.mxu0 0.0
          %917 = vmatprep.subr.mxu0 0.0
          %918 = vmatpush1.msra.mxu0 0.0
          %919 = vmatprep.mubr.f32.mxu0 0.0
          %920 = vmatmul.mubr.f32.gmra.mrb[0].mxu0 %v711
          %v921 = vpop.f32.mrb[0].mxu0
          %v922 = vadd.f32 %v778, %v921
          %v923 = vpop.f32.mrb[0].mxu0
          %924 = vmatprep.mubr.f32.mxu0 0.0
          %925 = vmatmul.mubr.f32.gmra.mrb[0].mxu0 %v712
          %v926 = vpop.f32.mrb[0].mxu0
          %v927 = vadd.f32 %v783, %v926
          %v928 = vpop.f32.mrb[0].mxu0
          %929 = vmatprep.mubr.f32.mxu0 0.0
          %930 = vmatmul.mubr.f32.gmra.mrb[0].mxu0 %v713
          %v931 = vpop.f32.mrb[0].mxu0
          %v932 = vadd.f32 %v788, %v931
          %v933 = vpop.f32.mrb[0].mxu0
          %934 = vmatprep.mubr.f32.mxu0 0.0
          %935 = vmatmul.mubr.f32.gmra.mrb[0].mxu0 %v714
          %v936 = vpop.f32.mrb[0].mxu0
          %v937 = vadd.f32 %v793, %v936
          %v938 = vpop.f32.mrb[0].mxu0
          %939 = vmatprep.mubr.f32.mxu0 0.0
          %940 = vmatmul.mubr.f32.gmra.mrb[0].mxu0 %v715
          %v941 = vpop.f32.mrb[0].mxu0
          %v942 = vadd.f32 %v798, %v941
          %v943 = vpop.f32.mrb[0].mxu0
          %944 = vmatprep.mubr.f32.mxu0 0.0
          %945 = vmatmul.mubr.f32.gmra.mrb[0].mxu0 %v716
          %v946 = vpop.f32.mrb[0].mxu0
          %v947 = vadd.f32 %v803, %v946
          %v948 = vpop.f32.mrb[0].mxu0
          %949 = vmatprep.mubr.f32.mxu0 0.0
          %950 = vmatmul.mubr.f32.gmra.mrb[0].mxu0 %v717
          %v951 = vpop.f32.mrb[0].mxu0
          %v952 = vadd.f32 %v808, %v951
          %v953 = vpop.f32.mrb[0].mxu0
          %954 = vmatprep.mubr.f32.mxu0 0.0
          %955 = vmatmul.mubr.f32.gmra.mrb[0].mxu0 %v718
          %v956 = vpop.f32.mrb[0].mxu0
          %v957 = vadd.f32 %v813, %v956
          %v958 = vpop.f32.mrb[0].mxu0
          %959 = vmatprep.mubr.f32.mxu0 0.0
          %960 = vmatmul.mubr.f32.gmra.mrb[0].mxu0 %v719
          %v961 = vpop.f32.mrb[0].mxu0
          %v962 = vadd.f32 %v818, %v961
          %v963 = vpop.f32.mrb[0].mxu0
          %964 = vmatprep.mubr.f32.mxu0 0.0
          %965 = vmatmul.mubr.f32.gmra.mrb[0].mxu0 %v720
          %v966 = vpop.f32.mrb[0].mxu0
          %v967 = vadd.f32 %v823, %v966
          %v968 = vpop.f32.mrb[0].mxu0
          %969 = vmatprep.mubr.f32.mxu0 0.0
          %970 = vmatmul.mubr.f32.gmra.mrb[0].mxu0 %v721
          %v971 = vpop.f32.mrb[0].mxu0
          %v972 = vadd.f32 %v828, %v971
          %v973 = vpop.f32.mrb[0].mxu0
          %974 = vmatprep.mubr.f32.mxu0 0.0
          %975 = vmatmul.mubr.f32.gmra.mrb[0].mxu0 %v722
          %v976 = vpop.f32.mrb[0].mxu0
          %v977 = vadd.f32 %v833, %v976
          %v978 = vpop.f32.mrb[0].mxu0
          %979 = vmatprep.mubr.f32.mxu0 0.0
          %980 = vmatmul.mubr.f32.gmra.mrb[0].mxu0 %v723
          %v981 = vpop.f32.mrb[0].mxu0
          %v982 = vadd.f32 %v838, %v981
          %v983 = vpop.f32.mrb[0].mxu0
          %984 = vmatprep.mubr.f32.mxu0 0.0
          %985 = vmatmul.mubr.f32.gmra.mrb[0].mxu0 %v724
          %v986 = vpop.f32.mrb[0].mxu0
          %v987 = vadd.f32 %v843, %v986
          %v988 = vpop.f32.mrb[0].mxu0
          %989 = vmatprep.mubr.f32.mxu0 0.0
          %990 = vmatmul.mubr.f32.gmra.mrb[0].mxu0 %v725
          %v991 = vpop.f32.mrb[0].mxu0
          %v992 = vadd.f32 %v848, %v991
          %v993 = vpop.f32.mrb[0].mxu0
          %994 = vmatprep.mubr.f32.mxu0 0.0
          %995 = vmatmul.mubr.f32.gmra.mrb[0].mxu0 %v726
          %v996 = vpop.f32.mrb[0].mxu0
          %v997 = vadd.f32 %v853, %v996
          %v998 = vpop.f32.mrb[0].mxu0
          %999 = vdwg.mxu0
          %v1000 = vld [vmem:[%s8] sm:$0xff]
          %v1001 = vld [vmem:[%s8 + $0x8] sm:$0xff]
          %v1002 = vld [vmem:[%s8 + $0x10] sm:$0xff]
          %v1003 = vld [vmem:[%s8 + $0x18] sm:$0xff]
          %v1004 = vld [vmem:[%s8 + $0x20] sm:$0xff]
          %v1005 = vld [vmem:[%s8 + $0x28] sm:$0xff]
          %v1006 = vld [vmem:[%s8 + $0x30] sm:$0xff]
          %v1007 = vld [vmem:[%s8 + $0x38] sm:$0xff]
          %v1008 = vld [vmem:[%s8 + $0x40] sm:$0xff]
          %v1009 = vld [vmem:[%s8 + $0x48] sm:$0xff]
          %v1010 = vld [vmem:[%s8 + $0x50] sm:$0xff]
          %v1011 = vld [vmem:[%s8 + $0x58] sm:$0xff]
          %v1012 = vld [vmem:[%s8 + $0x60] sm:$0xff]
          %v1013 = vld [vmem:[%s8 + $0x68] sm:$0xff]
          %v1014 = vld [vmem:[%s8 + $0x70] sm:$0xff]
          %v1015 = vld [vmem:[%s8 + $0x78] sm:$0xff]
          %1017 = vset.pattern.permute.xlu0 0
          %1018 = vperm.xlu0 %1017, %v1000
          %v1019 = vpop.permute.xlu0 %1018
          %1022 = vset.pattern.permute.xlu0 0
          %1023 = vperm.xlu0 %1022, %v1001
          %v1024 = vpop.permute.xlu0 %1023
          %1027 = vset.pattern.permute.xlu0 0
          %1028 = vperm.xlu0 %1027, %v1002
          %v1029 = vpop.permute.xlu0 %1028
          %1032 = vset.pattern.permute.xlu0 0
          %1033 = vperm.xlu0 %1032, %v1003
          %v1034 = vpop.permute.xlu0 %1033
          %1037 = vset.pattern.permute.xlu0 0
          %1038 = vperm.xlu0 %1037, %v1004
          %v1039 = vpop.permute.xlu0 %1038
          %1042 = vset.pattern.permute.xlu0 0
          %1043 = vperm.xlu0 %1042, %v1005
          %v1044 = vpop.permute.xlu0 %1043
          %1047 = vset.pattern.permute.xlu0 0
          %1048 = vperm.xlu0 %1047, %v1006
          %v1049 = vpop.permute.xlu0 %1048
          %1052 = vset.pattern.permute.xlu0 0
          %1053 = vperm.xlu0 %1052, %v1007
          %v1054 = vpop.permute.xlu0 %1053
          %1057 = vset.pattern.permute.xlu0 0
          %1058 = vperm.xlu0 %1057, %v1008
          %v1059 = vpop.permute.xlu0 %1058
          %1062 = vset.pattern.permute.xlu0 0
          %1063 = vperm.xlu0 %1062, %v1009
          %v1064 = vpop.permute.xlu0 %1063
          %1067 = vset.pattern.permute.xlu0 0
          %1068 = vperm.xlu0 %1067, %v1010
          %v1069 = vpop.permute.xlu0 %1068
          %1072 = vset.pattern.permute.xlu0 0
          %1073 = vperm.xlu0 %1072, %v1011
          %v1074 = vpop.permute.xlu0 %1073
          %1077 = vset.pattern.permute.xlu0 0
          %1078 = vperm.xlu0 %1077, %v1012
          %v1079 = vpop.permute.xlu0 %1078
          %1082 = vset.pattern.permute.xlu0 0
          %1083 = vperm.xlu0 %1082, %v1013
          %v1084 = vpop.permute.xlu0 %1083
          %1087 = vset.pattern.permute.xlu0 0
          %1088 = vperm.xlu0 %1087, %v1014
          %v1089 = vpop.permute.xlu0 %1088
          %1092 = vset.pattern.permute.xlu0 0
          %1093 = vperm.xlu0 %1092, %v1015
          %v1094 = vpop.permute.xlu0 %1093
          %1096 = vmatprep.subr.mxu0 0.0
          %1097 = vmatpush1.msra.mxu0 %v743
          %1098 = vmatprep.subr.mxu0 0.0
          %1099 = vmatpush1.msra.mxu0 %v744
          %1100 = vmatprep.subr.mxu0 0.0
          %1101 = vmatpush1.msra.mxu0 %v745
          %1102 = vmatprep.subr.mxu0 0.0
          %1103 = vmatpush1.msra.mxu0 %v746
          %1104 = vmatprep.subr.mxu0 0.0
          %1105 = vmatpush1.msra.mxu0 %v747
          %1106 = vmatprep.subr.mxu0 0.0
          %1107 = vmatpush1.msra.mxu0 %v748
          %1108 = vmatprep.subr.mxu0 0.0
          %1109 = vmatpush1.msra.mxu0 %v749
          %1110 = vmatprep.subr.mxu0 0.0
          %1111 = vmatpush1.msra.mxu0 %v750
          %1112 = vmatprep.subr.mxu0 0.0
          %1113 = vmatpush1.msra.mxu0 %v751
          %1114 = vmatprep.subr.mxu0 0.0
          %1115 = vmatpush1.msra.mxu0 %v752
          %1116 = vmatprep.subr.mxu0 0.0
          %1117 = vmatpush1.msra.mxu0 %v753
          %1118 = vmatprep.subr.mxu0 0.0
          %1119 = vmatpush1.msra.mxu0 %v754
          %1120 = vmatprep.subr.mxu0 0.0
          %1121 = vmatpush1.msra.mxu0 %v755
          %1122 = vmatprep.subr.mxu0 0.0
          %1123 = vmatpush1.msra.mxu0 %v756
          %1124 = vmatprep.subr.mxu0 0.0
          %1125 = vmatpush1.msra.mxu0 %v757
          %1126 = vmatprep.subr.mxu0 0.0
          %1127 = vmatpush1.msra.mxu0 %v758
          %1128 = vmatprep.subr.mxu0 0.0
          %1129 = vmatpush1.msra.mxu0 0.0
          %1130 = vmatprep.subr.mxu0 0.0
          %1131 = vmatpush1.msra.mxu0 0.0
          %1132 = vmatprep.subr.mxu0 0.0
          %1133 = vmatpush1.msra.mxu0 0.0
          %1134 = vmatprep.subr.mxu0 0.0
          %1135 = vmatpush1.msra.mxu0 0.0
          %1136 = vmatprep.subr.mxu0 0.0
          %1137 = vmatpush1.msra.mxu0 0.0
          %1138 = vmatprep.subr.mxu0 0.0
          %1139 = vmatpush1.msra.mxu0 0.0
          %1140 = vmatprep.subr.mxu0 0.0
          %1141 = vmatpush1.msra.mxu0 0.0
          %1142 = vmatprep.subr.mxu0 0.0
          %1143 = vmatpush1.msra.mxu0 0.0
          %1144 = vmatprep.subr.mxu0 0.0
          %1145 = vmatpush1.msra.mxu0 0.0
          %1146 = vmatprep.subr.mxu0 0.0
          %1147 = vmatpush1.msra.mxu0 0.0
          %1148 = vmatprep.subr.mxu0 0.0
          %1149 = vmatpush1.msra.mxu0 0.0
          %1150 = vmatprep.subr.mxu0 0.0
          %1151 = vmatpush1.msra.mxu0 0.0
          %1152 = vmatprep.subr.mxu0 0.0
          %1153 = vmatpush1.msra.mxu0 0.0
          %1154 = vmatprep.subr.mxu0 0.0
          %1155 = vmatpush1.msra.mxu0 0.0
          %1156 = vmatprep.subr.mxu0 0.0
          %1157 = vmatpush1.msra.mxu0 0.0
          %1158 = vmatprep.subr.mxu0 0.0
          %1159 = vmatpush1.msra.mxu0 0.0
          %1160 = vmatprep.mubr.f32.mxu0 0.0
          %1161 = vmatmul.mubr.f32.gmra.mrb[0].mxu0 %v727
          %v1162 = vpop.f32.mrb[0].mxu0
          %v1163 = vadd.f32 %v1019, %v1162
          %v1164 = vpop.f32.mrb[0].mxu0
          %1165 = vmatprep.mubr.f32.mxu0 0.0
          %1166 = vmatmul.mubr.f32.gmra.mrb[0].mxu0 %v728
          %v1167 = vpop.f32.mrb[0].mxu0
          %v1168 = vadd.f32 %v1024, %v1167
          %v1169 = vpop.f32.mrb[0].mxu0
          %1170 = vmatprep.mubr.f32.mxu0 0.0
          %1171 = vmatmul.mubr.f32.gmra.mrb[0].mxu0 %v729
          %v1172 = vpop.f32.mrb[0].mxu0
          %v1173 = vadd.f32 %v1029, %v1172
          %v1174 = vpop.f32.mrb[0].mxu0
          %1175 = vmatprep.mubr.f32.mxu0 0.0
          %1176 = vmatmul.mubr.f32.gmra.mrb[0].mxu0 %v730
          %v1177 = vpop.f32.mrb[0].mxu0
          %v1178 = vadd.f32 %v1034, %v1177
          %v1179 = vpop.f32.mrb[0].mxu0
          %1180 = vmatprep.mubr.f32.mxu0 0.0
          %1181 = vmatmul.mubr.f32.gmra.mrb[0].mxu0 %v731
          %v1182 = vpop.f32.mrb[0].mxu0
          %v1183 = vadd.f32 %v1039, %v1182
          %v1184 = vpop.f32.mrb[0].mxu0
          %1185 = vmatprep.mubr.f32.mxu0 0.0
          %1186 = vmatmul.mubr.f32.gmra.mrb[0].mxu0 %v732
          %v1187 = vpop.f32.mrb[0].mxu0
          %v1188 = vadd.f32 %v1044, %v1187
          %v1189 = vpop.f32.mrb[0].mxu0
          %1190 = vmatprep.mubr.f32.mxu0 0.0
          %1191 = vmatmul.mubr.f32.gmra.mrb[0].mxu0 %v733
          %v1192 = vpop.f32.mrb[0].mxu0
          %v1193 = vadd.f32 %v1049, %v1192
          %v1194 = vpop.f32.mrb[0].mxu0
          %1195 = vmatprep.mubr.f32.mxu0 0.0
          %1196 = vmatmul.mubr.f32.gmra.mrb[0].mxu0 %v734
          %v1197 = vpop.f32.mrb[0].mxu0
          %v1198 = vadd.f32 %v1054, %v1197
          %v1199 = vpop.f32.mrb[0].mxu0
          %1200 = vmatprep.mubr.f32.mxu0 0.0
          %1201 = vmatmul.mubr.f32.gmra.mrb[0].mxu0 %v735
          %v1202 = vpop.f32.mrb[0].mxu0
          %v1203 = vadd.f32 %v1059, %v1202
          %v1204 = vpop.f32.mrb[0].mxu0
          %1205 = vmatprep.mubr.f32.mxu0 0.0
          %1206 = vmatmul.mubr.f32.gmra.mrb[0].mxu0 %v736
          %v1207 = vpop.f32.mrb[0].mxu0
          %v1208 = vadd.f32 %v1064, %v1207
          %v1209 = vpop.f32.mrb[0].mxu0
          %1210 = vmatprep.mubr.f32.mxu0 0.0
          %1211 = vmatmul.mubr.f32.gmra.mrb[0].mxu0 %v737
          %v1212 = vpop.f32.mrb[0].mxu0
          %v1213 = vadd.f32 %v1069, %v1212
          %v1214 = vpop.f32.mrb[0].mxu0
          %1215 = vmatprep.mubr.f32.mxu0 0.0
          %1216 = vmatmul.mubr.f32.gmra.mrb[0].mxu0 %v738
          %v1217 = vpop.f32.mrb[0].mxu0
          %v1218 = vadd.f32 %v1074, %v1217
          %v1219 = vpop.f32.mrb[0].mxu0
          %1220 = vmatprep.mubr.f32.mxu0 0.0
          %1221 = vmatmul.mubr.f32.gmra.mrb[0].mxu0 %v739
          %v1222 = vpop.f32.mrb[0].mxu0
          %v1223 = vadd.f32 %v1079, %v1222
          %v1224 = vpop.f32.mrb[0].mxu0
          %1225 = vmatprep.mubr.f32.mxu0 0.0
          %1226 = vmatmul.mubr.f32.gmra.mrb[0].mxu0 %v740
          %v1227 = vpop.f32.mrb[0].mxu0
          %v1228 = vadd.f32 %v1084, %v1227
          %v1229 = vpop.f32.mrb[0].mxu0
          %1230 = vmatprep.mubr.f32.mxu0 0.0
          %1231 = vmatmul.mubr.f32.gmra.mrb[0].mxu0 %v741
          %v1232 = vpop.f32.mrb[0].mxu0
          %v1233 = vadd.f32 %v1089, %v1232
          %v1234 = vpop.f32.mrb[0].mxu0
          %1235 = vmatprep.mubr.f32.mxu0 0.0
          %1236 = vmatmul.mubr.f32.gmra.mrb[0].mxu0 %v742
          %v1237 = vpop.f32.mrb[0].mxu0
          %v1238 = vadd.f32 %v1094, %v1237
          %v1239 = vpop.f32.mrb[0].mxu0
          %1240 = vdwg.mxu0
          %1241 = vst [vmem:[#allocation2] sm:$0xff] %v922
          %1242 = vst [vmem:[#allocation2 + $0x10] sm:$0xff] %v927
          %1243 = vst [vmem:[#allocation2 + $0x20] sm:$0xff] %v932
          %1244 = vst [vmem:[#allocation2 + $0x30] sm:$0xff] %v937
          %1245 = vst [vmem:[#allocation2 + $0x40] sm:$0xff] %v942
          %1246 = vst [vmem:[#allocation2 + $0x50] sm:$0xff] %v947
          %1247 = vst [vmem:[#allocation2 + $0x60] sm:$0xff] %v952
          %1248 = vst [vmem:[#allocation2 + $0x70] sm:$0xff] %v957
          %1249 = vst [vmem:[#allocation2 + $0x80] sm:$0xff] %v962
          %1250 = vst [vmem:[#allocation2 + $0x90] sm:$0xff] %v967
          %1251 = vst [vmem:[#allocation2 + $0xa0] sm:$0xff] %v972
          %1252 = vst [vmem:[#allocation2 + $0xb0] sm:$0xff] %v977
          %1253 = vst [vmem:[#allocation2 + $0xc0] sm:$0xff] %v982
          %1254 = vst [vmem:[#allocation2 + $0xd0] sm:$0xff] %v987
          %1255 = vst [vmem:[#allocation2 + $0xe0] sm:$0xff] %v992
          %1256 = vst [vmem:[#allocation2 + $0xf0] sm:$0xff] %v997
          %1257 = vst [vmem:[#allocation3] sm:$0xff] %v1163
          %1258 = vst [vmem:[#allocation3 + $0x10] sm:$0xff] %v1168
          %1259 = vst [vmem:[#allocation3 + $0x20] sm:$0xff] %v1173
          %1260 = vst [vmem:[#allocation3 + $0x30] sm:$0xff] %v1178
          %1261 = vst [vmem:[#allocation3 + $0x40] sm:$0xff] %v1183
          %1262 = vst [vmem:[#allocation3 + $0x50] sm:$0xff] %v1188
          %1263 = vst [vmem:[#allocation3 + $0x60] sm:$0xff] %v1193
          %1264 = vst [vmem:[#allocation3 + $0x70] sm:$0xff] %v1198
          %1265 = vst [vmem:[#allocation3 + $0x80] sm:$0xff] %v1203
          %1266 = vst [vmem:[#allocation3 + $0x90] sm:$0xff] %v1208
          %1267 = vst [vmem:[#allocation3 + $0xa0] sm:$0xff] %v1213
          %1268 = vst [vmem:[#allocation3 + $0xb0] sm:$0xff] %v1218
          %1269 = vst [vmem:[#allocation3 + $0xc0] sm:$0xff] %v1223
          %1270 = vst [vmem:[#allocation3 + $0xd0] sm:$0xff] %v1228
          %1271 = vst [vmem:[#allocation3 + $0xe0] sm:$0xff] %v1233
          %1272 = vst [vmem:[#allocation3 + $0xf0] sm:$0xff] %v1238
          %s1273 = scalar_lea.vmem %s643, 128 [#allocation5]
          %v1274 = vld [vmem:[%s1273] sm:$0xff]
          %v1275 = vld [vmem:[%s1273 + $0x8] sm:$0xff]
          %v1276 = vld [vmem:[%s1273 + $0x10] sm:$0xff]
          %v1277 = vld [vmem:[%s1273 + $0x18] sm:$0xff]
          %v1278 = vld [vmem:[%s1273 + $0x20] sm:$0xff]
          %v1279 = vld [vmem:[%s1273 + $0x28] sm:$0xff]
          %v1280 = vld [vmem:[%s1273 + $0x30] sm:$0xff]
          %v1281 = vld [vmem:[%s1273 + $0x38] sm:$0xff]
          %v1282 = vld [vmem:[%s1273 + $0x40] sm:$0xff]
          %v1283 = vld [vmem:[%s1273 + $0x48] sm:$0xff]
          %v1284 = vld [vmem:[%s1273 + $0x50] sm:$0xff]
          %v1285 = vld [vmem:[%s1273 + $0x58] sm:$0xff]
          %v1286 = vld [vmem:[%s1273 + $0x60] sm:$0xff]
          %v1287 = vld [vmem:[%s1273 + $0x68] sm:$0xff]
          %v1288 = vld [vmem:[%s1273 + $0x70] sm:$0xff]
          %v1289 = vld [vmem:[%s1273 + $0x78] sm:$0xff]
          %v1290 = vld [vmem:[%s6] sm:$0xff]
          %v1291 = vld [vmem:[%s6 + $0x8] sm:$0xff]
          %v1292 = vld [vmem:[%s6 + $0x10] sm:$0xff]
          %v1293 = vld [vmem:[%s6 + $0x18] sm:$0xff]
          %v1294 = vld [vmem:[%s6 + $0x20] sm:$0xff]
          %v1295 = vld [vmem:[%s6 + $0x28] sm:$0xff]
          %v1296 = vld [vmem:[%s6 + $0x30] sm:$0xff]
          %v1297 = vld [vmem:[%s6 + $0x38] sm:$0xff]
          %v1298 = vld [vmem:[%s6 + $0x40] sm:$0xff]
          %v1299 = vld [vmem:[%s6 + $0x48] sm:$0xff]
          %v1300 = vld [vmem:[%s6 + $0x50] sm:$0xff]
          %v1301 = vld [vmem:[%s6 + $0x58] sm:$0xff]
          %v1302 = vld [vmem:[%s6 + $0x60] sm:$0xff]
          %v1303 = vld [vmem:[%s6 + $0x68] sm:$0xff]
          %v1304 = vld [vmem:[%s6 + $0x70] sm:$0xff]
          %v1305 = vld [vmem:[%s6 + $0x78] sm:$0xff]
          %1307 = vset.pattern.permute.xlu0 0
          %1308 = vperm.xlu0 %1307, %v1290
          %v1309 = vpop.permute.xlu0 %1308
          %1312 = vset.pattern.permute.xlu0 0
          %1313 = vperm.xlu0 %1312, %v1291
          %v1314 = vpop.permute.xlu0 %1313
          %1317 = vset.pattern.permute.xlu0 0
          %1318 = vperm.xlu0 %1317, %v1292
          %v1319 = vpop.permute.xlu0 %1318
          %1322 = vset.pattern.permute.xlu0 0
          %1323 = vperm.xlu0 %1322, %v1293
          %v1324 = vpop.permute.xlu0 %1323
          %1327 = vset.pattern.permute.xlu0 0
          %1328 = vperm.xlu0 %1327, %v1294
          %v1329 = vpop.permute.xlu0 %1328
          %1332 = vset.pattern.permute.xlu0 0
          %1333 = vperm.xlu0 %1332, %v1295
          %v1334 = vpop.permute.xlu0 %1333
          %1337 = vset.pattern.permute.xlu0 0
          %1338 = vperm.xlu0 %1337, %v1296
          %v1339 = vpop.permute.xlu0 %1338
          %1342 = vset.pattern.permute.xlu0 0
          %1343 = vperm.xlu0 %1342, %v1297
          %v1344 = vpop.permute.xlu0 %1343
          %1347 = vset.pattern.permute.xlu0 0
          %1348 = vperm.xlu0 %1347, %v1298
          %v1349 = vpop.permute.xlu0 %1348
          %1352 = vset.pattern.permute.xlu0 0
          %1353 = vperm.xlu0 %1352, %v1299
          %v1354 = vpop.permute.xlu0 %1353
          %1357 = vset.pattern.permute.xlu0 0
          %1358 = vperm.xlu0 %1357, %v1300
          %v1359 = vpop.permute.xlu0 %1358
          %1362 = vset.pattern.permute.xlu0 0
          %1363 = vperm.xlu0 %1362, %v1301
          %v1364 = vpop.permute.xlu0 %1363
          %1367 = vset.pattern.permute.xlu0 0
          %1368 = vperm.xlu0 %1367, %v1302
          %v1369 = vpop.permute.xlu0 %1368
          %1372 = vset.pattern.permute.xlu0 0
          %1373 = vperm.xlu0 %1372, %v1303
          %v1374 = vpop.permute.xlu0 %1373
          %1377 = vset.pattern.permute.xlu0 0
          %1378 = vperm.xlu0 %1377, %v1304
          %v1379 = vpop.permute.xlu0 %1378
          %1382 = vset.pattern.permute.xlu0 0
          %1383 = vperm.xlu0 %1382, %v1305
          %v1384 = vpop.permute.xlu0 %1383
          %1386 = vmatprep.subr.mxu0 0.0
          %1387 = vmatpush1.msra.mxu0 %v1274
          %1388 = vmatprep.subr.mxu0 0.0
          %1389 = vmatpush1.msra.mxu0 %v1275
          %1390 = vmatprep.subr.mxu0 0.0
          %1391 = vmatpush1.msra.mxu0 %v1276
          %1392 = vmatprep.subr.mxu0 0.0
          %1393 = vmatpush1.msra.mxu0 %v1277
          %1394 = vmatprep.subr.mxu0 0.0
          %1395 = vmatpush1.msra.mxu0 %v1278
          %1396 = vmatprep.subr.mxu0 0.0
          %1397 = vmatpush1.msra.mxu0 %v1279
          %1398 = vmatprep.subr.mxu0 0.0
          %1399 = vmatpush1.msra.mxu0 %v1280
          %1400 = vmatprep.subr.mxu0 0.0
          %1401 = vmatpush1.msra.mxu0 %v1281
          %1402 = vmatprep.subr.mxu0 0.0
          %1403 = vmatpush1.msra.mxu0 %v1282
          %1404 = vmatprep.subr.mxu0 0.0
          %1405 = vmatpush1.msra.mxu0 %v1283
          %1406 = vmatprep.subr.mxu0 0.0
          %1407 = vmatpush1.msra.mxu0 %v1284
          %1408 = vmatprep.subr.mxu0 0.0
          %1409 = vmatpush1.msra.mxu0 %v1285
          %1410 = vmatprep.subr.mxu0 0.0
          %1411 = vmatpush1.msra.mxu0 %v1286
          %1412 = vmatprep.subr.mxu0 0.0
          %1413 = vmatpush1.msra.mxu0 %v1287
          %1414 = vmatprep.subr.mxu0 0.0
          %1415 = vmatpush1.msra.mxu0 %v1288
          %1416 = vmatprep.subr.mxu0 0.0
          %1417 = vmatpush1.msra.mxu0 %v1289
          %1418 = vmatprep.subr.mxu0 0.0
          %1419 = vmatpush1.msra.mxu0 0.0
          %1420 = vmatprep.subr.mxu0 0.0
          %1421 = vmatpush1.msra.mxu0 0.0
          %1422 = vmatprep.subr.mxu0 0.0
          %1423 = vmatpush1.msra.mxu0 0.0
          %1424 = vmatprep.subr.mxu0 0.0
          %1425 = vmatpush1.msra.mxu0 0.0
          %1426 = vmatprep.subr.mxu0 0.0
          %1427 = vmatpush1.msra.mxu0 0.0
          %1428 = vmatprep.subr.mxu0 0.0
          %1429 = vmatpush1.msra.mxu0 0.0
          %1430 = vmatprep.subr.mxu0 0.0
          %1431 = vmatpush1.msra.mxu0 0.0
          %1432 = vmatprep.subr.mxu0 0.0
          %1433 = vmatpush1.msra.mxu0 0.0
          %1434 = vmatprep.subr.mxu0 0.0
          %1435 = vmatpush1.msra.mxu0 0.0
          %1436 = vmatprep.subr.mxu0 0.0
          %1437 = vmatpush1.msra.mxu0 0.0
          %1438 = vmatprep.subr.mxu0 0.0
          %1439 = vmatpush1.msra.mxu0 0.0
          %1440 = vmatprep.subr.mxu0 0.0
          %1441 = vmatpush1.msra.mxu0 0.0
          %1442 = vmatprep.subr.mxu0 0.0
          %1443 = vmatpush1.msra.mxu0 0.0
          %1444 = vmatprep.subr.mxu0 0.0
          %1445 = vmatpush1.msra.mxu0 0.0
          %1446 = vmatprep.subr.mxu0 0.0
          %1447 = vmatpush1.msra.mxu0 0.0
          %1448 = vmatprep.subr.mxu0 0.0
          %1449 = vmatpush1.msra.mxu0 0.0
          %1450 = vmatprep.mubr.f32.mxu0 0.0
          %1451 = vmatmul.mubr.f32.gmra.mrb[0].mxu0 %v711
          %v1452 = vpop.f32.mrb[0].mxu0
          %v1453 = vadd.f32 %v1309, %v1452
          %v1454 = vpop.f32.mrb[0].mxu0
          %1455 = vmatprep.mubr.f32.mxu0 0.0
          %1456 = vmatmul.mubr.f32.gmra.mrb[0].mxu0 %v712
          %v1457 = vpop.f32.mrb[0].mxu0
          %v1458 = vadd.f32 %v1314, %v1457
          %v1459 = vpop.f32.mrb[0].mxu0
          %1460 = vmatprep.mubr.f32.mxu0 0.0
          %1461 = vmatmul.mubr.f32.gmra.mrb[0].mxu0 %v713
          %v1462 = vpop.f32.mrb[0].mxu0
          %v1463 = vadd.f32 %v1319, %v1462
          %v1464 = vpop.f32.mrb[0].mxu0
          %1465 = vmatprep.mubr.f32.mxu0 0.0
          %1466 = vmatmul.mubr.f32.gmra.mrb[0].mxu0 %v714
          %v1467 = vpop.f32.mrb[0].mxu0
          %v1468 = vadd.f32 %v1324, %v1467
          %v1469 = vpop.f32.mrb[0].mxu0
          %1470 = vmatprep.mubr.f32.mxu0 0.0
          %1471 = vmatmul.mubr.f32.gmra.mrb[0].mxu0 %v715
          %v1472 = vpop.f32.mrb[0].mxu0
          %v1473 = vadd.f32 %v1329, %v1472
          %v1474 = vpop.f32.mrb[0].mxu0
          %1475 = vmatprep.mubr.f32.mxu0 0.0
          %1476 = vmatmul.mubr.f32.gmra.mrb[0].mxu0 %v716
          %v1477 = vpop.f32.mrb[0].mxu0
          %v1478 = vadd.f32 %v1334, %v1477
          %v1479 = vpop.f32.mrb[0].mxu0
          %1480 = vmatprep.mubr.f32.mxu0 0.0
          %1481 = vmatmul.mubr.f32.gmra.mrb[0].mxu0 %v717
          %v1482 = vpop.f32.mrb[0].mxu0
          %v1483 = vadd.f32 %v1339, %v1482
          %v1484 = vpop.f32.mrb[0].mxu0
          %1485 = vmatprep.mubr.f32.mxu0 0.0
          %1486 = vmatmul.mubr.f32.gmra.mrb[0].mxu0 %v718
          %v1487 = vpop.f32.mrb[0].mxu0
          %v1488 = vadd.f32 %v1344, %v1487
          %v1489 = vpop.f32.mrb[0].mxu0
          %1490 = vmatprep.mubr.f32.mxu0 0.0
          %1491 = vmatmul.mubr.f32.gmra.mrb[0].mxu0 %v719
          %v1492 = vpop.f32.mrb[0].mxu0
          %v1493 = vadd.f32 %v1349, %v1492
          %v1494 = vpop.f32.mrb[0].mxu0
          %1495 = vmatprep.mubr.f32.mxu0 0.0
          %1496 = vmatmul.mubr.f32.gmra.mrb[0].mxu0 %v720
          %v1497 = vpop.f32.mrb[0].mxu0
          %v1498 = vadd.f32 %v1354, %v1497
          %v1499 = vpop.f32.mrb[0].mxu0
          %1500 = vmatprep.mubr.f32.mxu0 0.0
          %1501 = vmatmul.mubr.f32.gmra.mrb[0].mxu0 %v721
          %v1502 = vpop.f32.mrb[0].mxu0
          %v1503 = vadd.f32 %v1359, %v1502
          %v1504 = vpop.f32.mrb[0].mxu0
          %1505 = vmatprep.mubr.f32.mxu0 0.0
          %1506 = vmatmul.mubr.f32.gmra.mrb[0].mxu0 %v722
          %v1507 = vpop.f32.mrb[0].mxu0
          %v1508 = vadd.f32 %v1364, %v1507
          %v1509 = vpop.f32.mrb[0].mxu0
          %1510 = vmatprep.mubr.f32.mxu0 0.0
          %1511 = vmatmul.mubr.f32.gmra.mrb[0].mxu0 %v723
          %v1512 = vpop.f32.mrb[0].mxu0
          %v1513 = vadd.f32 %v1369, %v1512
          %v1514 = vpop.f32.mrb[0].mxu0
          %1515 = vmatprep.mubr.f32.mxu0 0.0
          %1516 = vmatmul.mubr.f32.gmra.mrb[0].mxu0 %v724
          %v1517 = vpop.f32.mrb[0].mxu0
          %v1518 = vadd.f32 %v1374, %v1517
          %v1519 = vpop.f32.mrb[0].mxu0
          %1520 = vmatprep.mubr.f32.mxu0 0.0
          %1521 = vmatmul.mubr.f32.gmra.mrb[0].mxu0 %v725
          %v1522 = vpop.f32.mrb[0].mxu0
          %v1523 = vadd.f32 %v1379, %v1522
          %v1524 = vpop.f32.mrb[0].mxu0
          %1525 = vmatprep.mubr.f32.mxu0 0.0
          %1526 = vmatmul.mubr.f32.gmra.mrb[0].mxu0 %v726
          %v1527 = vpop.f32.mrb[0].mxu0
          %v1528 = vadd.f32 %v1384, %v1527
          %v1529 = vpop.f32.mrb[0].mxu0
          %1530 = vdwg.mxu0
          %v1531 = vld [vmem:[%s8] sm:$0xff]
          %v1532 = vld [vmem:[%s8 + $0x8] sm:$0xff]
          %v1533 = vld [vmem:[%s8 + $0x10] sm:$0xff]
          %v1534 = vld [vmem:[%s8 + $0x18] sm:$0xff]
          %v1535 = vld [vmem:[%s8 + $0x20] sm:$0xff]
          %v1536 = vld [vmem:[%s8 + $0x28] sm:$0xff]
          %v1537 = vld [vmem:[%s8 + $0x30] sm:$0xff]
          %v1538 = vld [vmem:[%s8 + $0x38] sm:$0xff]
          %v1539 = vld [vmem:[%s8 + $0x40] sm:$0xff]
          %v1540 = vld [vmem:[%s8 + $0x48] sm:$0xff]
          %v1541 = vld [vmem:[%s8 + $0x50] sm:$0xff]
          %v1542 = vld [vmem:[%s8 + $0x58] sm:$0xff]
          %v1543 = vld [vmem:[%s8 + $0x60] sm:$0xff]
          %v1544 = vld [vmem:[%s8 + $0x68] sm:$0xff]
          %v1545 = vld [vmem:[%s8 + $0x70] sm:$0xff]
          %v1546 = vld [vmem:[%s8 + $0x78] sm:$0xff]
          %1548 = vset.pattern.permute.xlu0 0
          %1549 = vperm.xlu0 %1548, %v1531
          %v1550 = vpop.permute.xlu0 %1549
          %1553 = vset.pattern.permute.xlu0 0
          %1554 = vperm.xlu0 %1553, %v1532
          %v1555 = vpop.permute.xlu0 %1554
          %1558 = vset.pattern.permute.xlu0 0
          %1559 = vperm.xlu0 %1558, %v1533
          %v1560 = vpop.permute.xlu0 %1559
          %1563 = vset.pattern.permute.xlu0 0
          %1564 = vperm.xlu0 %1563, %v1534
          %v1565 = vpop.permute.xlu0 %1564
          %1568 = vset.pattern.permute.xlu0 0
          %1569 = vperm.xlu0 %1568, %v1535
          %v1570 = vpop.permute.xlu0 %1569
          %1573 = vset.pattern.permute.xlu0 0
          %1574 = vperm.xlu0 %1573, %v1536
          %v1575 = vpop.permute.xlu0 %1574
          %1578 = vset.pattern.permute.xlu0 0
          %1579 = vperm.xlu0 %1578, %v1537
          %v1580 = vpop.permute.xlu0 %1579
          %1583 = vset.pattern.permute.xlu0 0
          %1584 = vperm.xlu0 %1583, %v1538
          %v1585 = vpop.permute.xlu0 %1584
          %1588 = vset.pattern.permute.xlu0 0
          %1589 = vperm.xlu0 %1588, %v1539
          %v1590 = vpop.permute.xlu0 %1589
          %1593 = vset.pattern.permute.xlu0 0
          %1594 = vperm.xlu0 %1593, %v1540
          %v1595 = vpop.permute.xlu0 %1594
          %1598 = vset.pattern.permute.xlu0 0
          %1599 = vperm.xlu0 %1598, %v1541
          %v1600 = vpop.permute.xlu0 %1599
          %1603 = vset.pattern.permute.xlu0 0
          %1604 = vperm.xlu0 %1603, %v1542
          %v1605 = vpop.permute.xlu0 %1604
          %1608 = vset.pattern.permute.xlu0 0
          %1609 = vperm.xlu0 %1608, %v1543
          %v1610 = vpop.permute.xlu0 %1609
          %1613 = vset.pattern.permute.xlu0 0
          %1614 = vperm.xlu0 %1613, %v1544
          %v1615 = vpop.permute.xlu0 %1614
          %1618 = vset.pattern.permute.xlu0 0
          %1619 = vperm.xlu0 %1618, %v1545
          %v1620 = vpop.permute.xlu0 %1619
          %1623 = vset.pattern.permute.xlu0 0
          %1624 = vperm.xlu0 %1623, %v1546
          %v1625 = vpop.permute.xlu0 %1624
          %1627 = vmatprep.subr.mxu0 0.0
          %1628 = vmatpush1.msra.mxu0 %v1274
          %1629 = vmatprep.subr.mxu0 0.0
          %1630 = vmatpush1.msra.mxu0 %v1275
          %1631 = vmatprep.subr.mxu0 0.0
          %1632 = vmatpush1.msra.mxu0 %v1276
          %1633 = vmatprep.subr.mxu0 0.0
          %1634 = vmatpush1.msra.mxu0 %v1277
          %1635 = vmatprep.subr.mxu0 0.0
          %1636 = vmatpush1.msra.mxu0 %v1278
          %1637 = vmatprep.subr.mxu0 0.0
          %1638 = vmatpush1.msra.mxu0 %v1279
          %1639 = vmatprep.subr.mxu0 0.0
          %1640 = vmatpush1.msra.mxu0 %v1280
          %1641 = vmatprep.subr.mxu0 0.0
          %1642 = vmatpush1.msra.mxu0 %v1281
          %1643 = vmatprep.subr.mxu0 0.0
          %1644 = vmatpush1.msra.mxu0 %v1282
          %1645 = vmatprep.subr.mxu0 0.0
          %1646 = vmatpush1.msra.mxu0 %v1283
          %1647 = vmatprep.subr.mxu0 0.0
          %1648 = vmatpush1.msra.mxu0 %v1284
          %1649 = vmatprep.subr.mxu0 0.0
          %1650 = vmatpush1.msra.mxu0 %v1285
          %1651 = vmatprep.subr.mxu0 0.0
          %1652 = vmatpush1.msra.mxu0 %v1286
          %1653 = vmatprep.subr.mxu0 0.0
          %1654 = vmatpush1.msra.mxu0 %v1287
          %1655 = vmatprep.subr.mxu0 0.0
          %1656 = vmatpush1.msra.mxu0 %v1288
          %1657 = vmatprep.subr.mxu0 0.0
          %1658 = vmatpush1.msra.mxu0 %v1289
          %1659 = vmatprep.subr.mxu0 0.0
          %1660 = vmatpush1.msra.mxu0 0.0
          %1661 = vmatprep.subr.mxu0 0.0
          %1662 = vmatpush1.msra.mxu0 0.0
          %1663 = vmatprep.subr.mxu0 0.0
          %1664 = vmatpush1.msra.mxu0 0.0
          %1665 = vmatprep.subr.mxu0 0.0
          %1666 = vmatpush1.msra.mxu0 0.0
          %1667 = vmatprep.subr.mxu0 0.0
          %1668 = vmatpush1.msra.mxu0 0.0
          %1669 = vmatprep.subr.mxu0 0.0
          %1670 = vmatpush1.msra.mxu0 0.0
          %1671 = vmatprep.subr.mxu0 0.0
          %1672 = vmatpush1.msra.mxu0 0.0
          %1673 = vmatprep.subr.mxu0 0.0
          %1674 = vmatpush1.msra.mxu0 0.0
          %1675 = vmatprep.subr.mxu0 0.0
          %1676 = vmatpush1.msra.mxu0 0.0
          %1677 = vmatprep.subr.mxu0 0.0
          %1678 = vmatpush1.msra.mxu0 0.0
          %1679 = vmatprep.subr.mxu0 0.0
          %1680 = vmatpush1.msra.mxu0 0.0
          %1681 = vmatprep.subr.mxu0 0.0
          %1682 = vmatpush1.msra.mxu0 0.0
          %1683 = vmatprep.subr.mxu0 0.0
          %1684 = vmatpush1.msra.mxu0 0.0
          %1685 = vmatprep.subr.mxu0 0.0
          %1686 = vmatpush1.msra.mxu0 0.0
          %1687 = vmatprep.subr.mxu0 0.0
          %1688 = vmatpush1.msra.mxu0 0.0
          %1689 = vmatprep.subr.mxu0 0.0
          %1690 = vmatpush1.msra.mxu0 0.0
          %1691 = vmatprep.mubr.f32.mxu0 0.0
          %1692 = vmatmul.mubr.f32.gmra.mrb[0].mxu0 %v727
          %v1693 = vpop.f32.mrb[0].mxu0
          %v1694 = vadd.f32 %v1550, %v1693
          %v1695 = vpop.f32.mrb[0].mxu0
          %1696 = vmatprep.mubr.f32.mxu0 0.0
          %1697 = vmatmul.mubr.f32.gmra.mrb[0].mxu0 %v728
          %v1698 = vpop.f32.mrb[0].mxu0
          %v1699 = vadd.f32 %v1555, %v1698
          %v1700 = vpop.f32.mrb[0].mxu0
          %1701 = vmatprep.mubr.f32.mxu0 0.0
          %1702 = vmatmul.mubr.f32.gmra.mrb[0].mxu0 %v729
          %v1703 = vpop.f32.mrb[0].mxu0
          %v1704 = vadd.f32 %v1560, %v1703
          %v1705 = vpop.f32.mrb[0].mxu0
          %1706 = vmatprep.mubr.f32.mxu0 0.0
          %1707 = vmatmul.mubr.f32.gmra.mrb[0].mxu0 %v730
          %v1708 = vpop.f32.mrb[0].mxu0
          %v1709 = vadd.f32 %v1565, %v1708
          %v1710 = vpop.f32.mrb[0].mxu0
          %1711 = vmatprep.mubr.f32.mxu0 0.0
          %1712 = vmatmul.mubr.f32.gmra.mrb[0].mxu0 %v731
          %v1713 = vpop.f32.mrb[0].mxu0
          %v1714 = vadd.f32 %v1570, %v1713
          %v1715 = vpop.f32.mrb[0].mxu0
          %1716 = vmatprep.mubr.f32.mxu0 0.0
          %1717 = vmatmul.mubr.f32.gmra.mrb[0].mxu0 %v732
          %v1718 = vpop.f32.mrb[0].mxu0
          %v1719 = vadd.f32 %v1575, %v1718
          %v1720 = vpop.f32.mrb[0].mxu0
          %1721 = vmatprep.mubr.f32.mxu0 0.0
          %1722 = vmatmul.mubr.f32.gmra.mrb[0].mxu0 %v733
          %v1723 = vpop.f32.mrb[0].mxu0
          %v1724 = vadd.f32 %v1580, %v1723
          %v1725 = vpop.f32.mrb[0].mxu0
          %1726 = vmatprep.mubr.f32.mxu0 0.0
          %1727 = vmatmul.mubr.f32.gmra.mrb[0].mxu0 %v734
          %v1728 = vpop.f32.mrb[0].mxu0
          %v1729 = vadd.f32 %v1585, %v1728
          %v1730 = vpop.f32.mrb[0].mxu0
          %1731 = vmatprep.mubr.f32.mxu0 0.0
          %1732 = vmatmul.mubr.f32.gmra.mrb[0].mxu0 %v735
          %v1733 = vpop.f32.mrb[0].mxu0
          %v1734 = vadd.f32 %v1590, %v1733
          %v1735 = vpop.f32.mrb[0].mxu0
          %1736 = vmatprep.mubr.f32.mxu0 0.0
          %1737 = vmatmul.mubr.f32.gmra.mrb[0].mxu0 %v736
          %v1738 = vpop.f32.mrb[0].mxu0
          %v1739 = vadd.f32 %v1595, %v1738
          %v1740 = vpop.f32.mrb[0].mxu0
          %1741 = vmatprep.mubr.f32.mxu0 0.0
          %1742 = vmatmul.mubr.f32.gmra.mrb[0].mxu0 %v737
          %v1743 = vpop.f32.mrb[0].mxu0
          %v1744 = vadd.f32 %v1600, %v1743
          %v1745 = vpop.f32.mrb[0].mxu0
          %1746 = vmatprep.mubr.f32.mxu0 0.0
          %1747 = vmatmul.mubr.f32.gmra.mrb[0].mxu0 %v738
          %v1748 = vpop.f32.mrb[0].mxu0
          %v1749 = vadd.f32 %v1605, %v1748
          %v1750 = vpop.f32.mrb[0].mxu0
          %1751 = vmatprep.mubr.f32.mxu0 0.0
          %1752 = vmatmul.mubr.f32.gmra.mrb[0].mxu0 %v739
          %v1753 = vpop.f32.mrb[0].mxu0
          %v1754 = vadd.f32 %v1610, %v1753
          %v1755 = vpop.f32.mrb[0].mxu0
          %1756 = vmatprep.mubr.f32.mxu0 0.0
          %1757 = vmatmul.mubr.f32.gmra.mrb[0].mxu0 %v740
          %v1758 = vpop.f32.mrb[0].mxu0
          %v1759 = vadd.f32 %v1615, %v1758
          %v1760 = vpop.f32.mrb[0].mxu0
          %1761 = vmatprep.mubr.f32.mxu0 0.0
          %1762 = vmatmul.mubr.f32.gmra.mrb[0].mxu0 %v741
          %v1763 = vpop.f32.mrb[0].mxu0
          %v1764 = vadd.f32 %v1620, %v1763
          %v1765 = vpop.f32.mrb[0].mxu0
          %1766 = vmatprep.mubr.f32.mxu0 0.0
          %1767 = vmatmul.mubr.f32.gmra.mrb[0].mxu0 %v742
          %v1768 = vpop.f32.mrb[0].mxu0
          %v1769 = vadd.f32 %v1625, %v1768
          %v1770 = vpop.f32.mrb[0].mxu0
          %1771 = vdwg.mxu0
          %1772 = vst [vmem:[#allocation2 + $0x8] sm:$0xff] %v1453
          %1773 = vst [vmem:[#allocation2 + $0x18] sm:$0xff] %v1458
          %1774 = vst [vmem:[#allocation2 + $0x28] sm:$0xff] %v1463
          %1775 = vst [vmem:[#allocation2 + $0x38] sm:$0xff] %v1468
          %1776 = vst [vmem:[#allocation2 + $0x48] sm:$0xff] %v1473
          %1777 = vst [vmem:[#allocation2 + $0x58] sm:$0xff] %v1478
          %1778 = vst [vmem:[#allocation2 + $0x68] sm:$0xff] %v1483
          %1779 = vst [vmem:[#allocation2 + $0x78] sm:$0xff] %v1488
          %1780 = vst [vmem:[#allocation2 + $0x88] sm:$0xff] %v1493
          %1781 = vst [vmem:[#allocation2 + $0x98] sm:$0xff] %v1498
          %1782 = vst [vmem:[#allocation2 + $0xa8] sm:$0xff] %v1503
          %1783 = vst [vmem:[#allocation2 + $0xb8] sm:$0xff] %v1508
          %1784 = vst [vmem:[#allocation2 + $0xc8] sm:$0xff] %v1513
          %1785 = vst [vmem:[#allocation2 + $0xd8] sm:$0xff] %v1518
          %1786 = vst [vmem:[#allocation2 + $0xe8] sm:$0xff] %v1523
          %1787 = vst [vmem:[#allocation2 + $0xf8] sm:$0xff] %v1528
          %1788 = vst [vmem:[#allocation3 + $0x8] sm:$0xff] %v1694
          %1789 = vst [vmem:[#allocation3 + $0x18] sm:$0xff] %v1699
          %1790 = vst [vmem:[#allocation3 + $0x28] sm:$0xff] %v1704
          %1791 = vst [vmem:[#allocation3 + $0x38] sm:$0xff] %v1709
          %1792 = vst [vmem:[#allocation3 + $0x48] sm:$0xff] %v1714
          %1793 = vst [vmem:[#allocation3 + $0x58] sm:$0xff] %v1719
          %1794 = vst [vmem:[#allocation3 + $0x68] sm:$0xff] %v1724
          %1795 = vst [vmem:[#allocation3 + $0x78] sm:$0xff] %v1729
          %1796 = vst [vmem:[#allocation3 + $0x88] sm:$0xff] %v1734
          %1797 = vst [vmem:[#allocation3 + $0x98] sm:$0xff] %v1739
          %1798 = vst [vmem:[#allocation3 + $0xa8] sm:$0xff] %v1744
          %1799 = vst [vmem:[#allocation3 + $0xb8] sm:$0xff] %v1749
          %1800 = vst [vmem:[#allocation3 + $0xc8] sm:$0xff] %v1754
          %1801 = vst [vmem:[#allocation3 + $0xd8] sm:$0xff] %v1759
          %1802 = vst [vmem:[#allocation3 + $0xe8] sm:$0xff] %v1764
          %1803 = vst [vmem:[#allocation3 + $0xf8] sm:$0xff] %v1769
        $region144: #{cross_attention.1} parent=131 // pred_fallthru
          _
        %v1804 = vld [vmem:[%s3] sm:$0xff]
        %v1805 = vld [vmem:[%s3 + $0x8] sm:$0xff]
        %v1806 = vld [vmem:[%s3 + $0x10] sm:$0xff]
        %v1807 = vld [vmem:[%s3 + $0x18] sm:$0xff]
        %v1808 = vld [vmem:[%s3 + $0x20] sm:$0xff]
        %v1809 = vld [vmem:[%s3 + $0x28] sm:$0xff]
        %v1810 = vld [vmem:[%s3 + $0x30] sm:$0xff]
        %v1811 = vld [vmem:[%s3 + $0x38] sm:$0xff]
        %v1812 = vld [vmem:[%s3 + $0x40] sm:$0xff]
        %v1813 = vld [vmem:[%s3 + $0x48] sm:$0xff]
        %v1814 = vld [vmem:[%s3 + $0x50] sm:$0xff]
        %v1815 = vld [vmem:[%s3 + $0x58] sm:$0xff]
        %v1816 = vld [vmem:[%s3 + $0x60] sm:$0xff]
        %v1817 = vld [vmem:[%s3 + $0x68] sm:$0xff]
        %v1818 = vld [vmem:[%s3 + $0x70] sm:$0xff]
        %v1819 = vld [vmem:[%s3 + $0x78] sm:$0xff]
        %v1820 = vld [vmem:[%s703] sm:$0xff]
        %v1821 = vld [vmem:[%s703 + $0x8] sm:$0xff]
        %v1822 = vld [vmem:[%s703 + $0x10] sm:$0xff]
        %v1823 = vld [vmem:[%s703 + $0x18] sm:$0xff]
        %v1824 = vld [vmem:[%s703 + $0x20] sm:$0xff]
        %v1825 = vld [vmem:[%s703 + $0x28] sm:$0xff]
        %v1826 = vld [vmem:[%s703 + $0x30] sm:$0xff]
        %v1827 = vld [vmem:[%s703 + $0x38] sm:$0xff]
        %v1828 = vld [vmem:[%s703 + $0x40] sm:$0xff]
        %v1829 = vld [vmem:[%s703 + $0x48] sm:$0xff]
        %v1830 = vld [vmem:[%s703 + $0x50] sm:$0xff]
        %v1831 = vld [vmem:[%s703 + $0x58] sm:$0xff]
        %v1832 = vld [vmem:[%s703 + $0x60] sm:$0xff]
        %v1833 = vld [vmem:[%s703 + $0x68] sm:$0xff]
        %v1834 = vld [vmem:[%s703 + $0x70] sm:$0xff]
        %v1835 = vld [vmem:[%s703 + $0x78] sm:$0xff]
        %v1836 = vld [vmem:[%s4] sm:$0xff]
        %v1837 = vld [vmem:[%s4 + $0x8] sm:$0xff]
        %v1838 = vld [vmem:[%s4 + $0x10] sm:$0xff]
        %v1839 = vld [vmem:[%s4 + $0x18] sm:$0xff]
        %v1840 = vld [vmem:[%s4 + $0x20] sm:$0xff]
        %v1841 = vld [vmem:[%s4 + $0x28] sm:$0xff]
        %v1842 = vld [vmem:[%s4 + $0x30] sm:$0xff]
        %v1843 = vld [vmem:[%s4 + $0x38] sm:$0xff]
        %v1844 = vld [vmem:[%s4 + $0x40] sm:$0xff]
        %v1845 = vld [vmem:[%s4 + $0x48] sm:$0xff]
        %v1846 = vld [vmem:[%s4 + $0x50] sm:$0xff]
        %v1847 = vld [vmem:[%s4 + $0x58] sm:$0xff]
        %v1848 = vld [vmem:[%s4 + $0x60] sm:$0xff]
        %v1849 = vld [vmem:[%s4 + $0x68] sm:$0xff]
        %v1850 = vld [vmem:[%s4 + $0x70] sm:$0xff]
        %v1851 = vld [vmem:[%s4 + $0x78] sm:$0xff]
        %1853 = vset.pattern.permute.xlu0 0
        %1854 = vperm.xlu0 %1853, %v1836
        %v1855 = vpop.permute.xlu0 %1854
        %1858 = vset.pattern.permute.xlu0 0
        %1859 = vperm.xlu0 %1858, %v1837
        %v1860 = vpop.permute.xlu0 %1859
        %1863 = vset.pattern.permute.xlu0 0
        %1864 = vperm.xlu0 %1863, %v1838
        %v1865 = vpop.permute.xlu0 %1864
        %1868 = vset.pattern.permute.xlu0 0
        %1869 = vperm.xlu0 %1868, %v1839
        %v1870 = vpop.permute.xlu0 %1869
        %1873 = vset.pattern.permute.xlu0 0
        %1874 = vperm.xlu0 %1873, %v1840
        %v1875 = vpop.permute.xlu0 %1874
        %1878 = vset.pattern.permute.xlu0 0
        %1879 = vperm.xlu0 %1878, %v1841
        %v1880 = vpop.permute.xlu0 %1879
        %1883 = vset.pattern.permute.xlu0 0
        %1884 = vperm.xlu0 %1883, %v1842
        %v1885 = vpop.permute.xlu0 %1884
        %1888 = vset.pattern.permute.xlu0 0
        %1889 = vperm.xlu0 %1888, %v1843
        %v1890 = vpop.permute.xlu0 %1889
        %1893 = vset.pattern.permute.xlu0 0
        %1894 = vperm.xlu0 %1893, %v1844
        %v1895 = vpop.permute.xlu0 %1894
        %1898 = vset.pattern.permute.xlu0 0
        %1899 = vperm.xlu0 %1898, %v1845
        %v1900 = vpop.permute.xlu0 %1899
        %1903 = vset.pattern.permute.xlu0 0
        %1904 = vperm.xlu0 %1903, %v1846
        %v1905 = vpop.permute.xlu0 %1904
        %1908 = vset.pattern.permute.xlu0 0
        %1909 = vperm.xlu0 %1908, %v1847
        %v1910 = vpop.permute.xlu0 %1909
        %1913 = vset.pattern.permute.xlu0 0
        %1914 = vperm.xlu0 %1913, %v1848
        %v1915 = vpop.permute.xlu0 %1914
        %1918 = vset.pattern.permute.xlu0 0
        %1919 = vperm.xlu0 %1918, %v1849
        %v1920 = vpop.permute.xlu0 %1919
        %1923 = vset.pattern.permute.xlu0 0
        %1924 = vperm.xlu0 %1923, %v1850
        %v1925 = vpop.permute.xlu0 %1924
        %1928 = vset.pattern.permute.xlu0 0
        %1929 = vperm.xlu0 %1928, %v1851
        %v1930 = vpop.permute.xlu0 %1929
        %vm1932 = vcmask 523264
        %v1934 = vsel %vm1932, %v1804, 0
        %v1937 = vsel %vm1932, %v1805, 0
        %v1940 = vsel %vm1932, %v1806, 0
        %v1943 = vsel %vm1932, %v1807, 0
        %v1946 = vsel %vm1932, %v1808, 0
        %v1949 = vsel %vm1932, %v1809, 0
        %v1952 = vsel %vm1932, %v1810, 0
        %v1955 = vsel %vm1932, %v1811, 0
        %v1958 = vsel %vm1932, %v1812, 0
        %v1961 = vsel %vm1932, %v1813, 0
        %v1964 = vsel %vm1932, %v1814, 0
        %v1967 = vsel %vm1932, %v1815, 0
        %v1970 = vsel %vm1932, %v1816, 0
        %v1973 = vsel %vm1932, %v1817, 0
        %v1976 = vsel %vm1932, %v1818, 0
        %v1979 = vsel %vm1932, %v1819, 0
        %v1982 = vsel %vm1932, %v1820, 0
        %v1985 = vsel %vm1932, %v1821, 0
        %v1988 = vsel %vm1932, %v1822, 0
        %v1991 = vsel %vm1932, %v1823, 0
        %v1994 = vsel %vm1932, %v1824, 0
        %v1997 = vsel %vm1932, %v1825, 0
        %v2000 = vsel %vm1932, %v1826, 0
        %v2003 = vsel %vm1932, %v1827, 0
        %v2006 = vsel %vm1932, %v1828, 0
        %v2009 = vsel %vm1932, %v1829, 0
        %v2012 = vsel %vm1932, %v1830, 0
        %v2015 = vsel %vm1932, %v1831, 0
        %v2018 = vsel %vm1932, %v1832, 0
        %v2021 = vsel %vm1932, %v1833, 0
        %v2024 = vsel %vm1932, %v1834, 0
        %v2027 = vsel %vm1932, %v1835, 0
        %2029 = vmatprep.subr.mxu0 0.0
        %2030 = vmatpush1.xpose.msra.mxu0 %v1982
        %2031 = vmatprep.subr.mxu0 0.0
        %2032 = vmatpush1.xpose.msra.mxu0 %v1985
        %2033 = vmatprep.subr.mxu0 0.0
        %2034 = vmatpush1.xpose.msra.mxu0 %v1988
        %2035 = vmatprep.subr.mxu0 0.0
        %2036 = vmatpush1.xpose.msra.mxu0 %v1991
        %2037 = vmatprep.subr.mxu0 0.0
        %2038 = vmatpush1.xpose.msra.mxu0 %v1994
        %2039 = vmatprep.subr.mxu0 0.0
        %2040 = vmatpush1.xpose.msra.mxu0 %v1997
        %2041 = vmatprep.subr.mxu0 0.0
        %2042 = vmatpush1.xpose.msra.mxu0 %v2000
        %2043 = vmatprep.subr.mxu0 0.0
        %2044 = vmatpush1.xpose.msra.mxu0 %v2003
        %2045 = vmatprep.subr.mxu0 0.0
        %2046 = vmatpush1.xpose.msra.mxu0 %v2006
        %2047 = vmatprep.subr.mxu0 0.0
        %2048 = vmatpush1.xpose.msra.mxu0 %v2009
        %2049 = vmatprep.subr.mxu0 0.0
        %2050 = vmatpush1.xpose.msra.mxu0 %v2012
        %2051 = vmatprep.subr.mxu0 0.0
        %2052 = vmatpush1.xpose.msra.mxu0 %v2015
        %2053 = vmatprep.subr.mxu0 0.0
        %2054 = vmatpush1.xpose.msra.mxu0 %v2018
        %2055 = vmatprep.subr.mxu0 0.0
        %2056 = vmatpush1.xpose.msra.mxu0 %v2021
        %2057 = vmatprep.subr.mxu0 0.0
        %2058 = vmatpush1.xpose.msra.mxu0 %v2024
        %2059 = vmatprep.subr.mxu0 0.0
        %2060 = vmatpush1.xpose.msra.mxu0 %v2027
        %2061 = vmatprep.subr.mxu0 0.0
        %2062 = vmatpush1.xpose.msra.mxu0 0.0
        %2063 = vmatprep.subr.mxu0 0.0
        %2064 = vmatpush1.xpose.msra.mxu0 0.0
        %2065 = vmatprep.subr.mxu0 0.0
        %2066 = vmatpush1.xpose.msra.mxu0 0.0
        %2067 = vmatprep.subr.mxu0 0.0
        %2068 = vmatpush1.xpose.msra.mxu0 0.0
        %2069 = vmatprep.subr.mxu0 0.0
        %2070 = vmatpush1.xpose.msra.mxu0 0.0
        %2071 = vmatprep.subr.mxu0 0.0
        %2072 = vmatpush1.xpose.msra.mxu0 0.0
        %2073 = vmatprep.subr.mxu0 0.0
        %2074 = vmatpush1.xpose.msra.mxu0 0.0
        %2075 = vmatprep.subr.mxu0 0.0
        %2076 = vmatpush1.xpose.msra.mxu0 0.0
        %2077 = vmatprep.subr.mxu0 0.0
        %2078 = vmatpush1.xpose.msra.mxu0 0.0
        %2079 = vmatprep.subr.mxu0 0.0
        %2080 = vmatpush1.xpose.msra.mxu0 0.0
        %2081 = vmatprep.subr.mxu0 0.0
        %2082 = vmatpush1.xpose.msra.mxu0 0.0
        %2083 = vmatprep.subr.mxu0 0.0
        %2084 = vmatpush1.xpose.msra.mxu0 0.0
        %2085 = vmatprep.subr.mxu0 0.0
        %2086 = vmatpush1.xpose.msra.mxu0 0.0
        %2087 = vmatprep.subr.mxu0 0.0
        %2088 = vmatpush1.xpose.msra.mxu0 0.0
        %2089 = vmatprep.subr.mxu0 0.0
        %2090 = vmatpush1.xpose.msra.mxu0 0.0
        %2091 = vmatprep.subr.mxu0 0.0
        %2092 = vmatpush1.xpose.msra.mxu0 0.0
        %2093 = vmatprep.mubr.f32.mxu0 0.0
        %2094 = vmatmul.mubr.f32.gmra.mrb[0].mxu0 %v1934
        %v2095 = vpop.f32.mrb[0].mxu0
        %v2096 = vadd.f32 %v1855, %v2095
        %v2097 = vpop.f32.mrb[0].mxu0
        %2098 = vmatprep.mubr.f32.mxu0 0.0
        %2099 = vmatmul.mubr.f32.gmra.mrb[0].mxu0 %v1937
        %v2100 = vpop.f32.mrb[0].mxu0
        %v2101 = vadd.f32 %v1860, %v2100
        %v2102 = vpop.f32.mrb[0].mxu0
        %2103 = vmatprep.mubr.f32.mxu0 0.0
        %2104 = vmatmul.mubr.f32.gmra.mrb[0].mxu0 %v1940
        %v2105 = vpop.f32.mrb[0].mxu0
        %v2106 = vadd.f32 %v1865, %v2105
        %v2107 = vpop.f32.mrb[0].mxu0
        %2108 = vmatprep.mubr.f32.mxu0 0.0
        %2109 = vmatmul.mubr.f32.gmra.mrb[0].mxu0 %v1943
        %v2110 = vpop.f32.mrb[0].mxu0
        %v2111 = vadd.f32 %v1870, %v2110
        %v2112 = vpop.f32.mrb[0].mxu0
        %2113 = vmatprep.mubr.f32.mxu0 0.0
        %2114 = vmatmul.mubr.f32.gmra.mrb[0].mxu0 %v1946
        %v2115 = vpop.f32.mrb[0].mxu0
        %v2116 = vadd.f32 %v1875, %v2115
        %v2117 = vpop.f32.mrb[0].mxu0
        %2118 = vmatprep.mubr.f32.mxu0 0.0
        %2119 = vmatmul.mubr.f32.gmra.mrb[0].mxu0 %v1949
        %v2120 = vpop.f32.mrb[0].mxu0
        %v2121 = vadd.f32 %v1880, %v2120
        %v2122 = vpop.f32.mrb[0].mxu0
        %2123 = vmatprep.mubr.f32.mxu0 0.0
        %2124 = vmatmul.mubr.f32.gmra.mrb[0].mxu0 %v1952
        %v2125 = vpop.f32.mrb[0].mxu0
        %v2126 = vadd.f32 %v1885, %v2125
        %v2127 = vpop.f32.mrb[0].mxu0
        %2128 = vmatprep.mubr.f32.mxu0 0.0
        %2129 = vmatmul.mubr.f32.gmra.mrb[0].mxu0 %v1955
        %v2130 = vpop.f32.mrb[0].mxu0
        %v2131 = vadd.f32 %v1890, %v2130
        %v2132 = vpop.f32.mrb[0].mxu0
        %2133 = vmatprep.mubr.f32.mxu0 0.0
        %2134 = vmatmul.mubr.f32.gmra.mrb[0].mxu0 %v1958
        %v2135 = vpop.f32.mrb[0].mxu0
        %v2136 = vadd.f32 %v1895, %v2135
        %v2137 = vpop.f32.mrb[0].mxu0
        %2138 = vmatprep.mubr.f32.mxu0 0.0
        %2139 = vmatmul.mubr.f32.gmra.mrb[0].mxu0 %v1961
        %v2140 = vpop.f32.mrb[0].mxu0
        %v2141 = vadd.f32 %v1900, %v2140
        %v2142 = vpop.f32.mrb[0].mxu0
        %2143 = vmatprep.mubr.f32.mxu0 0.0
        %2144 = vmatmul.mubr.f32.gmra.mrb[0].mxu0 %v1964
        %v2145 = vpop.f32.mrb[0].mxu0
        %v2146 = vadd.f32 %v1905, %v2145
        %v2147 = vpop.f32.mrb[0].mxu0
        %2148 = vmatprep.mubr.f32.mxu0 0.0
        %2149 = vmatmul.mubr.f32.gmra.mrb[0].mxu0 %v1967
        %v2150 = vpop.f32.mrb[0].mxu0
        %v2151 = vadd.f32 %v1910, %v2150
        %v2152 = vpop.f32.mrb[0].mxu0
        %2153 = vmatprep.mubr.f32.mxu0 0.0
        %2154 = vmatmul.mubr.f32.gmra.mrb[0].mxu0 %v1970
        %v2155 = vpop.f32.mrb[0].mxu0
        %v2156 = vadd.f32 %v1915, %v2155
        %v2157 = vpop.f32.mrb[0].mxu0
        %2158 = vmatprep.mubr.f32.mxu0 0.0
        %2159 = vmatmul.mubr.f32.gmra.mrb[0].mxu0 %v1973
        %v2160 = vpop.f32.mrb[0].mxu0
        %v2161 = vadd.f32 %v1920, %v2160
        %v2162 = vpop.f32.mrb[0].mxu0
        %2163 = vmatprep.mubr.f32.mxu0 0.0
        %2164 = vmatmul.mubr.f32.gmra.mrb[0].mxu0 %v1976
        %v2165 = vpop.f32.mrb[0].mxu0
        %v2166 = vadd.f32 %v1925, %v2165
        %v2167 = vpop.f32.mrb[0].mxu0
        %2168 = vmatprep.mubr.f32.mxu0 0.0
        %2169 = vmatmul.mubr.f32.gmra.mrb[0].mxu0 %v1979
        %v2170 = vpop.f32.mrb[0].mxu0
        %v2171 = vadd.f32 %v1930, %v2170
        %v2172 = vpop.f32.mrb[0].mxu0
        %2173 = vdwg.mxu0
        %v2174 = vmul.f32 %v2096, 0.17677669
        %v2175 = vmul.f32 %v2101, 0.17677669
        %v2176 = vmul.f32 %v2106, 0.17677669
        %v2177 = vmul.f32 %v2111, 0.17677669
        %v2178 = vmul.f32 %v2116, 0.17677669
        %v2179 = vmul.f32 %v2121, 0.17677669
        %v2180 = vmul.f32 %v2126, 0.17677669
        %v2181 = vmul.f32 %v2131, 0.17677669
        %v2182 = vmul.f32 %v2136, 0.17677669
        %v2183 = vmul.f32 %v2141, 0.17677669
        %v2184 = vmul.f32 %v2146, 0.17677669
        %v2185 = vmul.f32 %v2151, 0.17677669
        %v2186 = vmul.f32 %v2156, 0.17677669
        %v2187 = vmul.f32 %v2161, 0.17677669
        %v2188 = vmul.f32 %v2166, 0.17677669
        %v2189 = vmul.f32 %v2171, 0.17677669
        %2190 = vxpose.xlu0.b32.start [1/16] %v2174, 128
        %2191 = vxpose.xlu0.b32.cont [2/16] %v2175, 128
        %2192 = vxpose.xlu0.b32.cont [3/16] %v2176, 128
        %2193 = vxpose.xlu0.b32.cont [4/16] %v2177, 128
        %2194 = vxpose.xlu0.b32.cont [5/16] 0.0, 128
        %2195 = vxpose.xlu0.b32.cont [6/16] 0.0, 128
        %2196 = vxpose.xlu0.b32.cont [7/16] 0.0, 128
        %2197 = vxpose.xlu0.b32.cont [8/16] 0.0, 128
        %2198 = vxpose.xlu0.b32.cont [9/16] 0.0, 128
        %2199 = vxpose.xlu0.b32.cont [10/16] 0.0, 128
        %2200 = vxpose.xlu0.b32.cont [11/16] 0.0, 128
        %2201 = vxpose.xlu0.b32.cont [12/16] 0.0, 128
        %2202 = vxpose.xlu0.b32.cont [13/16] 0.0, 128
        %2203 = vxpose.xlu0.b32.cont [14/16] 0.0, 128
        %2204 = vxpose.xlu0.b32.cont [15/16] 0.0, 128
        %2205 = vxpose.xlu0.b32.end [16/16] 0.0, 128
        %v2206 = vpop.trf.xlu0
        %v2207 = vpop.trf.xlu0
        %v2208 = vpop.trf.xlu0
        %v2209 = vpop.trf.xlu0
        %v2210 = vpop.trf.xlu0
        %v2211 = vpop.trf.xlu0
        %v2212 = vpop.trf.xlu0
        %v2213 = vpop.trf.xlu0
        %v2214 = vpop.trf.xlu0
        %v2215 = vpop.trf.xlu0
        %v2216 = vpop.trf.xlu0
        %v2217 = vpop.trf.xlu0
        %v2218 = vpop.trf.xlu0
        %v2219 = vpop.trf.xlu0
        %v2220 = vpop.trf.xlu0
        %v2221 = vpop.trf.xlu0
        %v2222 = vld [vmem:[#allocation2] sm:$0xff]
        %v2223 = vld [vmem:[#allocation2 + $0x8] sm:$0xff]
        %v2224 = vld [vmem:[#allocation2 + $0x10] sm:$0xff]
        %v2225 = vld [vmem:[#allocation2 + $0x18] sm:$0xff]
        %v2226 = vld [vmem:[#allocation2 + $0x20] sm:$0xff]
        %v2227 = vld [vmem:[#allocation2 + $0x28] sm:$0xff]
        %v2228 = vld [vmem:[#allocation2 + $0x30] sm:$0xff]
        %v2229 = vld [vmem:[#allocation2 + $0x38] sm:$0xff]
        %vm2230 = vcmask 261120
        %v2232 = vsel %vm2230, %v2206, 0
        %v2235 = vsel %vm2230, %v2207, 0
        %v2238 = vsel %vm2230, %v2208, 0
        %v2241 = vsel %vm2230, %v2209, 0
        %v2244 = vsel %vm2230, %v2210, 0
        %v2247 = vsel %vm2230, %v2211, 0
        %v2250 = vsel %vm2230, %v2212, 0
        %v2253 = vsel %vm2230, %v2213, 0
        %v2256 = vsel %vm2230, %v2214, 0
        %v2259 = vsel %vm2230, %v2215, 0
        %v2262 = vsel %vm2230, %v2216, 0
        %v2265 = vsel %vm2230, %v2217, 0
        %v2268 = vsel %vm2230, %v2218, 0
        %v2271 = vsel %vm2230, %v2219, 0
        %v2274 = vsel %vm2230, %v2220, 0
        %v2277 = vsel %vm2230, %v2221, 0
        %2279 = vmatprep.subr.mxu0 %v2223
        %2280 = vmatpush1.msra.mxu0 %v2222
        %2281 = vmatprep.subr.mxu0 %v2225
        %2282 = vmatpush1.msra.mxu0 %v2224
        %2283 = vmatprep.subr.mxu0 %v2227
        %2284 = vmatpush1.msra.mxu0 %v2226
        %2285 = vmatprep.subr.mxu0 %v2229
        %2286 = vmatpush1.msra.mxu0 %v2228
        %2287 = vmatprep.subr.mxu0 0.0
        %2288 = vmatpush1.msra.mxu0 0.0
        %2289 = vmatprep.subr.mxu0 0.0
        %2290 = vmatpush1.msra.mxu0 0.0
        %2291 = vmatprep.subr.mxu0 0.0
        %2292 = vmatpush1.msra.mxu0 0.0
        %2293 = vmatprep.subr.mxu0 0.0
        %2294 = vmatpush1.msra.mxu0 0.0
        %2295 = vmatprep.subr.mxu0 0.0
        %2296 = vmatpush1.msra.mxu0 0.0
        %2297 = vmatprep.subr.mxu0 0.0
        %2298 = vmatpush1.msra.mxu0 0.0
        %2299 = vmatprep.subr.mxu0 0.0
        %2300 = vmatpush1.msra.mxu0 0.0
        %2301 = vmatprep.subr.mxu0 0.0
        %2302 = vmatpush1.msra.mxu0 0.0
        %2303 = vmatprep.subr.mxu0 0.0
        %2304 = vmatpush1.msra.mxu0 0.0
        %2305 = vmatprep.subr.mxu0 0.0
        %2306 = vmatpush1.msra.mxu0 0.0
        %2307 = vmatprep.subr.mxu0 0.0
        %2308 = vmatpush1.msra.mxu0 0.0
        %2309 = vmatprep.subr.mxu0 0.0
        %2310 = vmatpush1.msra.mxu0 0.0
        %2311 = vmatprep.subr.mxu0 0.0
        %2312 = vmatpush1.msra.mxu0 0.0
        %2313 = vmatprep.subr.mxu0 0.0
        %2314 = vmatpush1.msra.mxu0 0.0
        %2315 = vmatprep.subr.mxu0 0.0
        %2316 = vmatpush1.msra.mxu0 0.0
        %2317 = vmatprep.subr.mxu0 0.0
        %2318 = vmatpush1.msra.mxu0 0.0
        %2319 = vmatprep.subr.mxu0 0.0
        %2320 = vmatpush1.msra.mxu0 0.0
        %2321 = vmatprep.subr.mxu0 0.0
        %2322 = vmatpush1.msra.mxu0 0.0
        %2323 = vmatprep.subr.mxu0 0.0
        %2324 = vmatpush1.msra.mxu0 0.0
        %2325 = vmatprep.subr.mxu0 0.0
        %2326 = vmatpush1.msra.mxu0 0.0
        %2327 = vmatprep.subr.mxu0 0.0
        %2328 = vmatpush1.msra.mxu0 0.0
        %2329 = vmatprep.subr.mxu0 0.0
        %2330 = vmatpush1.msra.mxu0 0.0
        %2331 = vmatprep.subr.mxu0 0.0
        %2332 = vmatpush1.msra.mxu0 0.0
        %2333 = vmatprep.subr.mxu0 0.0
        %2334 = vmatpush1.msra.mxu0 0.0
        %2335 = vmatprep.subr.mxu0 0.0
        %2336 = vmatpush1.msra.mxu0 0.0
        %2337 = vmatprep.subr.mxu0 0.0
        %2338 = vmatpush1.msra.mxu0 0.0
        %2339 = vmatprep.subr.mxu0 0.0
        %2340 = vmatpush1.msra.mxu0 0.0
        %2341 = vmatprep.subr.mxu0 0.0
        %2342 = vmatpush1.msra.mxu0 0.0
        %2343 = vmatprep.mubr.f32.mxu0 0.0
        %2344 = vmatmul.mubr.f32.gmra.mrb[0].mxu0 %v2232
        %v2345 = vpop.f32.mrb[0].mxu0
        %v2346 = vadd.f32 0.0, %v2345
        %v2347 = vpop.f32.mrb[0].mxu0
        %v2348 = vadd.f32 0.0, %v2347
        %2349 = vmatprep.mubr.f32.mxu0 0.0
        %2350 = vmatmul.mubr.f32.gmra.mrb[0].mxu0 %v2235
        %v2351 = vpop.f32.mrb[0].mxu0
        %v2352 = vadd.f32 0.0, %v2351
        %v2353 = vpop.f32.mrb[0].mxu0
        %v2354 = vadd.f32 0.0, %v2353
        %2355 = vmatprep.mubr.f32.mxu0 0.0
        %2356 = vmatmul.mubr.f32.gmra.mrb[0].mxu0 %v2238
        %v2357 = vpop.f32.mrb[0].mxu0
        %v2358 = vadd.f32 0.0, %v2357
        %v2359 = vpop.f32.mrb[0].mxu0
        %v2360 = vadd.f32 0.0, %v2359
        %2361 = vmatprep.mubr.f32.mxu0 0.0
        %2362 = vmatmul.mubr.f32.gmra.mrb[0].mxu0 %v2241
        %v2363 = vpop.f32.mrb[0].mxu0
        %v2364 = vadd.f32 0.0, %v2363
        %v2365 = vpop.f32.mrb[0].mxu0
        %v2366 = vadd.f32 0.0, %v2365
        %2367 = vmatprep.mubr.f32.mxu0 0.0
        %2368 = vmatmul.mubr.f32.gmra.mrb[0].mxu0 %v2244
        %v2369 = vpop.f32.mrb[0].mxu0
        %v2370 = vadd.f32 0.0, %v2369
        %v2371 = vpop.f32.mrb[0].mxu0
        %v2372 = vadd.f32 0.0, %v2371
        %2373 = vmatprep.mubr.f32.mxu0 0.0
        %2374 = vmatmul.mubr.f32.gmra.mrb[0].mxu0 %v2247
        %v2375 = vpop.f32.mrb[0].mxu0
        %v2376 = vadd.f32 0.0, %v2375
        %v2377 = vpop.f32.mrb[0].mxu0
        %v2378 = vadd.f32 0.0, %v2377
        %2379 = vmatprep.mubr.f32.mxu0 0.0
        %2380 = vmatmul.mubr.f32.gmra.mrb[0].mxu0 %v2250
        %v2381 = vpop.f32.mrb[0].mxu0
        %v2382 = vadd.f32 0.0, %v2381
        %v2383 = vpop.f32.mrb[0].mxu0
        %v2384 = vadd.f32 0.0, %v2383
        %2385 = vmatprep.mubr.f32.mxu0 0.0
        %2386 = vmatmul.mubr.f32.gmra.mrb[0].mxu0 %v2253
        %v2387 = vpop.f32.mrb[0].mxu0
        %v2388 = vadd.f32 0.0, %v2387
        %v2389 = vpop.f32.mrb[0].mxu0
        %v2390 = vadd.f32 0.0, %v2389
        %2391 = vmatprep.mubr.f32.mxu0 0.0
        %2392 = vmatmul.mubr.f32.gmra.mrb[0].mxu0 %v2256
        %v2393 = vpop.f32.mrb[0].mxu0
        %v2394 = vadd.f32 0.0, %v2393
        %v2395 = vpop.f32.mrb[0].mxu0
        %v2396 = vadd.f32 0.0, %v2395
        %2397 = vmatprep.mubr.f32.mxu0 0.0
        %2398 = vmatmul.mubr.f32.gmra.mrb[0].mxu0 %v2259
        %v2399 = vpop.f32.mrb[0].mxu0
        %v2400 = vadd.f32 0.0, %v2399
        %v2401 = vpop.f32.mrb[0].mxu0
        %v2402 = vadd.f32 0.0, %v2401
        %2403 = vmatprep.mubr.f32.mxu0 0.0
        %2404 = vmatmul.mubr.f32.gmra.mrb[0].mxu0 %v2262
        %v2405 = vpop.f32.mrb[0].mxu0
        %v2406 = vadd.f32 0.0, %v2405
        %v2407 = vpop.f32.mrb[0].mxu0
        %v2408 = vadd.f32 0.0, %v2407
        %2409 = vmatprep.mubr.f32.mxu0 0.0
        %2410 = vmatmul.mubr.f32.gmra.mrb[0].mxu0 %v2265
        %v2411 = vpop.f32.mrb[0].mxu0
        %v2412 = vadd.f32 0.0, %v2411
        %v2413 = vpop.f32.mrb[0].mxu0
        %v2414 = vadd.f32 0.0, %v2413
        %2415 = vmatprep.mubr.f32.mxu0 0.0
        %2416 = vmatmul.mubr.f32.gmra.mrb[0].mxu0 %v2268
        %v2417 = vpop.f32.mrb[0].mxu0
        %v2418 = vadd.f32 0.0, %v2417
        %v2419 = vpop.f32.mrb[0].mxu0
        %v2420 = vadd.f32 0.0, %v2419
        %2421 = vmatprep.mubr.f32.mxu0 0.0
        %2422 = vmatmul.mubr.f32.gmra.mrb[0].mxu0 %v2271
        %v2423 = vpop.f32.mrb[0].mxu0
        %v2424 = vadd.f32 0.0, %v2423
        %v2425 = vpop.f32.mrb[0].mxu0
        %v2426 = vadd.f32 0.0, %v2425
        %2427 = vmatprep.mubr.f32.mxu0 0.0
        %2428 = vmatmul.mubr.f32.gmra.mrb[0].mxu0 %v2274
        %v2429 = vpop.f32.mrb[0].mxu0
        %v2430 = vadd.f32 0.0, %v2429
        %v2431 = vpop.f32.mrb[0].mxu0
        %v2432 = vadd.f32 0.0, %v2431
        %2433 = vmatprep.mubr.f32.mxu0 0.0
        %2434 = vmatmul.mubr.f32.gmra.mrb[0].mxu0 %v2277
        %v2435 = vpop.f32.mrb[0].mxu0
        %v2436 = vadd.f32 0.0, %v2435
        %v2437 = vpop.f32.mrb[0].mxu0
        %v2438 = vadd.f32 0.0, %v2437
        %2439 = vdwg.mxu0
        %v2440 = vmax.f32 %v2346, %v2348
        %2441 = vmax.xlane.f32.xlu0 %v2440
        %v2442 = vpop.xlane.xlu0 %2441
        %v2443 = vmax.f32 %v2352, %v2354
        %2444 = vmax.xlane.f32.xlu0 %v2443
        %v2445 = vpop.xlane.xlu0 %2444
        %v2446 = vmax.f32 %v2358, %v2360
        %2447 = vmax.xlane.f32.xlu0 %v2446
        %v2448 = vpop.xlane.xlu0 %2447
        %v2449 = vmax.f32 %v2364, %v2366
        %2450 = vmax.xlane.f32.xlu0 %v2449
        %v2451 = vpop.xlane.xlu0 %2450
        %v2452 = vmax.f32 %v2370, %v2372
        %2453 = vmax.xlane.f32.xlu0 %v2452
        %v2454 = vpop.xlane.xlu0 %2453
        %v2455 = vmax.f32 %v2376, %v2378
        %2456 = vmax.xlane.f32.xlu0 %v2455
        %v2457 = vpop.xlane.xlu0 %2456
        %v2458 = vmax.f32 %v2382, %v2384
        %2459 = vmax.xlane.f32.xlu0 %v2458
        %v2460 = vpop.xlane.xlu0 %2459
        %v2461 = vmax.f32 %v2388, %v2390
        %2462 = vmax.xlane.f32.xlu0 %v2461
        %v2463 = vpop.xlane.xlu0 %2462
        %v2464 = vmax.f32 %v2394, %v2396
        %2465 = vmax.xlane.f32.xlu0 %v2464
        %v2466 = vpop.xlane.xlu0 %2465
        %v2467 = vmax.f32 %v2400, %v2402
        %2468 = vmax.xlane.f32.xlu0 %v2467
        %v2469 = vpop.xlane.xlu0 %2468
        %v2470 = vmax.f32 %v2406, %v2408
        %2471 = vmax.xlane.f32.xlu0 %v2470
        %v2472 = vpop.xlane.xlu0 %2471
        %v2473 = vmax.f32 %v2412, %v2414
        %2474 = vmax.xlane.f32.xlu0 %v2473
        %v2475 = vpop.xlane.xlu0 %2474
        %v2476 = vmax.f32 %v2418, %v2420
        %2477 = vmax.xlane.f32.xlu0 %v2476
        %v2478 = vpop.xlane.xlu0 %2477
        %v2479 = vmax.f32 %v2424, %v2426
        %2480 = vmax.xlane.f32.xlu0 %v2479
        %v2481 = vpop.xlane.xlu0 %2480
        %v2482 = vmax.f32 %v2430, %v2432
        %2483 = vmax.xlane.f32.xlu0 %v2482
        %v2484 = vpop.xlane.xlu0 %2483
        %v2485 = vmax.f32 %v2436, %v2438
        %2486 = vmax.xlane.f32.xlu0 %v2485
        %v2487 = vpop.xlane.xlu0 %2486
        %v2488 = vsub.f32 %v2346, %v2442
        %v2489 = vsub.f32 %v2348, %v2442
        %v2490 = vsub.f32 %v2352, %v2445
        %v2491 = vsub.f32 %v2354, %v2445
        %v2492 = vsub.f32 %v2358, %v2448
        %v2493 = vsub.f32 %v2360, %v2448
        %v2494 = vsub.f32 %v2364, %v2451
        %v2495 = vsub.f32 %v2366, %v2451
        %v2496 = vsub.f32 %v2370, %v2454
        %v2497 = vsub.f32 %v2372, %v2454
        %v2498 = vsub.f32 %v2376, %v2457
        %v2499 = vsub.f32 %v2378, %v2457
        %v2500 = vsub.f32 %v2382, %v2460
        %v2501 = vsub.f32 %v2384, %v2460
        %v2502 = vsub.f32 %v2388, %v2463
        %v2503 = vsub.f32 %v2390, %v2463
        %v2504 = vsub.f32 %v2394, %v2466
        %v2505 = vsub.f32 %v2396, %v2466
        %v2506 = vsub.f32 %v2400, %v2469
        %v2507 = vsub.f32 %v2402, %v2469
        %v2508 = vsub.f32 %v2406, %v2472
        %v2509 = vsub.f32 %v2408, %v2472
        %v2510 = vsub.f32 %v2412, %v2475
        %v2511 = vsub.f32 %v2414, %v2475
        %v2512 = vsub.f32 %v2418, %v2478
        %v2513 = vsub.f32 %v2420, %v2478
        %v2514 = vsub.f32 %v2424, %v2481
        %v2515 = vsub.f32 %v2426, %v2481
        %v2516 = vsub.f32 %v2430, %v2484
        %v2517 = vsub.f32 %v2432, %v2484
        %v2518 = vsub.f32 %v2436, %v2487
        %v2519 = vsub.f32 %v2438, %v2487
        %v2520 = vmul.f32 %v2488, 1.442695
        %v2521 = vpow.pop %v2520
        %v2522 = vmul.f32 %v2489, 1.442695
        %v2523 = vpow.pop %v2522
        %v2524 = vmul.f32 %v2490, 1.442695
        %v2525 = vpow.pop %v2524
        %v2526 = vmul.f32 %v2491, 1.442695
        %v2527 = vpow.pop %v2526
        %v2528 = vmul.f32 %v2492, 1.442695
        %v2529 = vpow.pop %v2528
        %v2530 = vmul.f32 %v2493, 1.442695
        %v2531 = vpow.pop %v2530
        %v2532 = vmul.f32 %v2494, 1.442695
        %v2533 = vpow.pop %v2532
        %v2534 = vmul.f32 %v2495, 1.442695
        %v2535 = vpow.pop %v2534
        %v2536 = vmul.f32 %v2496, 1.442695
        %v2537 = vpow.pop %v2536
        %v2538 = vmul.f32 %v2497, 1.442695
        %v2539 = vpow.pop %v2538
        %v2540 = vmul.f32 %v2498, 1.442695
        %v2541 = vpow.pop %v2540
        %v2542 = vmul.f32 %v2499, 1.442695
        %v2543 = vpow.pop %v2542
        %v2544 = vmul.f32 %v2500, 1.442695
        %v2545 = vpow.pop %v2544
        %v2546 = vmul.f32 %v2501, 1.442695
        %v2547 = vpow.pop %v2546
        %v2548 = vmul.f32 %v2502, 1.442695
        %v2549 = vpow.pop %v2548
        %v2550 = vmul.f32 %v2503, 1.442695
        %v2551 = vpow.pop %v2550
        %v2552 = vmul.f32 %v2504, 1.442695
        %v2553 = vpow.pop %v2552
        %v2554 = vmul.f32 %v2505, 1.442695
        %v2555 = vpow.pop %v2554
        %v2556 = vmul.f32 %v2506, 1.442695
        %v2557 = vpow.pop %v2556
        %v2558 = vmul.f32 %v2507, 1.442695
        %v2559 = vpow.pop %v2558
        %v2560 = vmul.f32 %v2508, 1.442695
        %v2561 = vpow.pop %v2560
        %v2562 = vmul.f32 %v2509, 1.442695
        %v2563 = vpow.pop %v2562
        %v2564 = vmul.f32 %v2510, 1.442695
        %v2565 = vpow.pop %v2564
        %v2566 = vmul.f32 %v2511, 1.442695
        %v2567 = vpow.pop %v2566
        %v2568 = vmul.f32 %v2512, 1.442695
        %v2569 = vpow.pop %v2568
        %v2570 = vmul.f32 %v2513, 1.442695
        %v2571 = vpow.pop %v2570
        %v2572 = vmul.f32 %v2514, 1.442695
        %v2573 = vpow.pop %v2572
        %v2574 = vmul.f32 %v2515, 1.442695
        %v2575 = vpow.pop %v2574
        %v2576 = vmul.f32 %v2516, 1.442695
        %v2577 = vpow.pop %v2576
        %v2578 = vmul.f32 %v2517, 1.442695
        %v2579 = vpow.pop %v2578
        %v2580 = vmul.f32 %v2518, 1.442695
        %v2581 = vpow.pop %v2580
        %v2582 = vmul.f32 %v2519, 1.442695
        %v2583 = vpow.pop %v2582
        %v2584 = vadd.f32 %v2521, %v2523
        %2585 = vadd.xlane.f32.xlu0 %v2584
        %v2586 = vpop.xlane.xlu0 %2585
        %v2587 = vadd.f32 %v2525, %v2527
        %2588 = vadd.xlane.f32.xlu0 %v2587
        %v2589 = vpop.xlane.xlu0 %2588
        %v2590 = vadd.f32 %v2529, %v2531
        %2591 = vadd.xlane.f32.xlu0 %v2590
        %v2592 = vpop.xlane.xlu0 %2591
        %v2593 = vadd.f32 %v2533, %v2535
        %2594 = vadd.xlane.f32.xlu0 %v2593
        %v2595 = vpop.xlane.xlu0 %2594
        %v2596 = vadd.f32 %v2537, %v2539
        %2597 = vadd.xlane.f32.xlu0 %v2596
        %v2598 = vpop.xlane.xlu0 %2597
        %v2599 = vadd.f32 %v2541, %v2543
        %2600 = vadd.xlane.f32.xlu0 %v2599
        %v2601 = vpop.xlane.xlu0 %2600
        %v2602 = vadd.f32 %v2545, %v2547
        %2603 = vadd.xlane.f32.xlu0 %v2602
        %v2604 = vpop.xlane.xlu0 %2603
        %v2605 = vadd.f32 %v2549, %v2551
        %2606 = vadd.xlane.f32.xlu0 %v2605
        %v2607 = vpop.xlane.xlu0 %2606
        %v2608 = vadd.f32 %v2553, %v2555
        %2609 = vadd.xlane.f32.xlu0 %v2608
        %v2610 = vpop.xlane.xlu0 %2609
        %v2611 = vadd.f32 %v2557, %v2559
        %2612 = vadd.xlane.f32.xlu0 %v2611
        %v2613 = vpop.xlane.xlu0 %2612
        %v2614 = vadd.f32 %v2561, %v2563
        %2615 = vadd.xlane.f32.xlu0 %v2614
        %v2616 = vpop.xlane.xlu0 %2615
        %v2617 = vadd.f32 %v2565, %v2567
        %2618 = vadd.xlane.f32.xlu0 %v2617
        %v2619 = vpop.xlane.xlu0 %2618
        %v2620 = vadd.f32 %v2569, %v2571
        %2621 = vadd.xlane.f32.xlu0 %v2620
        %v2622 = vpop.xlane.xlu0 %2621
        %v2623 = vadd.f32 %v2573, %v2575
        %2624 = vadd.xlane.f32.xlu0 %v2623
        %v2625 = vpop.xlane.xlu0 %2624
        %v2626 = vadd.f32 %v2577, %v2579
        %2627 = vadd.xlane.f32.xlu0 %v2626
        %v2628 = vpop.xlane.xlu0 %2627
        %v2629 = vadd.f32 %v2581, %v2583
        %2630 = vadd.xlane.f32.xlu0 %v2629
        %v2631 = vpop.xlane.xlu0 %2630
        %v2632 = vrcp.pop %v2586
        %v2633 = vrcp.pop %v2589
        %v2634 = vrcp.pop %v2592
        %v2635 = vrcp.pop %v2595
        %v2636 = vrcp.pop %v2598
        %v2637 = vrcp.pop %v2601
        %v2638 = vrcp.pop %v2604
        %v2639 = vrcp.pop %v2607
        %v2640 = vrcp.pop %v2610
        %v2641 = vrcp.pop %v2613
        %v2642 = vrcp.pop %v2616
        %v2643 = vrcp.pop %v2619
        %v2644 = vrcp.pop %v2622
        %v2645 = vrcp.pop %v2625
        %v2646 = vrcp.pop %v2628
        %v2647 = vrcp.pop %v2631
        %v2648 = vmul.f32 %v2521, %v2632
        %v2649 = vmul.f32 %v2523, %v2632
        %v2650 = vmul.f32 %v2525, %v2633
        %v2651 = vmul.f32 %v2527, %v2633
        %v2652 = vmul.f32 %v2529, %v2634
        %v2653 = vmul.f32 %v2531, %v2634
        %v2654 = vmul.f32 %v2533, %v2635
        %v2655 = vmul.f32 %v2535, %v2635
        %v2656 = vmul.f32 %v2537, %v2636
        %v2657 = vmul.f32 %v2539, %v2636
        %v2658 = vmul.f32 %v2541, %v2637
        %v2659 = vmul.f32 %v2543, %v2637
        %v2660 = vmul.f32 %v2545, %v2638
        %v2661 = vmul.f32 %v2547, %v2638
        %v2662 = vmul.f32 %v2549, %v2639
        %v2663 = vmul.f32 %v2551, %v2639
        %v2664 = vmul.f32 %v2553, %v2640
        %v2665 = vmul.f32 %v2555, %v2640
        %v2666 = vmul.f32 %v2557, %v2641
        %v2667 = vmul.f32 %v2559, %v2641
        %v2668 = vmul.f32 %v2561, %v2642
        %v2669 = vmul.f32 %v2563, %v2642
        %v2670 = vmul.f32 %v2565, %v2643
        %v2671 = vmul.f32 %v2567, %v2643
        %v2672 = vmul.f32 %v2569, %v2644
        %v2673 = vmul.f32 %v2571, %v2644
        %v2674 = vmul.f32 %v2573, %v2645
        %v2675 = vmul.f32 %v2575, %v2645
        %v2676 = vmul.f32 %v2577, %v2646
        %v2677 = vmul.f32 %v2579, %v2646
        %v2678 = vmul.f32 %v2581, %v2647
        %v2679 = vmul.f32 %v2583, %v2647
        %v2680 = vld [vmem:[#allocation3] sm:$0xff]
        %v2681 = vld [vmem:[#allocation3 + $0x8] sm:$0xff]
        %v2682 = vld [vmem:[#allocation3 + $0x10] sm:$0xff]
        %v2683 = vld [vmem:[#allocation3 + $0x18] sm:$0xff]
        %v2684 = vld [vmem:[#allocation3 + $0x20] sm:$0xff]
        %v2685 = vld [vmem:[#allocation3 + $0x28] sm:$0xff]
        %v2686 = vld [vmem:[#allocation3 + $0x30] sm:$0xff]
        %v2687 = vld [vmem:[#allocation3 + $0x38] sm:$0xff]
        %2688 = vmatprep.subr.mxu0 %v2649
        %2689 = vmatpush1.xpose.msra.mxu0 %v2648
        %2690 = vmatprep.subr.mxu0 %v2651
        %2691 = vmatpush1.xpose.msra.mxu0 %v2650
        %2692 = vmatprep.subr.mxu0 %v2653
        %2693 = vmatpush1.xpose.msra.mxu0 %v2652
        %2694 = vmatprep.subr.mxu0 %v2655
        %2695 = vmatpush1.xpose.msra.mxu0 %v2654
        %2696 = vmatprep.subr.mxu0 %v2657
        %2697 = vmatpush1.xpose.msra.mxu0 %v2656
        %2698 = vmatprep.subr.mxu0 %v2659
        %2699 = vmatpush1.xpose.msra.mxu0 %v2658
        %2700 = vmatprep.subr.mxu0 %v2661
        %2701 = vmatpush1.xpose.msra.mxu0 %v2660
        %2702 = vmatprep.subr.mxu0 %v2663
        %2703 = vmatpush1.xpose.msra.mxu0 %v2662
        %2704 = vmatprep.subr.mxu0 %v2665
        %2705 = vmatpush1.xpose.msra.mxu0 %v2664
        %2706 = vmatprep.subr.mxu0 %v2667
        %2707 = vmatpush1.xpose.msra.mxu0 %v2666
        %2708 = vmatprep.subr.mxu0 %v2669
        %2709 = vmatpush1.xpose.msra.mxu0 %v2668
        %2710 = vmatprep.subr.mxu0 %v2671
        %2711 = vmatpush1.xpose.msra.mxu0 %v2670
        %2712 = vmatprep.subr.mxu0 %v2673
        %2713 = vmatpush1.xpose.msra.mxu0 %v2672
        %2714 = vmatprep.subr.mxu0 %v2675
        %2715 = vmatpush1.xpose.msra.mxu0 %v2674
        %2716 = vmatprep.subr.mxu0 %v2677
        %2717 = vmatpush1.xpose.msra.mxu0 %v2676
        %2718 = vmatprep.subr.mxu0 %v2679
        %2719 = vmatpush1.xpose.msra.mxu0 %v2678
        %2720 = vmatprep.subr.mxu0 0.0
        %2721 = vmatpush1.xpose.msra.mxu0 0.0
        %2722 = vmatprep.subr.mxu0 0.0
        %2723 = vmatpush1.xpose.msra.mxu0 0.0
        %2724 = vmatprep.subr.mxu0 0.0
        %2725 = vmatpush1.xpose.msra.mxu0 0.0
        %2726 = vmatprep.subr.mxu0 0.0
        %2727 = vmatpush1.xpose.msra.mxu0 0.0
        %2728 = vmatprep.subr.mxu0 0.0
        %2729 = vmatpush1.xpose.msra.mxu0 0.0
        %2730 = vmatprep.subr.mxu0 0.0
        %2731 = vmatpush1.xpose.msra.mxu0 0.0
        %2732 = vmatprep.subr.mxu0 0.0
        %2733 = vmatpush1.xpose.msra.mxu0 0.0
        %2734 = vmatprep.subr.mxu0 0.0
        %2735 = vmatpush1.xpose.msra.mxu0 0.0
        %2736 = vmatprep.subr.mxu0 0.0
        %2737 = vmatpush1.xpose.msra.mxu0 0.0
        %2738 = vmatprep.subr.mxu0 0.0
        %2739 = vmatpush1.xpose.msra.mxu0 0.0
        %2740 = vmatprep.subr.mxu0 0.0
        %2741 = vmatpush1.xpose.msra.mxu0 0.0
        %2742 = vmatprep.subr.mxu0 0.0
        %2743 = vmatpush1.xpose.msra.mxu0 0.0
        %2744 = vmatprep.subr.mxu0 0.0
        %2745 = vmatpush1.xpose.msra.mxu0 0.0
        %2746 = vmatprep.subr.mxu0 0.0
        %2747 = vmatpush1.xpose.msra.mxu0 0.0
        %2748 = vmatprep.subr.mxu0 0.0
        %2749 = vmatpush1.xpose.msra.mxu0 0.0
        %2750 = vmatprep.subr.mxu0 0.0
        %2751 = vmatpush1.xpose.msra.mxu0 0.0
        %2752 = vmatprep.mubr.f32.mxu0 %v2681
        %2753 = vmatmul.mubr.f32.gmra.mrb[0].mxu0 %v2680
        %v2754 = vpop.f32.mrb[0].mxu0
        %v2755 = vadd.f32 0.0, %v2754
        %v2756 = vpop.f32.mrb[0].mxu0
        %2757 = vmatprep.mubr.f32.mxu0 %v2683
        %2758 = vmatmul.mubr.f32.gmra.mrb[0].mxu0 %v2682
        %v2759 = vpop.f32.mrb[0].mxu0
        %v2760 = vadd.f32 0.0, %v2759
        %v2761 = vpop.f32.mrb[0].mxu0
        %2762 = vmatprep.mubr.f32.mxu0 %v2685
        %2763 = vmatmul.mubr.f32.gmra.mrb[0].mxu0 %v2684
        %v2764 = vpop.f32.mrb[0].mxu0
        %v2765 = vadd.f32 0.0, %v2764
        %v2766 = vpop.f32.mrb[0].mxu0
        %2767 = vmatprep.mubr.f32.mxu0 %v2687
        %2768 = vmatmul.mubr.f32.gmra.mrb[0].mxu0 %v2686
        %v2769 = vpop.f32.mrb[0].mxu0
        %v2770 = vadd.f32 0.0, %v2769
        %v2771 = vpop.f32.mrb[0].mxu0
        %2772 = vdwg.mxu0
        %2773 = vst [vmem:[#allocation4] sm:$0xff] %v2755
        %2774 = vst [vmem:[#allocation4 + $0x8] sm:$0xff] %v2760
        %2775 = vst [vmem:[#allocation4 + $0x10] sm:$0xff] %v2765
        %2776 = vst [vmem:[#allocation4 + $0x18] sm:$0xff] %v2770
        %2777 = vxpose.xlu0.b32.start [1/16] %v2178, 128
        %2778 = vxpose.xlu0.b32.cont [2/16] %v2179, 128
        %2779 = vxpose.xlu0.b32.cont [3/16] %v2180, 128
        %2780 = vxpose.xlu0.b32.cont [4/16] %v2181, 128
        %2781 = vxpose.xlu0.b32.cont [5/16] 0.0, 128
        %2782 = vxpose.xlu0.b32.cont [6/16] 0.0, 128
        %2783 = vxpose.xlu0.b32.cont [7/16] 0.0, 128
        %2784 = vxpose.xlu0.b32.cont [8/16] 0.0, 128
        %2785 = vxpose.xlu0.b32.cont [9/16] 0.0, 128
        %2786 = vxpose.xlu0.b32.cont [10/16] 0.0, 128
        %2787 = vxpose.xlu0.b32.cont [11/16] 0.0, 128
        %2788 = vxpose.xlu0.b32.cont [12/16] 0.0, 128
        %2789 = vxpose.xlu0.b32.cont [13/16] 0.0, 128
        %2790 = vxpose.xlu0.b32.cont [14/16] 0.0, 128
        %2791 = vxpose.xlu0.b32.cont [15/16] 0.0, 128
        %2792 = vxpose.xlu0.b32.end [16/16] 0.0, 128
        %v2793 = vpop.trf.xlu0
        %v2794 = vpop.trf.xlu0
        %v2795 = vpop.trf.xlu0
        %v2796 = vpop.trf.xlu0
        %v2797 = vpop.trf.xlu0
        %v2798 = vpop.trf.xlu0
        %v2799 = vpop.trf.xlu0
        %v2800 = vpop.trf.xlu0
        %v2801 = vpop.trf.xlu0
        %v2802 = vpop.trf.xlu0
        %v2803 = vpop.trf.xlu0
        %v2804 = vpop.trf.xlu0
        %v2805 = vpop.trf.xlu0
        %v2806 = vpop.trf.xlu0
        %v2807 = vpop.trf.xlu0
        %v2808 = vpop.trf.xlu0
        %v2809 = vld [vmem:[#allocation2 + $0x40] sm:$0xff]
        %v2810 = vld [vmem:[#allocation2 + $0x48] sm:$0xff]
        %v2811 = vld [vmem:[#allocation2 + $0x50] sm:$0xff]
        %v2812 = vld [vmem:[#allocation2 + $0x58] sm:$0xff]
        %v2813 = vld [vmem:[#allocation2 + $0x60] sm:$0xff]
        %v2814 = vld [vmem:[#allocation2 + $0x68] sm:$0xff]
        %v2815 = vld [vmem:[#allocation2 + $0x70] sm:$0xff]
        %v2816 = vld [vmem:[#allocation2 + $0x78] sm:$0xff]
        %v2818 = vsel %vm2230, %v2793, 0
        %v2821 = vsel %vm2230, %v2794, 0
        %v2824 = vsel %vm2230, %v2795, 0
        %v2827 = vsel %vm2230, %v2796, 0
        %v2830 = vsel %vm2230, %v2797, 0
        %v2833 = vsel %vm2230, %v2798, 0
        %v2836 = vsel %vm2230, %v2799, 0
        %v2839 = vsel %vm2230, %v2800, 0
        %v2842 = vsel %vm2230, %v2801, 0
        %v2845 = vsel %vm2230, %v2802, 0
        %v2848 = vsel %vm2230, %v2803, 0
        %v2851 = vsel %vm2230, %v2804, 0
        %v2854 = vsel %vm2230, %v2805, 0
        %v2857 = vsel %vm2230, %v2806, 0
        %v2860 = vsel %vm2230, %v2807, 0
        %v2863 = vsel %vm2230, %v2808, 0
        %2865 = vmatprep.subr.mxu0 %v2810
        %2866 = vmatpush1.msra.mxu0 %v2809
        %2867 = vmatprep.subr.mxu0 %v2812
        %2868 = vmatpush1.msra.mxu0 %v2811
        %2869 = vmatprep.subr.mxu0 %v2814
        %2870 = vmatpush1.msra.mxu0 %v2813
        %2871 = vmatprep.subr.mxu0 %v2816
        %2872 = vmatpush1.msra.mxu0 %v2815
        %2873 = vmatprep.subr.mxu0 0.0
        %2874 = vmatpush1.msra.mxu0 0.0
        %2875 = vmatprep.subr.mxu0 0.0
        %2876 = vmatpush1.msra.mxu0 0.0
        %2877 = vmatprep.subr.mxu0 0.0
        %2878 = vmatpush1.msra.mxu0 0.0
        %2879 = vmatprep.subr.mxu0 0.0
        %2880 = vmatpush1.msra.mxu0 0.0
        %2881 = vmatprep.subr.mxu0 0.0
        %2882 = vmatpush1.msra.mxu0 0.0
        %2883 = vmatprep.subr.mxu0 0.0
        %2884 = vmatpush1.msra.mxu0 0.0
        %2885 = vmatprep.subr.mxu0 0.0
        %2886 = vmatpush1.msra.mxu0 0.0
        %2887 = vmatprep.subr.mxu0 0.0
        %2888 = vmatpush1.msra.mxu0 0.0
        %2889 = vmatprep.subr.mxu0 0.0
        %2890 = vmatpush1.msra.mxu0 0.0
        %2891 = vmatprep.subr.mxu0 0.0
        %2892 = vmatpush1.msra.mxu0 0.0
        %2893 = vmatprep.subr.mxu0 0.0
        %2894 = vmatpush1.msra.mxu0 0.0
        %2895 = vmatprep.subr.mxu0 0.0
        %2896 = vmatpush1.msra.mxu0 0.0
        %2897 = vmatprep.subr.mxu0 0.0
        %2898 = vmatpush1.msra.mxu0 0.0
        %2899 = vmatprep.subr.mxu0 0.0
        %2900 = vmatpush1.msra.mxu0 0.0
        %2901 = vmatprep.subr.mxu0 0.0
        %2902 = vmatpush1.msra.mxu0 0.0
        %2903 = vmatprep.subr.mxu0 0.0
        %2904 = vmatpush1.msra.mxu0 0.0
        %2905 = vmatprep.subr.mxu0 0.0
        %2906 = vmatpush1.msra.mxu0 0.0
        %2907 = vmatprep.subr.mxu0 0.0
        %2908 = vmatpush1.msra.mxu0 0.0
        %2909 = vmatprep.subr.mxu0 0.0
        %2910 = vmatpush1.msra.mxu0 0.0
        %2911 = vmatprep.subr.mxu0 0.0
        %2912 = vmatpush1.msra.mxu0 0.0
        %2913 = vmatprep.subr.mxu0 0.0
        %2914 = vmatpush1.msra.mxu0 0.0
        %2915 = vmatprep.subr.mxu0 0.0
        %2916 = vmatpush1.msra.mxu0 0.0
        %2917 = vmatprep.subr.mxu0 0.0
        %2918 = vmatpush1.msra.mxu0 0.0
        %2919 = vmatprep.subr.mxu0 0.0
        %2920 = vmatpush1.msra.mxu0 0.0
        %2921 = vmatprep.subr.mxu0 0.0
        %2922 = vmatpush1.msra.mxu0 0.0
        %2923 = vmatprep.subr.mxu0 0.0
        %2924 = vmatpush1.msra.mxu0 0.0
        %2925 = vmatprep.subr.mxu0 0.0
        %2926 = vmatpush1.msra.mxu0 0.0
        %2927 = vmatprep.subr.mxu0 0.0
        %2928 = vmatpush1.msra.mxu0 0.0
        %2929 = vmatprep.mubr.f32.mxu0 0.0
        %2930 = vmatmul.mubr.f32.gmra.mrb[0].mxu0 %v2818
        %v2931 = vpop.f32.mrb[0].mxu0
        %v2932 = vadd.f32 0.0, %v2931
        %v2933 = vpop.f32.mrb[0].mxu0
        %v2934 = vadd.f32 0.0, %v2933
        %2935 = vmatprep.mubr.f32.mxu0 0.0
        %2936 = vmatmul.mubr.f32.gmra.mrb[0].mxu0 %v2821
        %v2937 = vpop.f32.mrb[0].mxu0
        %v2938 = vadd.f32 0.0, %v2937
        %v2939 = vpop.f32.mrb[0].mxu0
        %v2940 = vadd.f32 0.0, %v2939
        %2941 = vmatprep.mubr.f32.mxu0 0.0
        %2942 = vmatmul.mubr.f32.gmra.mrb[0].mxu0 %v2824
        %v2943 = vpop.f32.mrb[0].mxu0
        %v2944 = vadd.f32 0.0, %v2943
        %v2945 = vpop.f32.mrb[0].mxu0
        %v2946 = vadd.f32 0.0, %v2945
        %2947 = vmatprep.mubr.f32.mxu0 0.0
        %2948 = vmatmul.mubr.f32.gmra.mrb[0].mxu0 %v2827
        %v2949 = vpop.f32.mrb[0].mxu0
        %v2950 = vadd.f32 0.0, %v2949
        %v2951 = vpop.f32.mrb[0].mxu0
        %v2952 = vadd.f32 0.0, %v2951
        %2953 = vmatprep.mubr.f32.mxu0 0.0
        %2954 = vmatmul.mubr.f32.gmra.mrb[0].mxu0 %v2830
        %v2955 = vpop.f32.mrb[0].mxu0
        %v2956 = vadd.f32 0.0, %v2955
        %v2957 = vpop.f32.mrb[0].mxu0
        %v2958 = vadd.f32 0.0, %v2957
        %2959 = vmatprep.mubr.f32.mxu0 0.0
        %2960 = vmatmul.mubr.f32.gmra.mrb[0].mxu0 %v2833
        %v2961 = vpop.f32.mrb[0].mxu0
        %v2962 = vadd.f32 0.0, %v2961
        %v2963 = vpop.f32.mrb[0].mxu0
        %v2964 = vadd.f32 0.0, %v2963
        %2965 = vmatprep.mubr.f32.mxu0 0.0
        %2966 = vmatmul.mubr.f32.gmra.mrb[0].mxu0 %v2836
        %v2967 = vpop.f32.mrb[0].mxu0
        %v2968 = vadd.f32 0.0, %v2967
        %v2969 = vpop.f32.mrb[0].mxu0
        %v2970 = vadd.f32 0.0, %v2969
        %2971 = vmatprep.mubr.f32.mxu0 0.0
        %2972 = vmatmul.mubr.f32.gmra.mrb[0].mxu0 %v2839
        %v2973 = vpop.f32.mrb[0].mxu0
        %v2974 = vadd.f32 0.0, %v2973
        %v2975 = vpop.f32.mrb[0].mxu0
        %v2976 = vadd.f32 0.0, %v2975
        %2977 = vmatprep.mubr.f32.mxu0 0.0
        %2978 = vmatmul.mubr.f32.gmra.mrb[0].mxu0 %v2842
        %v2979 = vpop.f32.mrb[0].mxu0
        %v2980 = vadd.f32 0.0, %v2979
        %v2981 = vpop.f32.mrb[0].mxu0
        %v2982 = vadd.f32 0.0, %v2981
        %2983 = vmatprep.mubr.f32.mxu0 0.0
        %2984 = vmatmul.mubr.f32.gmra.mrb[0].mxu0 %v2845
        %v2985 = vpop.f32.mrb[0].mxu0
        %v2986 = vadd.f32 0.0, %v2985
        %v2987 = vpop.f32.mrb[0].mxu0
        %v2988 = vadd.f32 0.0, %v2987
        %2989 = vmatprep.mubr.f32.mxu0 0.0
        %2990 = vmatmul.mubr.f32.gmra.mrb[0].mxu0 %v2848
        %v2991 = vpop.f32.mrb[0].mxu0
        %v2992 = vadd.f32 0.0, %v2991
        %v2993 = vpop.f32.mrb[0].mxu0
        %v2994 = vadd.f32 0.0, %v2993
        %2995 = vmatprep.mubr.f32.mxu0 0.0
        %2996 = vmatmul.mubr.f32.gmra.mrb[0].mxu0 %v2851
        %v2997 = vpop.f32.mrb[0].mxu0
        %v2998 = vadd.f32 0.0, %v2997
        %v2999 = vpop.f32.mrb[0].mxu0
        %v3000 = vadd.f32 0.0, %v2999
        %3001 = vmatprep.mubr.f32.mxu0 0.0
        %3002 = vmatmul.mubr.f32.gmra.mrb[0].mxu0 %v2854
        %v3003 = vpop.f32.mrb[0].mxu0
        %v3004 = vadd.f32 0.0, %v3003
        %v3005 = vpop.f32.mrb[0].mxu0
        %v3006 = vadd.f32 0.0, %v3005
        %3007 = vmatprep.mubr.f32.mxu0 0.0
        %3008 = vmatmul.mubr.f32.gmra.mrb[0].mxu0 %v2857
        %v3009 = vpop.f32.mrb[0].mxu0
        %v3010 = vadd.f32 0.0, %v3009
        %v3011 = vpop.f32.mrb[0].mxu0
        %v3012 = vadd.f32 0.0, %v3011
        %3013 = vmatprep.mubr.f32.mxu0 0.0
        %3014 = vmatmul.mubr.f32.gmra.mrb[0].mxu0 %v2860
        %v3015 = vpop.f32.mrb[0].mxu0
        %v3016 = vadd.f32 0.0, %v3015
        %v3017 = vpop.f32.mrb[0].mxu0
        %v3018 = vadd.f32 0.0, %v3017
        %3019 = vmatprep.mubr.f32.mxu0 0.0
        %3020 = vmatmul.mubr.f32.gmra.mrb[0].mxu0 %v2863
        %v3021 = vpop.f32.mrb[0].mxu0
        %v3022 = vadd.f32 0.0, %v3021
        %v3023 = vpop.f32.mrb[0].mxu0
        %v3024 = vadd.f32 0.0, %v3023
        %3025 = vdwg.mxu0
        %v3026 = vmax.f32 %v2932, %v2934
        %3027 = vmax.xlane.f32.xlu0 %v3026
        %v3028 = vpop.xlane.xlu0 %3027
        %v3029 = vmax.f32 %v2938, %v2940
        %3030 = vmax.xlane.f32.xlu0 %v3029
        %v3031 = vpop.xlane.xlu0 %3030
        %v3032 = vmax.f32 %v2944, %v2946
        %3033 = vmax.xlane.f32.xlu0 %v3032
        %v3034 = vpop.xlane.xlu0 %3033
        %v3035 = vmax.f32 %v2950, %v2952
        %3036 = vmax.xlane.f32.xlu0 %v3035
        %v3037 = vpop.xlane.xlu0 %3036
        %v3038 = vmax.f32 %v2956, %v2958
        %3039 = vmax.xlane.f32.xlu0 %v3038
        %v3040 = vpop.xlane.xlu0 %3039
        %v3041 = vmax.f32 %v2962, %v2964
        %3042 = vmax.xlane.f32.xlu0 %v3041
        %v3043 = vpop.xlane.xlu0 %3042
        %v3044 = vmax.f32 %v2968, %v2970
        %3045 = vmax.xlane.f32.xlu0 %v3044
        %v3046 = vpop.xlane.xlu0 %3045
        %v3047 = vmax.f32 %v2974, %v2976
        %3048 = vmax.xlane.f32.xlu0 %v3047
        %v3049 = vpop.xlane.xlu0 %3048
        %v3050 = vmax.f32 %v2980, %v2982
        %3051 = vmax.xlane.f32.xlu0 %v3050
        %v3052 = vpop.xlane.xlu0 %3051
        %v3053 = vmax.f32 %v2986, %v2988
        %3054 = vmax.xlane.f32.xlu0 %v3053
        %v3055 = vpop.xlane.xlu0 %3054
        %v3056 = vmax.f32 %v2992, %v2994
        %3057 = vmax.xlane.f32.xlu0 %v3056
        %v3058 = vpop.xlane.xlu0 %3057
        %v3059 = vmax.f32 %v2998, %v3000
        %3060 = vmax.xlane.f32.xlu0 %v3059
        %v3061 = vpop.xlane.xlu0 %3060
        %v3062 = vmax.f32 %v3004, %v3006
        %3063 = vmax.xlane.f32.xlu0 %v3062
        %v3064 = vpop.xlane.xlu0 %3063
        %v3065 = vmax.f32 %v3010, %v3012
        %3066 = vmax.xlane.f32.xlu0 %v3065
        %v3067 = vpop.xlane.xlu0 %3066
        %v3068 = vmax.f32 %v3016, %v3018
        %3069 = vmax.xlane.f32.xlu0 %v3068
        %v3070 = vpop.xlane.xlu0 %3069
        %v3071 = vmax.f32 %v3022, %v3024
        %3072 = vmax.xlane.f32.xlu0 %v3071
        %v3073 = vpop.xlane.xlu0 %3072
        %v3074 = vsub.f32 %v2932, %v3028
        %v3075 = vsub.f32 %v2934, %v3028
        %v3076 = vsub.f32 %v2938, %v3031
        %v3077 = vsub.f32 %v2940, %v3031
        %v3078 = vsub.f32 %v2944, %v3034
        %v3079 = vsub.f32 %v2946, %v3034
        %v3080 = vsub.f32 %v2950, %v3037
        %v3081 = vsub.f32 %v2952, %v3037
        %v3082 = vsub.f32 %v2956, %v3040
        %v3083 = vsub.f32 %v2958, %v3040
        %v3084 = vsub.f32 %v2962, %v3043
        %v3085 = vsub.f32 %v2964, %v3043
        %v3086 = vsub.f32 %v2968, %v3046
        %v3087 = vsub.f32 %v2970, %v3046
        %v3088 = vsub.f32 %v2974, %v3049
        %v3089 = vsub.f32 %v2976, %v3049
        %v3090 = vsub.f32 %v2980, %v3052
        %v3091 = vsub.f32 %v2982, %v3052
        %v3092 = vsub.f32 %v2986, %v3055
        %v3093 = vsub.f32 %v2988, %v3055
        %v3094 = vsub.f32 %v2992, %v3058
        %v3095 = vsub.f32 %v2994, %v3058
        %v3096 = vsub.f32 %v2998, %v3061
        %v3097 = vsub.f32 %v3000, %v3061
        %v3098 = vsub.f32 %v3004, %v3064
        %v3099 = vsub.f32 %v3006, %v3064
        %v3100 = vsub.f32 %v3010, %v3067
        %v3101 = vsub.f32 %v3012, %v3067
        %v3102 = vsub.f32 %v3016, %v3070
        %v3103 = vsub.f32 %v3018, %v3070
        %v3104 = vsub.f32 %v3022, %v3073
        %v3105 = vsub.f32 %v3024, %v3073
        %v3106 = vmul.f32 %v3074, 1.442695
        %v3107 = vpow.pop %v3106
        %v3108 = vmul.f32 %v3075, 1.442695
        %v3109 = vpow.pop %v3108
        %v3110 = vmul.f32 %v3076, 1.442695
        %v3111 = vpow.pop %v3110
        %v3112 = vmul.f32 %v3077, 1.442695
        %v3113 = vpow.pop %v3112
        %v3114 = vmul.f32 %v3078, 1.442695
        %v3115 = vpow.pop %v3114
        %v3116 = vmul.f32 %v3079, 1.442695
        %v3117 = vpow.pop %v3116
        %v3118 = vmul.f32 %v3080, 1.442695
        %v3119 = vpow.pop %v3118
        %v3120 = vmul.f32 %v3081, 1.442695
        %v3121 = vpow.pop %v3120
        %v3122 = vmul.f32 %v3082, 1.442695
        %v3123 = vpow.pop %v3122
        %v3124 = vmul.f32 %v3083, 1.442695
        %v3125 = vpow.pop %v3124
        %v3126 = vmul.f32 %v3084, 1.442695
        %v3127 = vpow.pop %v3126
        %v3128 = vmul.f32 %v3085, 1.442695
        %v3129 = vpow.pop %v3128
        %v3130 = vmul.f32 %v3086, 1.442695
        %v3131 = vpow.pop %v3130
        %v3132 = vmul.f32 %v3087, 1.442695
        %v3133 = vpow.pop %v3132
        %v3134 = vmul.f32 %v3088, 1.442695
        %v3135 = vpow.pop %v3134
        %v3136 = vmul.f32 %v3089, 1.442695
        %v3137 = vpow.pop %v3136
        %v3138 = vmul.f32 %v3090, 1.442695
        %v3139 = vpow.pop %v3138
        %v3140 = vmul.f32 %v3091, 1.442695
        %v3141 = vpow.pop %v3140
        %v3142 = vmul.f32 %v3092, 1.442695
        %v3143 = vpow.pop %v3142
        %v3144 = vmul.f32 %v3093, 1.442695
        %v3145 = vpow.pop %v3144
        %v3146 = vmul.f32 %v3094, 1.442695
        %v3147 = vpow.pop %v3146
        %v3148 = vmul.f32 %v3095, 1.442695
        %v3149 = vpow.pop %v3148
        %v3150 = vmul.f32 %v3096, 1.442695
        %v3151 = vpow.pop %v3150
        %v3152 = vmul.f32 %v3097, 1.442695
        %v3153 = vpow.pop %v3152
        %v3154 = vmul.f32 %v3098, 1.442695
        %v3155 = vpow.pop %v3154
        %v3156 = vmul.f32 %v3099, 1.442695
        %v3157 = vpow.pop %v3156
        %v3158 = vmul.f32 %v3100, 1.442695
        %v3159 = vpow.pop %v3158
        %v3160 = vmul.f32 %v3101, 1.442695
        %v3161 = vpow.pop %v3160
        %v3162 = vmul.f32 %v3102, 1.442695
        %v3163 = vpow.pop %v3162
        %v3164 = vmul.f32 %v3103, 1.442695
        %v3165 = vpow.pop %v3164
        %v3166 = vmul.f32 %v3104, 1.442695
        %v3167 = vpow.pop %v3166
        %v3168 = vmul.f32 %v3105, 1.442695
        %v3169 = vpow.pop %v3168
        %v3170 = vadd.f32 %v3107, %v3109
        %3171 = vadd.xlane.f32.xlu0 %v3170
        %v3172 = vpop.xlane.xlu0 %3171
        %v3173 = vadd.f32 %v3111, %v3113
        %3174 = vadd.xlane.f32.xlu0 %v3173
        %v3175 = vpop.xlane.xlu0 %3174
        %v3176 = vadd.f32 %v3115, %v3117
        %3177 = vadd.xlane.f32.xlu0 %v3176
        %v3178 = vpop.xlane.xlu0 %3177
        %v3179 = vadd.f32 %v3119, %v3121
        %3180 = vadd.xlane.f32.xlu0 %v3179
        %v3181 = vpop.xlane.xlu0 %3180
        %v3182 = vadd.f32 %v3123, %v3125
        %3183 = vadd.xlane.f32.xlu0 %v3182
        %v3184 = vpop.xlane.xlu0 %3183
        %v3185 = vadd.f32 %v3127, %v3129
        %3186 = vadd.xlane.f32.xlu0 %v3185
        %v3187 = vpop.xlane.xlu0 %3186
        %v3188 = vadd.f32 %v3131, %v3133
        %3189 = vadd.xlane.f32.xlu0 %v3188
        %v3190 = vpop.xlane.xlu0 %3189
        %v3191 = vadd.f32 %v3135, %v3137
        %3192 = vadd.xlane.f32.xlu0 %v3191
        %v3193 = vpop.xlane.xlu0 %3192
        %v3194 = vadd.f32 %v3139, %v3141
        %3195 = vadd.xlane.f32.xlu0 %v3194
        %v3196 = vpop.xlane.xlu0 %3195
        %v3197 = vadd.f32 %v3143, %v3145
        %3198 = vadd.xlane.f32.xlu0 %v3197
        %v3199 = vpop.xlane.xlu0 %3198
        %v3200 = vadd.f32 %v3147, %v3149
        %3201 = vadd.xlane.f32.xlu0 %v3200
        %v3202 = vpop.xlane.xlu0 %3201
        %v3203 = vadd.f32 %v3151, %v3153
        %3204 = vadd.xlane.f32.xlu0 %v3203
        %v3205 = vpop.xlane.xlu0 %3204
        %v3206 = vadd.f32 %v3155, %v3157
        %3207 = vadd.xlane.f32.xlu0 %v3206
        %v3208 = vpop.xlane.xlu0 %3207
        %v3209 = vadd.f32 %v3159, %v3161
        %3210 = vadd.xlane.f32.xlu0 %v3209
        %v3211 = vpop.xlane.xlu0 %3210
        %v3212 = vadd.f32 %v3163, %v3165
        %3213 = vadd.xlane.f32.xlu0 %v3212
        %v3214 = vpop.xlane.xlu0 %3213
        %v3215 = vadd.f32 %v3167, %v3169
        %3216 = vadd.xlane.f32.xlu0 %v3215
        %v3217 = vpop.xlane.xlu0 %3216
        %v3218 = vrcp.pop %v3172
        %v3219 = vrcp.pop %v3175
        %v3220 = vrcp.pop %v3178
        %v3221 = vrcp.pop %v3181
        %v3222 = vrcp.pop %v3184
        %v3223 = vrcp.pop %v3187
        %v3224 = vrcp.pop %v3190
        %v3225 = vrcp.pop %v3193
        %v3226 = vrcp.pop %v3196
        %v3227 = vrcp.pop %v3199
        %v3228 = vrcp.pop %v3202
        %v3229 = vrcp.pop %v3205
        %v3230 = vrcp.pop %v3208
        %v3231 = vrcp.pop %v3211
        %v3232 = vrcp.pop %v3214
        %v3233 = vrcp.pop %v3217
        %v3234 = vmul.f32 %v3107, %v3218
        %v3235 = vmul.f32 %v3109, %v3218
        %v3236 = vmul.f32 %v3111, %v3219
        %v3237 = vmul.f32 %v3113, %v3219
        %v3238 = vmul.f32 %v3115, %v3220
        %v3239 = vmul.f32 %v3117, %v3220
        %v3240 = vmul.f32 %v3119, %v3221
        %v3241 = vmul.f32 %v3121, %v3221
        %v3242 = vmul.f32 %v3123, %v3222
        %v3243 = vmul.f32 %v3125, %v3222
        %v3244 = vmul.f32 %v3127, %v3223
        %v3245 = vmul.f32 %v3129, %v3223
        %v3246 = vmul.f32 %v3131, %v3224
        %v3247 = vmul.f32 %v3133, %v3224
        %v3248 = vmul.f32 %v3135, %v3225
        %v3249 = vmul.f32 %v3137, %v3225
        %v3250 = vmul.f32 %v3139, %v3226
        %v3251 = vmul.f32 %v3141, %v3226
        %v3252 = vmul.f32 %v3143, %v3227
        %v3253 = vmul.f32 %v3145, %v3227
        %v3254 = vmul.f32 %v3147, %v3228
        %v3255 = vmul.f32 %v3149, %v3228
        %v3256 = vmul.f32 %v3151, %v3229
        %v3257 = vmul.f32 %v3153, %v3229
        %v3258 = vmul.f32 %v3155, %v3230
        %v3259 = vmul.f32 %v3157, %v3230
        %v3260 = vmul.f32 %v3159, %v3231
        %v3261 = vmul.f32 %v3161, %v3231
        %v3262 = vmul.f32 %v3163, %v3232
        %v3263 = vmul.f32 %v3165, %v3232
        %v3264 = vmul.f32 %v3167, %v3233
        %v3265 = vmul.f32 %v3169, %v3233
        %v3266 = vld [vmem:[#allocation3 + $0x40] sm:$0xff]
        %v3267 = vld [vmem:[#allocation3 + $0x48] sm:$0xff]
        %v3268 = vld [vmem:[#allocation3 + $0x50] sm:$0xff]
        %v3269 = vld [vmem:[#allocation3 + $0x58] sm:$0xff]
        %v3270 = vld [vmem:[#allocation3 + $0x60] sm:$0xff]
        %v3271 = vld [vmem:[#allocation3 + $0x68] sm:$0xff]
        %v3272 = vld [vmem:[#allocation3 + $0x70] sm:$0xff]
        %v3273 = vld [vmem:[#allocation3 + $0x78] sm:$0xff]
        %3274 = vmatprep.subr.mxu0 %v3235
        %3275 = vmatpush1.xpose.msra.mxu0 %v3234
        %3276 = vmatprep.subr.mxu0 %v3237
        %3277 = vmatpush1.xpose.msra.mxu0 %v3236
        %3278 = vmatprep.subr.mxu0 %v3239
        %3279 = vmatpush1.xpose.msra.mxu0 %v3238
        %3280 = vmatprep.subr.mxu0 %v3241
        %3281 = vmatpush1.xpose.msra.mxu0 %v3240
        %3282 = vmatprep.subr.mxu0 %v3243
        %3283 = vmatpush1.xpose.msra.mxu0 %v3242
        %3284 = vmatprep.subr.mxu0 %v3245
        %3285 = vmatpush1.xpose.msra.mxu0 %v3244
        %3286 = vmatprep.subr.mxu0 %v3247
        %3287 = vmatpush1.xpose.msra.mxu0 %v3246
        %3288 = vmatprep.subr.mxu0 %v3249
        %3289 = vmatpush1.xpose.msra.mxu0 %v3248
        %3290 = vmatprep.subr.mxu0 %v3251
        %3291 = vmatpush1.xpose.msra.mxu0 %v3250
        %3292 = vmatprep.subr.mxu0 %v3253
        %3293 = vmatpush1.xpose.msra.mxu0 %v3252
        %3294 = vmatprep.subr.mxu0 %v3255
        %3295 = vmatpush1.xpose.msra.mxu0 %v3254
        %3296 = vmatprep.subr.mxu0 %v3257
        %3297 = vmatpush1.xpose.msra.mxu0 %v3256
        %3298 = vmatprep.subr.mxu0 %v3259
        %3299 = vmatpush1.xpose.msra.mxu0 %v3258
        %3300 = vmatprep.subr.mxu0 %v3261
        %3301 = vmatpush1.xpose.msra.mxu0 %v3260
        %3302 = vmatprep.subr.mxu0 %v3263
        %3303 = vmatpush1.xpose.msra.mxu0 %v3262
        %3304 = vmatprep.subr.mxu0 %v3265
        %3305 = vmatpush1.xpose.msra.mxu0 %v3264
        %3306 = vmatprep.subr.mxu0 0.0
        %3307 = vmatpush1.xpose.msra.mxu0 0.0
        %3308 = vmatprep.subr.mxu0 0.0
        %3309 = vmatpush1.xpose.msra.mxu0 0.0
        %3310 = vmatprep.subr.mxu0 0.0
        %3311 = vmatpush1.xpose.msra.mxu0 0.0
        %3312 = vmatprep.subr.mxu0 0.0
        %3313 = vmatpush1.xpose.msra.mxu0 0.0
        %3314 = vmatprep.subr.mxu0 0.0
        %3315 = vmatpush1.xpose.msra.mxu0 0.0
        %3316 = vmatprep.subr.mxu0 0.0
        %3317 = vmatpush1.xpose.msra.mxu0 0.0
        %3318 = vmatprep.subr.mxu0 0.0
        %3319 = vmatpush1.xpose.msra.mxu0 0.0
        %3320 = vmatprep.subr.mxu0 0.0
        %3321 = vmatpush1.xpose.msra.mxu0 0.0
        %3322 = vmatprep.subr.mxu0 0.0
        %3323 = vmatpush1.xpose.msra.mxu0 0.0
        %3324 = vmatprep.subr.mxu0 0.0
        %3325 = vmatpush1.xpose.msra.mxu0 0.0
        %3326 = vmatprep.subr.mxu0 0.0
        %3327 = vmatpush1.xpose.msra.mxu0 0.0
        %3328 = vmatprep.subr.mxu0 0.0
        %3329 = vmatpush1.xpose.msra.mxu0 0.0
        %3330 = vmatprep.subr.mxu0 0.0
        %3331 = vmatpush1.xpose.msra.mxu0 0.0
        %3332 = vmatprep.subr.mxu0 0.0
        %3333 = vmatpush1.xpose.msra.mxu0 0.0
        %3334 = vmatprep.subr.mxu0 0.0
        %3335 = vmatpush1.xpose.msra.mxu0 0.0
        %3336 = vmatprep.subr.mxu0 0.0
        %3337 = vmatpush1.xpose.msra.mxu0 0.0
        %3338 = vmatprep.mubr.f32.mxu0 %v3267
        %3339 = vmatmul.mubr.f32.gmra.mrb[0].mxu0 %v3266
        %v3340 = vpop.f32.mrb[0].mxu0
        %v3341 = vadd.f32 0.0, %v3340
        %v3342 = vpop.f32.mrb[0].mxu0
        %3343 = vmatprep.mubr.f32.mxu0 %v3269
        %3344 = vmatmul.mubr.f32.gmra.mrb[0].mxu0 %v3268
        %v3345 = vpop.f32.mrb[0].mxu0
        %v3346 = vadd.f32 0.0, %v3345
        %v3347 = vpop.f32.mrb[0].mxu0
        %3348 = vmatprep.mubr.f32.mxu0 %v3271
        %3349 = vmatmul.mubr.f32.gmra.mrb[0].mxu0 %v3270
        %v3350 = vpop.f32.mrb[0].mxu0
        %v3351 = vadd.f32 0.0, %v3350
        %v3352 = vpop.f32.mrb[0].mxu0
        %3353 = vmatprep.mubr.f32.mxu0 %v3273
        %3354 = vmatmul.mubr.f32.gmra.mrb[0].mxu0 %v3272
        %v3355 = vpop.f32.mrb[0].mxu0
        %v3356 = vadd.f32 0.0, %v3355
        %v3357 = vpop.f32.mrb[0].mxu0
        %3358 = vdwg.mxu0
        %3359 = vst [vmem:[#allocation4 + $0x20] sm:$0xff] %v3341
        %3360 = vst [vmem:[#allocation4 + $0x28] sm:$0xff] %v3346
        %3361 = vst [vmem:[#allocation4 + $0x30] sm:$0xff] %v3351
        %3362 = vst [vmem:[#allocation4 + $0x38] sm:$0xff] %v3356
        %3363 = vxpose.xlu0.b32.start [1/16] %v2182, 128
        %3364 = vxpose.xlu0.b32.cont [2/16] %v2183, 128
        %3365 = vxpose.xlu0.b32.cont [3/16] %v2184, 128
        %3366 = vxpose.xlu0.b32.cont [4/16] %v2185, 128
        %3367 = vxpose.xlu0.b32.cont [5/16] 0.0, 128
        %3368 = vxpose.xlu0.b32.cont [6/16] 0.0, 128
        %3369 = vxpose.xlu0.b32.cont [7/16] 0.0, 128
        %3370 = vxpose.xlu0.b32.cont [8/16] 0.0, 128
        %3371 = vxpose.xlu0.b32.cont [9/16] 0.0, 128
        %3372 = vxpose.xlu0.b32.cont [10/16] 0.0, 128
        %3373 = vxpose.xlu0.b32.cont [11/16] 0.0, 128
        %3374 = vxpose.xlu0.b32.cont [12/16] 0.0, 128
        %3375 = vxpose.xlu0.b32.cont [13/16] 0.0, 128
        %3376 = vxpose.xlu0.b32.cont [14/16] 0.0, 128
        %3377 = vxpose.xlu0.b32.cont [15/16] 0.0, 128
        %3378 = vxpose.xlu0.b32.end [16/16] 0.0, 128
        %v3379 = vpop.trf.xlu0
        %v3380 = vpop.trf.xlu0
        %v3381 = vpop.trf.xlu0
        %v3382 = vpop.trf.xlu0
        %v3383 = vpop.trf.xlu0
        %v3384 = vpop.trf.xlu0
        %v3385 = vpop.trf.xlu0
        %v3386 = vpop.trf.xlu0
        %v3387 = vpop.trf.xlu0
        %v3388 = vpop.trf.xlu0
        %v3389 = vpop.trf.xlu0
        %v3390 = vpop.trf.xlu0
        %v3391 = vpop.trf.xlu0
        %v3392 = vpop.trf.xlu0
        %v3393 = vpop.trf.xlu0
        %v3394 = vpop.trf.xlu0
        %v3395 = vld [vmem:[#allocation2 + $0x80] sm:$0xff]
        %v3396 = vld [vmem:[#allocation2 + $0x88] sm:$0xff]
        %v3397 = vld [vmem:[#allocation2 + $0x90] sm:$0xff]
        %v3398 = vld [vmem:[#allocation2 + $0x98] sm:$0xff]
        %v3399 = vld [vmem:[#allocation2 + $0xa0] sm:$0xff]
        %v3400 = vld [vmem:[#allocation2 + $0xa8] sm:$0xff]
        %v3401 = vld [vmem:[#allocation2 + $0xb0] sm:$0xff]
        %v3402 = vld [vmem:[#allocation2 + $0xb8] sm:$0xff]
        %v3404 = vsel %vm2230, %v3379, 0
        %v3407 = vsel %vm2230, %v3380, 0
        %v3410 = vsel %vm2230, %v3381, 0
        %v3413 = vsel %vm2230, %v3382, 0
        %v3416 = vsel %vm2230, %v3383, 0
        %v3419 = vsel %vm2230, %v3384, 0
        %v3422 = vsel %vm2230, %v3385, 0
        %v3425 = vsel %vm2230, %v3386, 0
        %v3428 = vsel %vm2230, %v3387, 0
        %v3431 = vsel %vm2230, %v3388, 0
        %v3434 = vsel %vm2230, %v3389, 0
        %v3437 = vsel %vm2230, %v3390, 0
        %v3440 = vsel %vm2230, %v3391, 0
        %v3443 = vsel %vm2230, %v3392, 0
        %v3446 = vsel %vm2230, %v3393, 0
        %v3449 = vsel %vm2230, %v3394, 0
        %3451 = vmatprep.subr.mxu0 %v3396
        %3452 = vmatpush1.msra.mxu0 %v3395
        %3453 = vmatprep.subr.mxu0 %v3398
        %3454 = vmatpush1.msra.mxu0 %v3397
        %3455 = vmatprep.subr.mxu0 %v3400
        %3456 = vmatpush1.msra.mxu0 %v3399
        %3457 = vmatprep.subr.mxu0 %v3402
        %3458 = vmatpush1.msra.mxu0 %v3401
        %3459 = vmatprep.subr.mxu0 0.0
        %3460 = vmatpush1.msra.mxu0 0.0
        %3461 = vmatprep.subr.mxu0 0.0
        %3462 = vmatpush1.msra.mxu0 0.0
        %3463 = vmatprep.subr.mxu0 0.0
        %3464 = vmatpush1.msra.mxu0 0.0
        %3465 = vmatprep.subr.mxu0 0.0
        %3466 = vmatpush1.msra.mxu0 0.0
        %3467 = vmatprep.subr.mxu0 0.0
        %3468 = vmatpush1.msra.mxu0 0.0
        %3469 = vmatprep.subr.mxu0 0.0
        %3470 = vmatpush1.msra.mxu0 0.0
        %3471 = vmatprep.subr.mxu0 0.0
        %3472 = vmatpush1.msra.mxu0 0.0
        %3473 = vmatprep.subr.mxu0 0.0
        %3474 = vmatpush1.msra.mxu0 0.0
        %3475 = vmatprep.subr.mxu0 0.0
        %3476 = vmatpush1.msra.mxu0 0.0
        %3477 = vmatprep.subr.mxu0 0.0
        %3478 = vmatpush1.msra.mxu0 0.0
        %3479 = vmatprep.subr.mxu0 0.0
        %3480 = vmatpush1.msra.mxu0 0.0
        %3481 = vmatprep.subr.mxu0 0.0
        %3482 = vmatpush1.msra.mxu0 0.0
        %3483 = vmatprep.subr.mxu0 0.0
        %3484 = vmatpush1.msra.mxu0 0.0
        %3485 = vmatprep.subr.mxu0 0.0
        %3486 = vmatpush1.msra.mxu0 0.0
        %3487 = vmatprep.subr.mxu0 0.0
        %3488 = vmatpush1.msra.mxu0 0.0
        %3489 = vmatprep.subr.mxu0 0.0
        %3490 = vmatpush1.msra.mxu0 0.0
        %3491 = vmatprep.subr.mxu0 0.0
        %3492 = vmatpush1.msra.mxu0 0.0
        %3493 = vmatprep.subr.mxu0 0.0
        %3494 = vmatpush1.msra.mxu0 0.0
        %3495 = vmatprep.subr.mxu0 0.0
        %3496 = vmatpush1.msra.mxu0 0.0
        %3497 = vmatprep.subr.mxu0 0.0
        %3498 = vmatpush1.msra.mxu0 0.0
        %3499 = vmatprep.subr.mxu0 0.0
        %3500 = vmatpush1.msra.mxu0 0.0
        %3501 = vmatprep.subr.mxu0 0.0
        %3502 = vmatpush1.msra.mxu0 0.0
        %3503 = vmatprep.subr.mxu0 0.0
        %3504 = vmatpush1.msra.mxu0 0.0
        %3505 = vmatprep.subr.mxu0 0.0
        %3506 = vmatpush1.msra.mxu0 0.0
        %3507 = vmatprep.subr.mxu0 0.0
        %3508 = vmatpush1.msra.mxu0 0.0
        %3509 = vmatprep.subr.mxu0 0.0
        %3510 = vmatpush1.msra.mxu0 0.0
        %3511 = vmatprep.subr.mxu0 0.0
        %3512 = vmatpush1.msra.mxu0 0.0
        %3513 = vmatprep.subr.mxu0 0.0
        %3514 = vmatpush1.msra.mxu0 0.0
        %3515 = vmatprep.mubr.f32.mxu0 0.0
        %3516 = vmatmul.mubr.f32.gmra.mrb[0].mxu0 %v3404
        %v3517 = vpop.f32.mrb[0].mxu0
        %v3518 = vadd.f32 0.0, %v3517
        %v3519 = vpop.f32.mrb[0].mxu0
        %v3520 = vadd.f32 0.0, %v3519
        %3521 = vmatprep.mubr.f32.mxu0 0.0
        %3522 = vmatmul.mubr.f32.gmra.mrb[0].mxu0 %v3407
        %v3523 = vpop.f32.mrb[0].mxu0
        %v3524 = vadd.f32 0.0, %v3523
        %v3525 = vpop.f32.mrb[0].mxu0
        %v3526 = vadd.f32 0.0, %v3525
        %3527 = vmatprep.mubr.f32.mxu0 0.0
        %3528 = vmatmul.mubr.f32.gmra.mrb[0].mxu0 %v3410
        %v3529 = vpop.f32.mrb[0].mxu0
        %v3530 = vadd.f32 0.0, %v3529
        %v3531 = vpop.f32.mrb[0].mxu0
        %v3532 = vadd.f32 0.0, %v3531
        %3533 = vmatprep.mubr.f32.mxu0 0.0
        %3534 = vmatmul.mubr.f32.gmra.mrb[0].mxu0 %v3413
        %v3535 = vpop.f32.mrb[0].mxu0
        %v3536 = vadd.f32 0.0, %v3535
        %v3537 = vpop.f32.mrb[0].mxu0
        %v3538 = vadd.f32 0.0, %v3537
        %3539 = vmatprep.mubr.f32.mxu0 0.0
        %3540 = vmatmul.mubr.f32.gmra.mrb[0].mxu0 %v3416
        %v3541 = vpop.f32.mrb[0].mxu0
        %v3542 = vadd.f32 0.0, %v3541
        %v3543 = vpop.f32.mrb[0].mxu0
        %v3544 = vadd.f32 0.0, %v3543
        %3545 = vmatprep.mubr.f32.mxu0 0.0
        %3546 = vmatmul.mubr.f32.gmra.mrb[0].mxu0 %v3419
        %v3547 = vpop.f32.mrb[0].mxu0
        %v3548 = vadd.f32 0.0, %v3547
        %v3549 = vpop.f32.mrb[0].mxu0
        %v3550 = vadd.f32 0.0, %v3549
        %3551 = vmatprep.mubr.f32.mxu0 0.0
        %3552 = vmatmul.mubr.f32.gmra.mrb[0].mxu0 %v3422
        %v3553 = vpop.f32.mrb[0].mxu0
        %v3554 = vadd.f32 0.0, %v3553
        %v3555 = vpop.f32.mrb[0].mxu0
        %v3556 = vadd.f32 0.0, %v3555
        %3557 = vmatprep.mubr.f32.mxu0 0.0
        %3558 = vmatmul.mubr.f32.gmra.mrb[0].mxu0 %v3425
        %v3559 = vpop.f32.mrb[0].mxu0
        %v3560 = vadd.f32 0.0, %v3559
        %v3561 = vpop.f32.mrb[0].mxu0
        %v3562 = vadd.f32 0.0, %v3561
        %3563 = vmatprep.mubr.f32.mxu0 0.0
        %3564 = vmatmul.mubr.f32.gmra.mrb[0].mxu0 %v3428
        %v3565 = vpop.f32.mrb[0].mxu0
        %v3566 = vadd.f32 0.0, %v3565
        %v3567 = vpop.f32.mrb[0].mxu0
        %v3568 = vadd.f32 0.0, %v3567
        %3569 = vmatprep.mubr.f32.mxu0 0.0
        %3570 = vmatmul.mubr.f32.gmra.mrb[0].mxu0 %v3431
        %v3571 = vpop.f32.mrb[0].mxu0
        %v3572 = vadd.f32 0.0, %v3571
        %v3573 = vpop.f32.mrb[0].mxu0
        %v3574 = vadd.f32 0.0, %v3573
        %3575 = vmatprep.mubr.f32.mxu0 0.0
        %3576 = vmatmul.mubr.f32.gmra.mrb[0].mxu0 %v3434
        %v3577 = vpop.f32.mrb[0].mxu0
        %v3578 = vadd.f32 0.0, %v3577
        %v3579 = vpop.f32.mrb[0].mxu0
        %v3580 = vadd.f32 0.0, %v3579
        %3581 = vmatprep.mubr.f32.mxu0 0.0
        %3582 = vmatmul.mubr.f32.gmra.mrb[0].mxu0 %v3437
        %v3583 = vpop.f32.mrb[0].mxu0
        %v3584 = vadd.f32 0.0, %v3583
        %v3585 = vpop.f32.mrb[0].mxu0
        %v3586 = vadd.f32 0.0, %v3585
        %3587 = vmatprep.mubr.f32.mxu0 0.0
        %3588 = vmatmul.mubr.f32.gmra.mrb[0].mxu0 %v3440
        %v3589 = vpop.f32.mrb[0].mxu0
        %v3590 = vadd.f32 0.0, %v3589
        %v3591 = vpop.f32.mrb[0].mxu0
        %v3592 = vadd.f32 0.0, %v3591
        %3593 = vmatprep.mubr.f32.mxu0 0.0
        %3594 = vmatmul.mubr.f32.gmra.mrb[0].mxu0 %v3443
        %v3595 = vpop.f32.mrb[0].mxu0
        %v3596 = vadd.f32 0.0, %v3595
        %v3597 = vpop.f32.mrb[0].mxu0
        %v3598 = vadd.f32 0.0, %v3597
        %3599 = vmatprep.mubr.f32.mxu0 0.0
        %3600 = vmatmul.mubr.f32.gmra.mrb[0].mxu0 %v3446
        %v3601 = vpop.f32.mrb[0].mxu0
        %v3602 = vadd.f32 0.0, %v3601
        %v3603 = vpop.f32.mrb[0].mxu0
        %v3604 = vadd.f32 0.0, %v3603
        %3605 = vmatprep.mubr.f32.mxu0 0.0
        %3606 = vmatmul.mubr.f32.gmra.mrb[0].mxu0 %v3449
        %v3607 = vpop.f32.mrb[0].mxu0
        %v3608 = vadd.f32 0.0, %v3607
        %v3609 = vpop.f32.mrb[0].mxu0
        %v3610 = vadd.f32 0.0, %v3609
        %3611 = vdwg.mxu0
        %v3612 = vmax.f32 %v3518, %v3520
        %3613 = vmax.xlane.f32.xlu0 %v3612
        %v3614 = vpop.xlane.xlu0 %3613
        %v3615 = vmax.f32 %v3524, %v3526
        %3616 = vmax.xlane.f32.xlu0 %v3615
        %v3617 = vpop.xlane.xlu0 %3616
        %v3618 = vmax.f32 %v3530, %v3532
        %3619 = vmax.xlane.f32.xlu0 %v3618
        %v3620 = vpop.xlane.xlu0 %3619
        %v3621 = vmax.f32 %v3536, %v3538
        %3622 = vmax.xlane.f32.xlu0 %v3621
        %v3623 = vpop.xlane.xlu0 %3622
        %v3624 = vmax.f32 %v3542, %v3544
        %3625 = vmax.xlane.f32.xlu0 %v3624
        %v3626 = vpop.xlane.xlu0 %3625
        %v3627 = vmax.f32 %v3548, %v3550
        %3628 = vmax.xlane.f32.xlu0 %v3627
        %v3629 = vpop.xlane.xlu0 %3628
        %v3630 = vmax.f32 %v3554, %v3556
        %3631 = vmax.xlane.f32.xlu0 %v3630
        %v3632 = vpop.xlane.xlu0 %3631
        %v3633 = vmax.f32 %v3560, %v3562
        %3634 = vmax.xlane.f32.xlu0 %v3633
        %v3635 = vpop.xlane.xlu0 %3634
        %v3636 = vmax.f32 %v3566, %v3568
        %3637 = vmax.xlane.f32.xlu0 %v3636
        %v3638 = vpop.xlane.xlu0 %3637
        %v3639 = vmax.f32 %v3572, %v3574
        %3640 = vmax.xlane.f32.xlu0 %v3639
        %v3641 = vpop.xlane.xlu0 %3640
        %v3642 = vmax.f32 %v3578, %v3580
        %3643 = vmax.xlane.f32.xlu0 %v3642
        %v3644 = vpop.xlane.xlu0 %3643
        %v3645 = vmax.f32 %v3584, %v3586
        %3646 = vmax.xlane.f32.xlu0 %v3645
        %v3647 = vpop.xlane.xlu0 %3646
        %v3648 = vmax.f32 %v3590, %v3592
        %3649 = vmax.xlane.f32.xlu0 %v3648
        %v3650 = vpop.xlane.xlu0 %3649
        %v3651 = vmax.f32 %v3596, %v3598
        %3652 = vmax.xlane.f32.xlu0 %v3651
        %v3653 = vpop.xlane.xlu0 %3652
        %v3654 = vmax.f32 %v3602, %v3604
        %3655 = vmax.xlane.f32.xlu0 %v3654
        %v3656 = vpop.xlane.xlu0 %3655
        %v3657 = vmax.f32 %v3608, %v3610
        %3658 = vmax.xlane.f32.xlu0 %v3657
        %v3659 = vpop.xlane.xlu0 %3658
        %v3660 = vsub.f32 %v3518, %v3614
        %v3661 = vsub.f32 %v3520, %v3614
        %v3662 = vsub.f32 %v3524, %v3617
        %v3663 = vsub.f32 %v3526, %v3617
        %v3664 = vsub.f32 %v3530, %v3620
        %v3665 = vsub.f32 %v3532, %v3620
        %v3666 = vsub.f32 %v3536, %v3623
        %v3667 = vsub.f32 %v3538, %v3623
        %v3668 = vsub.f32 %v3542, %v3626
        %v3669 = vsub.f32 %v3544, %v3626
        %v3670 = vsub.f32 %v3548, %v3629
        %v3671 = vsub.f32 %v3550, %v3629
        %v3672 = vsub.f32 %v3554, %v3632
        %v3673 = vsub.f32 %v3556, %v3632
        %v3674 = vsub.f32 %v3560, %v3635
        %v3675 = vsub.f32 %v3562, %v3635
        %v3676 = vsub.f32 %v3566, %v3638
        %v3677 = vsub.f32 %v3568, %v3638
        %v3678 = vsub.f32 %v3572, %v3641
        %v3679 = vsub.f32 %v3574, %v3641
        %v3680 = vsub.f32 %v3578, %v3644
        %v3681 = vsub.f32 %v3580, %v3644
        %v3682 = vsub.f32 %v3584, %v3647
        %v3683 = vsub.f32 %v3586, %v3647
        %v3684 = vsub.f32 %v3590, %v3650
        %v3685 = vsub.f32 %v3592, %v3650
        %v3686 = vsub.f32 %v3596, %v3653
        %v3687 = vsub.f32 %v3598, %v3653
        %v3688 = vsub.f32 %v3602, %v3656
        %v3689 = vsub.f32 %v3604, %v3656
        %v3690 = vsub.f32 %v3608, %v3659
        %v3691 = vsub.f32 %v3610, %v3659
        %v3692 = vmul.f32 %v3660, 1.442695
        %v3693 = vpow.pop %v3692
        %v3694 = vmul.f32 %v3661, 1.442695
        %v3695 = vpow.pop %v3694
        %v3696 = vmul.f32 %v3662, 1.442695
        %v3697 = vpow.pop %v3696
        %v3698 = vmul.f32 %v3663, 1.442695
        %v3699 = vpow.pop %v3698
        %v3700 = vmul.f32 %v3664, 1.442695
        %v3701 = vpow.pop %v3700
        %v3702 = vmul.f32 %v3665, 1.442695
        %v3703 = vpow.pop %v3702
        %v3704 = vmul.f32 %v3666, 1.442695
        %v3705 = vpow.pop %v3704
        %v3706 = vmul.f32 %v3667, 1.442695
        %v3707 = vpow.pop %v3706
        %v3708 = vmul.f32 %v3668, 1.442695
        %v3709 = vpow.pop %v3708
        %v3710 = vmul.f32 %v3669, 1.442695
        %v3711 = vpow.pop %v3710
        %v3712 = vmul.f32 %v3670, 1.442695
        %v3713 = vpow.pop %v3712
        %v3714 = vmul.f32 %v3671, 1.442695
        %v3715 = vpow.pop %v3714
        %v3716 = vmul.f32 %v3672, 1.442695
        %v3717 = vpow.pop %v3716
        %v3718 = vmul.f32 %v3673, 1.442695
        %v3719 = vpow.pop %v3718
        %v3720 = vmul.f32 %v3674, 1.442695
        %v3721 = vpow.pop %v3720
        %v3722 = vmul.f32 %v3675, 1.442695
        %v3723 = vpow.pop %v3722
        %v3724 = vmul.f32 %v3676, 1.442695
        %v3725 = vpow.pop %v3724
        %v3726 = vmul.f32 %v3677, 1.442695
        %v3727 = vpow.pop %v3726
        %v3728 = vmul.f32 %v3678, 1.442695
        %v3729 = vpow.pop %v3728
        %v3730 = vmul.f32 %v3679, 1.442695
        %v3731 = vpow.pop %v3730
        %v3732 = vmul.f32 %v3680, 1.442695
        %v3733 = vpow.pop %v3732
        %v3734 = vmul.f32 %v3681, 1.442695
        %v3735 = vpow.pop %v3734
        %v3736 = vmul.f32 %v3682, 1.442695
        %v3737 = vpow.pop %v3736
        %v3738 = vmul.f32 %v3683, 1.442695
        %v3739 = vpow.pop %v3738
        %v3740 = vmul.f32 %v3684, 1.442695
        %v3741 = vpow.pop %v3740
        %v3742 = vmul.f32 %v3685, 1.442695
        %v3743 = vpow.pop %v3742
        %v3744 = vmul.f32 %v3686, 1.442695
        %v3745 = vpow.pop %v3744
        %v3746 = vmul.f32 %v3687, 1.442695
        %v3747 = vpow.pop %v3746
        %v3748 = vmul.f32 %v3688, 1.442695
        %v3749 = vpow.pop %v3748
        %v3750 = vmul.f32 %v3689, 1.442695
        %v3751 = vpow.pop %v3750
        %v3752 = vmul.f32 %v3690, 1.442695
        %v3753 = vpow.pop %v3752
        %v3754 = vmul.f32 %v3691, 1.442695
        %v3755 = vpow.pop %v3754
        %v3756 = vadd.f32 %v3693, %v3695
        %3757 = vadd.xlane.f32.xlu0 %v3756
        %v3758 = vpop.xlane.xlu0 %3757
        %v3759 = vadd.f32 %v3697, %v3699
        %3760 = vadd.xlane.f32.xlu0 %v3759
        %v3761 = vpop.xlane.xlu0 %3760
        %v3762 = vadd.f32 %v3701, %v3703
        %3763 = vadd.xlane.f32.xlu0 %v3762
        %v3764 = vpop.xlane.xlu0 %3763
        %v3765 = vadd.f32 %v3705, %v3707
        %3766 = vadd.xlane.f32.xlu0 %v3765
        %v3767 = vpop.xlane.xlu0 %3766
        %v3768 = vadd.f32 %v3709, %v3711
        %3769 = vadd.xlane.f32.xlu0 %v3768
        %v3770 = vpop.xlane.xlu0 %3769
        %v3771 = vadd.f32 %v3713, %v3715
        %3772 = vadd.xlane.f32.xlu0 %v3771
        %v3773 = vpop.xlane.xlu0 %3772
        %v3774 = vadd.f32 %v3717, %v3719
        %3775 = vadd.xlane.f32.xlu0 %v3774
        %v3776 = vpop.xlane.xlu0 %3775
        %v3777 = vadd.f32 %v3721, %v3723
        %3778 = vadd.xlane.f32.xlu0 %v3777
        %v3779 = vpop.xlane.xlu0 %3778
        %v3780 = vadd.f32 %v3725, %v3727
        %3781 = vadd.xlane.f32.xlu0 %v3780
        %v3782 = vpop.xlane.xlu0 %3781
        %v3783 = vadd.f32 %v3729, %v3731
        %3784 = vadd.xlane.f32.xlu0 %v3783
        %v3785 = vpop.xlane.xlu0 %3784
        %v3786 = vadd.f32 %v3733, %v3735
        %3787 = vadd.xlane.f32.xlu0 %v3786
        %v3788 = vpop.xlane.xlu0 %3787
        %v3789 = vadd.f32 %v3737, %v3739
        %3790 = vadd.xlane.f32.xlu0 %v3789
        %v3791 = vpop.xlane.xlu0 %3790
        %v3792 = vadd.f32 %v3741, %v3743
        %3793 = vadd.xlane.f32.xlu0 %v3792
        %v3794 = vpop.xlane.xlu0 %3793
        %v3795 = vadd.f32 %v3745, %v3747
        %3796 = vadd.xlane.f32.xlu0 %v3795
        %v3797 = vpop.xlane.xlu0 %3796
        %v3798 = vadd.f32 %v3749, %v3751
        %3799 = vadd.xlane.f32.xlu0 %v3798
        %v3800 = vpop.xlane.xlu0 %3799
        %v3801 = vadd.f32 %v3753, %v3755
        %3802 = vadd.xlane.f32.xlu0 %v3801
        %v3803 = vpop.xlane.xlu0 %3802
        %v3804 = vrcp.pop %v3758
        %v3805 = vrcp.pop %v3761
        %v3806 = vrcp.pop %v3764
        %v3807 = vrcp.pop %v3767
        %v3808 = vrcp.pop %v3770
        %v3809 = vrcp.pop %v3773
        %v3810 = vrcp.pop %v3776
        %v3811 = vrcp.pop %v3779
        %v3812 = vrcp.pop %v3782
        %v3813 = vrcp.pop %v3785
        %v3814 = vrcp.pop %v3788
        %v3815 = vrcp.pop %v3791
        %v3816 = vrcp.pop %v3794
        %v3817 = vrcp.pop %v3797
        %v3818 = vrcp.pop %v3800
        %v3819 = vrcp.pop %v3803
        %v3820 = vmul.f32 %v3693, %v3804
        %v3821 = vmul.f32 %v3695, %v3804
        %v3822 = vmul.f32 %v3697, %v3805
        %v3823 = vmul.f32 %v3699, %v3805
        %v3824 = vmul.f32 %v3701, %v3806
        %v3825 = vmul.f32 %v3703, %v3806
        %v3826 = vmul.f32 %v3705, %v3807
        %v3827 = vmul.f32 %v3707, %v3807
        %v3828 = vmul.f32 %v3709, %v3808
        %v3829 = vmul.f32 %v3711, %v3808
        %v3830 = vmul.f32 %v3713, %v3809
        %v3831 = vmul.f32 %v3715, %v3809
        %v3832 = vmul.f32 %v3717, %v3810
        %v3833 = vmul.f32 %v3719, %v3810
        %v3834 = vmul.f32 %v3721, %v3811
        %v3835 = vmul.f32 %v3723, %v3811
        %v3836 = vmul.f32 %v3725, %v3812
        %v3837 = vmul.f32 %v3727, %v3812
        %v3838 = vmul.f32 %v3729, %v3813
        %v3839 = vmul.f32 %v3731, %v3813
        %v3840 = vmul.f32 %v3733, %v3814
        %v3841 = vmul.f32 %v3735, %v3814
        %v3842 = vmul.f32 %v3737, %v3815
        %v3843 = vmul.f32 %v3739, %v3815
        %v3844 = vmul.f32 %v3741, %v3816
        %v3845 = vmul.f32 %v3743, %v3816
        %v3846 = vmul.f32 %v3745, %v3817
        %v3847 = vmul.f32 %v3747, %v3817
        %v3848 = vmul.f32 %v3749, %v3818
        %v3849 = vmul.f32 %v3751, %v3818
        %v3850 = vmul.f32 %v3753, %v3819
        %v3851 = vmul.f32 %v3755, %v3819
        %v3852 = vld [vmem:[#allocation3 + $0x80] sm:$0xff]
        %v3853 = vld [vmem:[#allocation3 + $0x88] sm:$0xff]
        %v3854 = vld [vmem:[#allocation3 + $0x90] sm:$0xff]
        %v3855 = vld [vmem:[#allocation3 + $0x98] sm:$0xff]
        %v3856 = vld [vmem:[#allocation3 + $0xa0] sm:$0xff]
        %v3857 = vld [vmem:[#allocation3 + $0xa8] sm:$0xff]
        %v3858 = vld [vmem:[#allocation3 + $0xb0] sm:$0xff]
        %v3859 = vld [vmem:[#allocation3 + $0xb8] sm:$0xff]
        %3860 = vmatprep.subr.mxu0 %v3821
        %3861 = vmatpush1.xpose.msra.mxu0 %v3820
        %3862 = vmatprep.subr.mxu0 %v3823
        %3863 = vmatpush1.xpose.msra.mxu0 %v3822
        %3864 = vmatprep.subr.mxu0 %v3825
        %3865 = vmatpush1.xpose.msra.mxu0 %v3824
        %3866 = vmatprep.subr.mxu0 %v3827
        %3867 = vmatpush1.xpose.msra.mxu0 %v3826
        %3868 = vmatprep.subr.mxu0 %v3829
        %3869 = vmatpush1.xpose.msra.mxu0 %v3828
        %3870 = vmatprep.subr.mxu0 %v3831
        %3871 = vmatpush1.xpose.msra.mxu0 %v3830
        %3872 = vmatprep.subr.mxu0 %v3833
        %3873 = vmatpush1.xpose.msra.mxu0 %v3832
        %3874 = vmatprep.subr.mxu0 %v3835
        %3875 = vmatpush1.xpose.msra.mxu0 %v3834
        %3876 = vmatprep.subr.mxu0 %v3837
        %3877 = vmatpush1.xpose.msra.mxu0 %v3836
        %3878 = vmatprep.subr.mxu0 %v3839
        %3879 = vmatpush1.xpose.msra.mxu0 %v3838
        %3880 = vmatprep.subr.mxu0 %v3841
        %3881 = vmatpush1.xpose.msra.mxu0 %v3840
        %3882 = vmatprep.subr.mxu0 %v3843
        %3883 = vmatpush1.xpose.msra.mxu0 %v3842
        %3884 = vmatprep.subr.mxu0 %v3845
        %3885 = vmatpush1.xpose.msra.mxu0 %v3844
        %3886 = vmatprep.subr.mxu0 %v3847
        %3887 = vmatpush1.xpose.msra.mxu0 %v3846
        %3888 = vmatprep.subr.mxu0 %v3849
        %3889 = vmatpush1.xpose.msra.mxu0 %v3848
        %3890 = vmatprep.subr.mxu0 %v3851
        %3891 = vmatpush1.xpose.msra.mxu0 %v3850
        %3892 = vmatprep.subr.mxu0 0.0
        %3893 = vmatpush1.xpose.msra.mxu0 0.0
        %3894 = vmatprep.subr.mxu0 0.0
        %3895 = vmatpush1.xpose.msra.mxu0 0.0
        %3896 = vmatprep.subr.mxu0 0.0
        %3897 = vmatpush1.xpose.msra.mxu0 0.0
        %3898 = vmatprep.subr.mxu0 0.0
        %3899 = vmatpush1.xpose.msra.mxu0 0.0
        %3900 = vmatprep.subr.mxu0 0.0
        %3901 = vmatpush1.xpose.msra.mxu0 0.0
        %3902 = vmatprep.subr.mxu0 0.0
        %3903 = vmatpush1.xpose.msra.mxu0 0.0
        %3904 = vmatprep.subr.mxu0 0.0
        %3905 = vmatpush1.xpose.msra.mxu0 0.0
        %3906 = vmatprep.subr.mxu0 0.0
        %3907 = vmatpush1.xpose.msra.mxu0 0.0
        %3908 = vmatprep.subr.mxu0 0.0
        %3909 = vmatpush1.xpose.msra.mxu0 0.0
        %3910 = vmatprep.subr.mxu0 0.0
        %3911 = vmatpush1.xpose.msra.mxu0 0.0
        %3912 = vmatprep.subr.mxu0 0.0
        %3913 = vmatpush1.xpose.msra.mxu0 0.0
        %3914 = vmatprep.subr.mxu0 0.0
        %3915 = vmatpush1.xpose.msra.mxu0 0.0
        %3916 = vmatprep.subr.mxu0 0.0
        %3917 = vmatpush1.xpose.msra.mxu0 0.0
        %3918 = vmatprep.subr.mxu0 0.0
        %3919 = vmatpush1.xpose.msra.mxu0 0.0
        %3920 = vmatprep.subr.mxu0 0.0
        %3921 = vmatpush1.xpose.msra.mxu0 0.0
        %3922 = vmatprep.subr.mxu0 0.0
        %3923 = vmatpush1.xpose.msra.mxu0 0.0
        %3924 = vmatprep.mubr.f32.mxu0 %v3853
        %3925 = vmatmul.mubr.f32.gmra.mrb[0].mxu0 %v3852
        %v3926 = vpop.f32.mrb[0].mxu0
        %v3927 = vadd.f32 0.0, %v3926
        %v3928 = vpop.f32.mrb[0].mxu0
        %3929 = vmatprep.mubr.f32.mxu0 %v3855
        %3930 = vmatmul.mubr.f32.gmra.mrb[0].mxu0 %v3854
        %v3931 = vpop.f32.mrb[0].mxu0
        %v3932 = vadd.f32 0.0, %v3931
        %v3933 = vpop.f32.mrb[0].mxu0
        %3934 = vmatprep.mubr.f32.mxu0 %v3857
        %3935 = vmatmul.mubr.f32.gmra.mrb[0].mxu0 %v3856
        %v3936 = vpop.f32.mrb[0].mxu0
        %v3937 = vadd.f32 0.0, %v3936
        %v3938 = vpop.f32.mrb[0].mxu0
        %3939 = vmatprep.mubr.f32.mxu0 %v3859
        %3940 = vmatmul.mubr.f32.gmra.mrb[0].mxu0 %v3858
        %v3941 = vpop.f32.mrb[0].mxu0
        %v3942 = vadd.f32 0.0, %v3941
        %v3943 = vpop.f32.mrb[0].mxu0
        %3944 = vdwg.mxu0
        %3945 = vst [vmem:[#allocation4 + $0x40] sm:$0xff] %v3927
        %3946 = vst [vmem:[#allocation4 + $0x48] sm:$0xff] %v3932
        %3947 = vst [vmem:[#allocation4 + $0x50] sm:$0xff] %v3937
        %3948 = vst [vmem:[#allocation4 + $0x58] sm:$0xff] %v3942
        %3949 = vxpose.xlu0.b32.start [1/16] %v2186, 128
        %3950 = vxpose.xlu0.b32.cont [2/16] %v2187, 128
        %3951 = vxpose.xlu0.b32.cont [3/16] %v2188, 128
        %3952 = vxpose.xlu0.b32.cont [4/16] %v2189, 128
        %3953 = vxpose.xlu0.b32.cont [5/16] 0.0, 128
        %3954 = vxpose.xlu0.b32.cont [6/16] 0.0, 128
        %3955 = vxpose.xlu0.b32.cont [7/16] 0.0, 128
        %3956 = vxpose.xlu0.b32.cont [8/16] 0.0, 128
        %3957 = vxpose.xlu0.b32.cont [9/16] 0.0, 128
        %3958 = vxpose.xlu0.b32.cont [10/16] 0.0, 128
        %3959 = vxpose.xlu0.b32.cont [11/16] 0.0, 128
        %3960 = vxpose.xlu0.b32.cont [12/16] 0.0, 128
        %3961 = vxpose.xlu0.b32.cont [13/16] 0.0, 128
        %3962 = vxpose.xlu0.b32.cont [14/16] 0.0, 128
        %3963 = vxpose.xlu0.b32.cont [15/16] 0.0, 128
        %3964 = vxpose.xlu0.b32.end [16/16] 0.0, 128
        %v3965 = vpop.trf.xlu0
        %v3966 = vpop.trf.xlu0
        %v3967 = vpop.trf.xlu0
        %v3968 = vpop.trf.xlu0
        %v3969 = vpop.trf.xlu0
        %v3970 = vpop.trf.xlu0
        %v3971 = vpop.trf.xlu0
        %v3972 = vpop.trf.xlu0
        %v3973 = vpop.trf.xlu0
        %v3974 = vpop.trf.xlu0
        %v3975 = vpop.trf.xlu0
        %v3976 = vpop.trf.xlu0
        %v3977 = vpop.trf.xlu0
        %v3978 = vpop.trf.xlu0
        %v3979 = vpop.trf.xlu0
        %v3980 = vpop.trf.xlu0
        %v3981 = vld [vmem:[#allocation2 + $0xc0] sm:$0xff]
        %v3982 = vld [vmem:[#allocation2 + $0xc8] sm:$0xff]
        %v3983 = vld [vmem:[#allocation2 + $0xd0] sm:$0xff]
        %v3984 = vld [vmem:[#allocation2 + $0xd8] sm:$0xff]
        %v3985 = vld [vmem:[#allocation2 + $0xe0] sm:$0xff]
        %v3986 = vld [vmem:[#allocation2 + $0xe8] sm:$0xff]
        %v3987 = vld [vmem:[#allocation2 + $0xf0] sm:$0xff]
        %v3988 = vld [vmem:[#allocation2 + $0xf8] sm:$0xff]
        %v3990 = vsel %vm2230, %v3965, 0
        %v3993 = vsel %vm2230, %v3966, 0
        %v3996 = vsel %vm2230, %v3967, 0
        %v3999 = vsel %vm2230, %v3968, 0
        %v4002 = vsel %vm2230, %v3969, 0
        %v4005 = vsel %vm2230, %v3970, 0
        %v4008 = vsel %vm2230, %v3971, 0
        %v4011 = vsel %vm2230, %v3972, 0
        %v4014 = vsel %vm2230, %v3973, 0
        %v4017 = vsel %vm2230, %v3974, 0
        %v4020 = vsel %vm2230, %v3975, 0
        %v4023 = vsel %vm2230, %v3976, 0
        %v4026 = vsel %vm2230, %v3977, 0
        %v4029 = vsel %vm2230, %v3978, 0
        %v4032 = vsel %vm2230, %v3979, 0
        %v4035 = vsel %vm2230, %v3980, 0
        %4037 = vmatprep.subr.mxu0 %v3982
        %4038 = vmatpush1.msra.mxu0 %v3981
        %4039 = vmatprep.subr.mxu0 %v3984
        %4040 = vmatpush1.msra.mxu0 %v3983
        %4041 = vmatprep.subr.mxu0 %v3986
        %4042 = vmatpush1.msra.mxu0 %v3985
        %4043 = vmatprep.subr.mxu0 %v3988
        %4044 = vmatpush1.msra.mxu0 %v3987
        %4045 = vmatprep.subr.mxu0 0.0
        %4046 = vmatpush1.msra.mxu0 0.0
        %4047 = vmatprep.subr.mxu0 0.0
        %4048 = vmatpush1.msra.mxu0 0.0
        %4049 = vmatprep.subr.mxu0 0.0
        %4050 = vmatpush1.msra.mxu0 0.0
        %4051 = vmatprep.subr.mxu0 0.0
        %4052 = vmatpush1.msra.mxu0 0.0
        %4053 = vmatprep.subr.mxu0 0.0
        %4054 = vmatpush1.msra.mxu0 0.0
        %4055 = vmatprep.subr.mxu0 0.0
        %4056 = vmatpush1.msra.mxu0 0.0
        %4057 = vmatprep.subr.mxu0 0.0
        %4058 = vmatpush1.msra.mxu0 0.0
        %4059 = vmatprep.subr.mxu0 0.0
        %4060 = vmatpush1.msra.mxu0 0.0
        %4061 = vmatprep.subr.mxu0 0.0
        %4062 = vmatpush1.msra.mxu0 0.0
        %4063 = vmatprep.subr.mxu0 0.0
        %4064 = vmatpush1.msra.mxu0 0.0
        %4065 = vmatprep.subr.mxu0 0.0
        %4066 = vmatpush1.msra.mxu0 0.0
        %4067 = vmatprep.subr.mxu0 0.0
        %4068 = vmatpush1.msra.mxu0 0.0
        %4069 = vmatprep.subr.mxu0 0.0
        %4070 = vmatpush1.msra.mxu0 0.0
        %4071 = vmatprep.subr.mxu0 0.0
        %4072 = vmatpush1.msra.mxu0 0.0
        %4073 = vmatprep.subr.mxu0 0.0
        %4074 = vmatpush1.msra.mxu0 0.0
        %4075 = vmatprep.subr.mxu0 0.0
        %4076 = vmatpush1.msra.mxu0 0.0
        %4077 = vmatprep.subr.mxu0 0.0
        %4078 = vmatpush1.msra.mxu0 0.0
        %4079 = vmatprep.subr.mxu0 0.0
        %4080 = vmatpush1.msra.mxu0 0.0
        %4081 = vmatprep.subr.mxu0 0.0
        %4082 = vmatpush1.msra.mxu0 0.0
        %4083 = vmatprep.subr.mxu0 0.0
        %4084 = vmatpush1.msra.mxu0 0.0
        %4085 = vmatprep.subr.mxu0 0.0
        %4086 = vmatpush1.msra.mxu0 0.0
        %4087 = vmatprep.subr.mxu0 0.0
        %4088 = vmatpush1.msra.mxu0 0.0
        %4089 = vmatprep.subr.mxu0 0.0
        %4090 = vmatpush1.msra.mxu0 0.0
        %4091 = vmatprep.subr.mxu0 0.0
        %4092 = vmatpush1.msra.mxu0 0.0
        %4093 = vmatprep.subr.mxu0 0.0
        %4094 = vmatpush1.msra.mxu0 0.0
        %4095 = vmatprep.subr.mxu0 0.0
        %4096 = vmatpush1.msra.mxu0 0.0
        %4097 = vmatprep.subr.mxu0 0.0
        %4098 = vmatpush1.msra.mxu0 0.0
        %4099 = vmatprep.subr.mxu0 0.0
        %4100 = vmatpush1.msra.mxu0 0.0
        %4101 = vmatprep.mubr.f32.mxu0 0.0
        %4102 = vmatmul.mubr.f32.gmra.mrb[0].mxu0 %v3990
        %v4103 = vpop.f32.mrb[0].mxu0
        %v4104 = vadd.f32 0.0, %v4103
        %v4105 = vpop.f32.mrb[0].mxu0
        %v4106 = vadd.f32 0.0, %v4105
        %4107 = vmatprep.mubr.f32.mxu0 0.0
        %4108 = vmatmul.mubr.f32.gmra.mrb[0].mxu0 %v3993
        %v4109 = vpop.f32.mrb[0].mxu0
        %v4110 = vadd.f32 0.0, %v4109
        %v4111 = vpop.f32.mrb[0].mxu0
        %v4112 = vadd.f32 0.0, %v4111
        %4113 = vmatprep.mubr.f32.mxu0 0.0
        %4114 = vmatmul.mubr.f32.gmra.mrb[0].mxu0 %v3996
        %v4115 = vpop.f32.mrb[0].mxu0
        %v4116 = vadd.f32 0.0, %v4115
        %v4117 = vpop.f32.mrb[0].mxu0
        %v4118 = vadd.f32 0.0, %v4117
        %4119 = vmatprep.mubr.f32.mxu0 0.0
        %4120 = vmatmul.mubr.f32.gmra.mrb[0].mxu0 %v3999
        %v4121 = vpop.f32.mrb[0].mxu0
        %v4122 = vadd.f32 0.0, %v4121
        %v4123 = vpop.f32.mrb[0].mxu0
        %v4124 = vadd.f32 0.0, %v4123
        %4125 = vmatprep.mubr.f32.mxu0 0.0
        %4126 = vmatmul.mubr.f32.gmra.mrb[0].mxu0 %v4002
        %v4127 = vpop.f32.mrb[0].mxu0
        %v4128 = vadd.f32 0.0, %v4127
        %v4129 = vpop.f32.mrb[0].mxu0
        %v4130 = vadd.f32 0.0, %v4129
        %4131 = vmatprep.mubr.f32.mxu0 0.0
        %4132 = vmatmul.mubr.f32.gmra.mrb[0].mxu0 %v4005
        %v4133 = vpop.f32.mrb[0].mxu0
        %v4134 = vadd.f32 0.0, %v4133
        %v4135 = vpop.f32.mrb[0].mxu0
        %v4136 = vadd.f32 0.0, %v4135
        %4137 = vmatprep.mubr.f32.mxu0 0.0
        %4138 = vmatmul.mubr.f32.gmra.mrb[0].mxu0 %v4008
        %v4139 = vpop.f32.mrb[0].mxu0
        %v4140 = vadd.f32 0.0, %v4139
        %v4141 = vpop.f32.mrb[0].mxu0
        %v4142 = vadd.f32 0.0, %v4141
        %4143 = vmatprep.mubr.f32.mxu0 0.0
        %4144 = vmatmul.mubr.f32.gmra.mrb[0].mxu0 %v4011
        %v4145 = vpop.f32.mrb[0].mxu0
        %v4146 = vadd.f32 0.0, %v4145
        %v4147 = vpop.f32.mrb[0].mxu0
        %v4148 = vadd.f32 0.0, %v4147
        %4149 = vmatprep.mubr.f32.mxu0 0.0
        %4150 = vmatmul.mubr.f32.gmra.mrb[0].mxu0 %v4014
        %v4151 = vpop.f32.mrb[0].mxu0
        %v4152 = vadd.f32 0.0, %v4151
        %v4153 = vpop.f32.mrb[0].mxu0
        %v4154 = vadd.f32 0.0, %v4153
        %4155 = vmatprep.mubr.f32.mxu0 0.0
        %4156 = vmatmul.mubr.f32.gmra.mrb[0].mxu0 %v4017
        %v4157 = vpop.f32.mrb[0].mxu0
        %v4158 = vadd.f32 0.0, %v4157
        %v4159 = vpop.f32.mrb[0].mxu0
        %v4160 = vadd.f32 0.0, %v4159
        %4161 = vmatprep.mubr.f32.mxu0 0.0
        %4162 = vmatmul.mubr.f32.gmra.mrb[0].mxu0 %v4020
        %v4163 = vpop.f32.mrb[0].mxu0
        %v4164 = vadd.f32 0.0, %v4163
        %v4165 = vpop.f32.mrb[0].mxu0
        %v4166 = vadd.f32 0.0, %v4165
        %4167 = vmatprep.mubr.f32.mxu0 0.0
        %4168 = vmatmul.mubr.f32.gmra.mrb[0].mxu0 %v4023
        %v4169 = vpop.f32.mrb[0].mxu0
        %v4170 = vadd.f32 0.0, %v4169
        %v4171 = vpop.f32.mrb[0].mxu0
        %v4172 = vadd.f32 0.0, %v4171
        %4173 = vmatprep.mubr.f32.mxu0 0.0
        %4174 = vmatmul.mubr.f32.gmra.mrb[0].mxu0 %v4026
        %v4175 = vpop.f32.mrb[0].mxu0
        %v4176 = vadd.f32 0.0, %v4175
        %v4177 = vpop.f32.mrb[0].mxu0
        %v4178 = vadd.f32 0.0, %v4177
        %4179 = vmatprep.mubr.f32.mxu0 0.0
        %4180 = vmatmul.mubr.f32.gmra.mrb[0].mxu0 %v4029
        %v4181 = vpop.f32.mrb[0].mxu0
        %v4182 = vadd.f32 0.0, %v4181
        %v4183 = vpop.f32.mrb[0].mxu0
        %v4184 = vadd.f32 0.0, %v4183
        %4185 = vmatprep.mubr.f32.mxu0 0.0
        %4186 = vmatmul.mubr.f32.gmra.mrb[0].mxu0 %v4032
        %v4187 = vpop.f32.mrb[0].mxu0
        %v4188 = vadd.f32 0.0, %v4187
        %v4189 = vpop.f32.mrb[0].mxu0
        %v4190 = vadd.f32 0.0, %v4189
        %4191 = vmatprep.mubr.f32.mxu0 0.0
        %4192 = vmatmul.mubr.f32.gmra.mrb[0].mxu0 %v4035
        %v4193 = vpop.f32.mrb[0].mxu0
        %v4194 = vadd.f32 0.0, %v4193
        %v4195 = vpop.f32.mrb[0].mxu0
        %v4196 = vadd.f32 0.0, %v4195
        %4197 = vdwg.mxu0
        %v4198 = vmax.f32 %v4104, %v4106
        %4199 = vmax.xlane.f32.xlu0 %v4198
        %v4200 = vpop.xlane.xlu0 %4199
        %v4201 = vmax.f32 %v4110, %v4112
        %4202 = vmax.xlane.f32.xlu0 %v4201
        %v4203 = vpop.xlane.xlu0 %4202
        %v4204 = vmax.f32 %v4116, %v4118
        %4205 = vmax.xlane.f32.xlu0 %v4204
        %v4206 = vpop.xlane.xlu0 %4205
        %v4207 = vmax.f32 %v4122, %v4124
        %4208 = vmax.xlane.f32.xlu0 %v4207
        %v4209 = vpop.xlane.xlu0 %4208
        %v4210 = vmax.f32 %v4128, %v4130
        %4211 = vmax.xlane.f32.xlu0 %v4210
        %v4212 = vpop.xlane.xlu0 %4211
        %v4213 = vmax.f32 %v4134, %v4136
        %4214 = vmax.xlane.f32.xlu0 %v4213
        %v4215 = vpop.xlane.xlu0 %4214
        %v4216 = vmax.f32 %v4140, %v4142
        %4217 = vmax.xlane.f32.xlu0 %v4216
        %v4218 = vpop.xlane.xlu0 %4217
        %v4219 = vmax.f32 %v4146, %v4148
        %4220 = vmax.xlane.f32.xlu0 %v4219
        %v4221 = vpop.xlane.xlu0 %4220
        %v4222 = vmax.f32 %v4152, %v4154
        %4223 = vmax.xlane.f32.xlu0 %v4222
        %v4224 = vpop.xlane.xlu0 %4223
        %v4225 = vmax.f32 %v4158, %v4160
        %4226 = vmax.xlane.f32.xlu0 %v4225
        %v4227 = vpop.xlane.xlu0 %4226
        %v4228 = vmax.f32 %v4164, %v4166
        %4229 = vmax.xlane.f32.xlu0 %v4228
        %v4230 = vpop.xlane.xlu0 %4229
        %v4231 = vmax.f32 %v4170, %v4172
        %4232 = vmax.xlane.f32.xlu0 %v4231
        %v4233 = vpop.xlane.xlu0 %4232
        %v4234 = vmax.f32 %v4176, %v4178
        %4235 = vmax.xlane.f32.xlu0 %v4234
        %v4236 = vpop.xlane.xlu0 %4235
        %v4237 = vmax.f32 %v4182, %v4184
        %4238 = vmax.xlane.f32.xlu0 %v4237
        %v4239 = vpop.xlane.xlu0 %4238
        %v4240 = vmax.f32 %v4188, %v4190
        %4241 = vmax.xlane.f32.xlu0 %v4240
        %v4242 = vpop.xlane.xlu0 %4241
        %v4243 = vmax.f32 %v4194, %v4196
        %4244 = vmax.xlane.f32.xlu0 %v4243
        %v4245 = vpop.xlane.xlu0 %4244
        %v4246 = vsub.f32 %v4104, %v4200
        %v4247 = vsub.f32 %v4106, %v4200
        %v4248 = vsub.f32 %v4110, %v4203
        %v4249 = vsub.f32 %v4112, %v4203
        %v4250 = vsub.f32 %v4116, %v4206
        %v4251 = vsub.f32 %v4118, %v4206
        %v4252 = vsub.f32 %v4122, %v4209
        %v4253 = vsub.f32 %v4124, %v4209
        %v4254 = vsub.f32 %v4128, %v4212
        %v4255 = vsub.f32 %v4130, %v4212
        %v4256 = vsub.f32 %v4134, %v4215
        %v4257 = vsub.f32 %v4136, %v4215
        %v4258 = vsub.f32 %v4140, %v4218
        %v4259 = vsub.f32 %v4142, %v4218
        %v4260 = vsub.f32 %v4146, %v4221
        %v4261 = vsub.f32 %v4148, %v4221
        %v4262 = vsub.f32 %v4152, %v4224
        %v4263 = vsub.f32 %v4154, %v4224
        %v4264 = vsub.f32 %v4158, %v4227
        %v4265 = vsub.f32 %v4160, %v4227
        %v4266 = vsub.f32 %v4164, %v4230
        %v4267 = vsub.f32 %v4166, %v4230
        %v4268 = vsub.f32 %v4170, %v4233
        %v4269 = vsub.f32 %v4172, %v4233
        %v4270 = vsub.f32 %v4176, %v4236
        %v4271 = vsub.f32 %v4178, %v4236
        %v4272 = vsub.f32 %v4182, %v4239
        %v4273 = vsub.f32 %v4184, %v4239
        %v4274 = vsub.f32 %v4188, %v4242
        %v4275 = vsub.f32 %v4190, %v4242
        %v4276 = vsub.f32 %v4194, %v4245
        %v4277 = vsub.f32 %v4196, %v4245
        %v4278 = vmul.f32 %v4246, 1.442695
        %v4279 = vpow.pop %v4278
        %v4280 = vmul.f32 %v4247, 1.442695
        %v4281 = vpow.pop %v4280
        %v4282 = vmul.f32 %v4248, 1.442695
        %v4283 = vpow.pop %v4282
        %v4284 = vmul.f32 %v4249, 1.442695
        %v4285 = vpow.pop %v4284
        %v4286 = vmul.f32 %v4250, 1.442695
        %v4287 = vpow.pop %v4286
        %v4288 = vmul.f32 %v4251, 1.442695
        %v4289 = vpow.pop %v4288
        %v4290 = vmul.f32 %v4252, 1.442695
        %v4291 = vpow.pop %v4290
        %v4292 = vmul.f32 %v4253, 1.442695
        %v4293 = vpow.pop %v4292
        %v4294 = vmul.f32 %v4254, 1.442695
        %v4295 = vpow.pop %v4294
        %v4296 = vmul.f32 %v4255, 1.442695
        %v4297 = vpow.pop %v4296
        %v4298 = vmul.f32 %v4256, 1.442695
        %v4299 = vpow.pop %v4298
        %v4300 = vmul.f32 %v4257, 1.442695
        %v4301 = vpow.pop %v4300
        %v4302 = vmul.f32 %v4258, 1.442695
        %v4303 = vpow.pop %v4302
        %v4304 = vmul.f32 %v4259, 1.442695
        %v4305 = vpow.pop %v4304
        %v4306 = vmul.f32 %v4260, 1.442695
        %v4307 = vpow.pop %v4306
        %v4308 = vmul.f32 %v4261, 1.442695
        %v4309 = vpow.pop %v4308
        %v4310 = vmul.f32 %v4262, 1.442695
        %v4311 = vpow.pop %v4310
        %v4312 = vmul.f32 %v4263, 1.442695
        %v4313 = vpow.pop %v4312
        %v4314 = vmul.f32 %v4264, 1.442695
        %v4315 = vpow.pop %v4314
        %v4316 = vmul.f32 %v4265, 1.442695
        %v4317 = vpow.pop %v4316
        %v4318 = vmul.f32 %v4266, 1.442695
        %v4319 = vpow.pop %v4318
        %v4320 = vmul.f32 %v4267, 1.442695
        %v4321 = vpow.pop %v4320
        %v4322 = vmul.f32 %v4268, 1.442695
        %v4323 = vpow.pop %v4322
        %v4324 = vmul.f32 %v4269, 1.442695
        %v4325 = vpow.pop %v4324
        %v4326 = vmul.f32 %v4270, 1.442695
        %v4327 = vpow.pop %v4326
        %v4328 = vmul.f32 %v4271, 1.442695
        %v4329 = vpow.pop %v4328
        %v4330 = vmul.f32 %v4272, 1.442695
        %v4331 = vpow.pop %v4330
        %v4332 = vmul.f32 %v4273, 1.442695
        %v4333 = vpow.pop %v4332
        %v4334 = vmul.f32 %v4274, 1.442695
        %v4335 = vpow.pop %v4334
        %v4336 = vmul.f32 %v4275, 1.442695
        %v4337 = vpow.pop %v4336
        %v4338 = vmul.f32 %v4276, 1.442695
        %v4339 = vpow.pop %v4338
        %v4340 = vmul.f32 %v4277, 1.442695
        %v4341 = vpow.pop %v4340
        %v4342 = vadd.f32 %v4279, %v4281
        %4343 = vadd.xlane.f32.xlu0 %v4342
        %v4344 = vpop.xlane.xlu0 %4343
        %v4345 = vadd.f32 %v4283, %v4285
        %4346 = vadd.xlane.f32.xlu0 %v4345
        %v4347 = vpop.xlane.xlu0 %4346
        %v4348 = vadd.f32 %v4287, %v4289
        %4349 = vadd.xlane.f32.xlu0 %v4348
        %v4350 = vpop.xlane.xlu0 %4349
        %v4351 = vadd.f32 %v4291, %v4293
        %4352 = vadd.xlane.f32.xlu0 %v4351
        %v4353 = vpop.xlane.xlu0 %4352
        %v4354 = vadd.f32 %v4295, %v4297
        %4355 = vadd.xlane.f32.xlu0 %v4354
        %v4356 = vpop.xlane.xlu0 %4355
        %v4357 = vadd.f32 %v4299, %v4301
        %4358 = vadd.xlane.f32.xlu0 %v4357
        %v4359 = vpop.xlane.xlu0 %4358
        %v4360 = vadd.f32 %v4303, %v4305
        %4361 = vadd.xlane.f32.xlu0 %v4360
        %v4362 = vpop.xlane.xlu0 %4361
        %v4363 = vadd.f32 %v4307, %v4309
        %4364 = vadd.xlane.f32.xlu0 %v4363
        %v4365 = vpop.xlane.xlu0 %4364
        %v4366 = vadd.f32 %v4311, %v4313
        %4367 = vadd.xlane.f32.xlu0 %v4366
        %v4368 = vpop.xlane.xlu0 %4367
        %v4369 = vadd.f32 %v4315, %v4317
        %4370 = vadd.xlane.f32.xlu0 %v4369
        %v4371 = vpop.xlane.xlu0 %4370
        %v4372 = vadd.f32 %v4319, %v4321
        %4373 = vadd.xlane.f32.xlu0 %v4372
        %v4374 = vpop.xlane.xlu0 %4373
        %v4375 = vadd.f32 %v4323, %v4325
        %4376 = vadd.xlane.f32.xlu0 %v4375
        %v4377 = vpop.xlane.xlu0 %4376
        %v4378 = vadd.f32 %v4327, %v4329
        %4379 = vadd.xlane.f32.xlu0 %v4378
        %v4380 = vpop.xlane.xlu0 %4379
        %v4381 = vadd.f32 %v4331, %v4333
        %4382 = vadd.xlane.f32.xlu0 %v4381
        %v4383 = vpop.xlane.xlu0 %4382
        %v4384 = vadd.f32 %v4335, %v4337
        %4385 = vadd.xlane.f32.xlu0 %v4384
        %v4386 = vpop.xlane.xlu0 %4385
        %v4387 = vadd.f32 %v4339, %v4341
        %4388 = vadd.xlane.f32.xlu0 %v4387
        %v4389 = vpop.xlane.xlu0 %4388
        %v4390 = vrcp.pop %v4344
        %v4391 = vrcp.pop %v4347
        %v4392 = vrcp.pop %v4350
        %v4393 = vrcp.pop %v4353
        %v4394 = vrcp.pop %v4356
        %v4395 = vrcp.pop %v4359
        %v4396 = vrcp.pop %v4362
        %v4397 = vrcp.pop %v4365
        %v4398 = vrcp.pop %v4368
        %v4399 = vrcp.pop %v4371
        %v4400 = vrcp.pop %v4374
        %v4401 = vrcp.pop %v4377
        %v4402 = vrcp.pop %v4380
        %v4403 = vrcp.pop %v4383
        %v4404 = vrcp.pop %v4386
        %v4405 = vrcp.pop %v4389
        %v4406 = vmul.f32 %v4279, %v4390
        %v4407 = vmul.f32 %v4281, %v4390
        %v4408 = vmul.f32 %v4283, %v4391
        %v4409 = vmul.f32 %v4285, %v4391
        %v4410 = vmul.f32 %v4287, %v4392
        %v4411 = vmul.f32 %v4289, %v4392
        %v4412 = vmul.f32 %v4291, %v4393
        %v4413 = vmul.f32 %v4293, %v4393
        %v4414 = vmul.f32 %v4295, %v4394
        %v4415 = vmul.f32 %v4297, %v4394
        %v4416 = vmul.f32 %v4299, %v4395
        %v4417 = vmul.f32 %v4301, %v4395
        %v4418 = vmul.f32 %v4303, %v4396
        %v4419 = vmul.f32 %v4305, %v4396
        %v4420 = vmul.f32 %v4307, %v4397
        %v4421 = vmul.f32 %v4309, %v4397
        %v4422 = vmul.f32 %v4311, %v4398
        %v4423 = vmul.f32 %v4313, %v4398
        %v4424 = vmul.f32 %v4315, %v4399
        %v4425 = vmul.f32 %v4317, %v4399
        %v4426 = vmul.f32 %v4319, %v4400
        %v4427 = vmul.f32 %v4321, %v4400
        %v4428 = vmul.f32 %v4323, %v4401
        %v4429 = vmul.f32 %v4325, %v4401
        %v4430 = vmul.f32 %v4327, %v4402
        %v4431 = vmul.f32 %v4329, %v4402
        %v4432 = vmul.f32 %v4331, %v4403
        %v4433 = vmul.f32 %v4333, %v4403
        %v4434 = vmul.f32 %v4335, %v4404
        %v4435 = vmul.f32 %v4337, %v4404
        %v4436 = vmul.f32 %v4339, %v4405
        %v4437 = vmul.f32 %v4341, %v4405
        %v4438 = vld [vmem:[#allocation3 + $0xc0] sm:$0xff]
        %v4439 = vld [vmem:[#allocation3 + $0xc8] sm:$0xff]
        %v4440 = vld [vmem:[#allocation3 + $0xd0] sm:$0xff]
        %v4441 = vld [vmem:[#allocation3 + $0xd8] sm:$0xff]
        %v4442 = vld [vmem:[#allocation3 + $0xe0] sm:$0xff]
        %v4443 = vld [vmem:[#allocation3 + $0xe8] sm:$0xff]
        %v4444 = vld [vmem:[#allocation3 + $0xf0] sm:$0xff]
        %v4445 = vld [vmem:[#allocation3 + $0xf8] sm:$0xff]
        %4446 = vmatprep.subr.mxu0 %v4407
        %4447 = vmatpush1.xpose.msra.mxu0 %v4406
        %4448 = vmatprep.subr.mxu0 %v4409
        %4449 = vmatpush1.xpose.msra.mxu0 %v4408
        %4450 = vmatprep.subr.mxu0 %v4411
        %4451 = vmatpush1.xpose.msra.mxu0 %v4410
        %4452 = vmatprep.subr.mxu0 %v4413
        %4453 = vmatpush1.xpose.msra.mxu0 %v4412
        %4454 = vmatprep.subr.mxu0 %v4415
        %4455 = vmatpush1.xpose.msra.mxu0 %v4414
        %4456 = vmatprep.subr.mxu0 %v4417
        %4457 = vmatpush1.xpose.msra.mxu0 %v4416
        %4458 = vmatprep.subr.mxu0 %v4419
        %4459 = vmatpush1.xpose.msra.mxu0 %v4418
        %4460 = vmatprep.subr.mxu0 %v4421
        %4461 = vmatpush1.xpose.msra.mxu0 %v4420
        %4462 = vmatprep.subr.mxu0 %v4423
        %4463 = vmatpush1.xpose.msra.mxu0 %v4422
        %4464 = vmatprep.subr.mxu0 %v4425
        %4465 = vmatpush1.xpose.msra.mxu0 %v4424
        %4466 = vmatprep.subr.mxu0 %v4427
        %4467 = vmatpush1.xpose.msra.mxu0 %v4426
        %4468 = vmatprep.subr.mxu0 %v4429
        %4469 = vmatpush1.xpose.msra.mxu0 %v4428
        %4470 = vmatprep.subr.mxu0 %v4431
        %4471 = vmatpush1.xpose.msra.mxu0 %v4430
        %4472 = vmatprep.subr.mxu0 %v4433
        %4473 = vmatpush1.xpose.msra.mxu0 %v4432
        %4474 = vmatprep.subr.mxu0 %v4435
        %4475 = vmatpush1.xpose.msra.mxu0 %v4434
        %4476 = vmatprep.subr.mxu0 %v4437
        %4477 = vmatpush1.xpose.msra.mxu0 %v4436
        %4478 = vmatprep.subr.mxu0 0.0
        %4479 = vmatpush1.xpose.msra.mxu0 0.0
        %4480 = vmatprep.subr.mxu0 0.0
        %4481 = vmatpush1.xpose.msra.mxu0 0.0
        %4482 = vmatprep.subr.mxu0 0.0
        %4483 = vmatpush1.xpose.msra.mxu0 0.0
        %4484 = vmatprep.subr.mxu0 0.0
        %4485 = vmatpush1.xpose.msra.mxu0 0.0
        %4486 = vmatprep.subr.mxu0 0.0
        %4487 = vmatpush1.xpose.msra.mxu0 0.0
        %4488 = vmatprep.subr.mxu0 0.0
        %4489 = vmatpush1.xpose.msra.mxu0 0.0
        %4490 = vmatprep.subr.mxu0 0.0
        %4491 = vmatpush1.xpose.msra.mxu0 0.0
        %4492 = vmatprep.subr.mxu0 0.0
        %4493 = vmatpush1.xpose.msra.mxu0 0.0
        %4494 = vmatprep.subr.mxu0 0.0
        %4495 = vmatpush1.xpose.msra.mxu0 0.0
        %4496 = vmatprep.subr.mxu0 0.0
        %4497 = vmatpush1.xpose.msra.mxu0 0.0
        %4498 = vmatprep.subr.mxu0 0.0
        %4499 = vmatpush1.xpose.msra.mxu0 0.0
        %4500 = vmatprep.subr.mxu0 0.0
        %4501 = vmatpush1.xpose.msra.mxu0 0.0
        %4502 = vmatprep.subr.mxu0 0.0
        %4503 = vmatpush1.xpose.msra.mxu0 0.0
        %4504 = vmatprep.subr.mxu0 0.0
        %4505 = vmatpush1.xpose.msra.mxu0 0.0
        %4506 = vmatprep.subr.mxu0 0.0
        %4507 = vmatpush1.xpose.msra.mxu0 0.0
        %4508 = vmatprep.subr.mxu0 0.0
        %4509 = vmatpush1.xpose.msra.mxu0 0.0
        %4510 = vmatprep.mubr.f32.mxu0 %v4439
        %4511 = vmatmul.mubr.f32.gmra.mrb[0].mxu0 %v4438
        %v4512 = vpop.f32.mrb[0].mxu0
        %v4513 = vadd.f32 0.0, %v4512
        %v4514 = vpop.f32.mrb[0].mxu0
        %4515 = vmatprep.mubr.f32.mxu0 %v4441
        %4516 = vmatmul.mubr.f32.gmra.mrb[0].mxu0 %v4440
        %v4517 = vpop.f32.mrb[0].mxu0
        %v4518 = vadd.f32 0.0, %v4517
        %v4519 = vpop.f32.mrb[0].mxu0
        %4520 = vmatprep.mubr.f32.mxu0 %v4443
        %4521 = vmatmul.mubr.f32.gmra.mrb[0].mxu0 %v4442
        %v4522 = vpop.f32.mrb[0].mxu0
        %v4523 = vadd.f32 0.0, %v4522
        %v4524 = vpop.f32.mrb[0].mxu0
        %4525 = vmatprep.mubr.f32.mxu0 %v4445
        %4526 = vmatmul.mubr.f32.gmra.mrb[0].mxu0 %v4444
        %v4527 = vpop.f32.mrb[0].mxu0
        %v4528 = vadd.f32 0.0, %v4527
        %v4529 = vpop.f32.mrb[0].mxu0
        %4530 = vdwg.mxu0
        %4531 = vst [vmem:[#allocation4 + $0x60] sm:$0xff] %v4513
        %4532 = vst [vmem:[#allocation4 + $0x68] sm:$0xff] %v4518
        %4533 = vst [vmem:[#allocation4 + $0x70] sm:$0xff] %v4523
        %4534 = vst [vmem:[#allocation4 + $0x78] sm:$0xff] %v4528
        %v4535 = vld [vmem:[%s9] sm:$0xff]
        %v4536 = vld [vmem:[%s9 + $0x8] sm:$0xff]
        %v4537 = vld [vmem:[%s9 + $0x10] sm:$0xff]
        %v4538 = vld [vmem:[%s9 + $0x18] sm:$0xff]
        %v4539 = vld [vmem:[%s9 + $0x20] sm:$0xff]
        %v4540 = vld [vmem:[%s9 + $0x28] sm:$0xff]
        %v4541 = vld [vmem:[%s9 + $0x30] sm:$0xff]
        %v4542 = vld [vmem:[%s9 + $0x38] sm:$0xff]
        %v4543 = vld [vmem:[%s9 + $0x40] sm:$0xff]
        %v4544 = vld [vmem:[%s9 + $0x48] sm:$0xff]
        %v4545 = vld [vmem:[%s9 + $0x50] sm:$0xff]
        %v4546 = vld [vmem:[%s9 + $0x58] sm:$0xff]
        %v4547 = vld [vmem:[%s9 + $0x60] sm:$0xff]
        %v4548 = vld [vmem:[%s9 + $0x68] sm:$0xff]
        %v4549 = vld [vmem:[%s9 + $0x70] sm:$0xff]
        %v4550 = vld [vmem:[%s9 + $0x78] sm:$0xff]
        %v4551 = vld [vmem:[#allocation4] sm:$0xff]
        %v4552 = vld [vmem:[#allocation4 + $0x8] sm:$0xff]
        %v4553 = vld [vmem:[#allocation4 + $0x10] sm:$0xff]
        %v4554 = vld [vmem:[#allocation4 + $0x18] sm:$0xff]
        %v4555 = vld [vmem:[#allocation4 + $0x20] sm:$0xff]
        %v4556 = vld [vmem:[#allocation4 + $0x28] sm:$0xff]
        %v4557 = vld [vmem:[#allocation4 + $0x30] sm:$0xff]
        %v4558 = vld [vmem:[#allocation4 + $0x38] sm:$0xff]
        %v4559 = vld [vmem:[#allocation4 + $0x40] sm:$0xff]
        %v4560 = vld [vmem:[#allocation4 + $0x48] sm:$0xff]
        %v4561 = vld [vmem:[#allocation4 + $0x50] sm:$0xff]
        %v4562 = vld [vmem:[#allocation4 + $0x58] sm:$0xff]
        %v4563 = vld [vmem:[#allocation4 + $0x60] sm:$0xff]
        %v4564 = vld [vmem:[#allocation4 + $0x68] sm:$0xff]
        %v4565 = vld [vmem:[#allocation4 + $0x70] sm:$0xff]
        %v4566 = vld [vmem:[#allocation4 + $0x78] sm:$0xff]
        %v4567 = vld [vmem:[%s10] sm:$0xff]
        %v4568 = vld [vmem:[%s10 + $0x8] sm:$0xff]
        %v4569 = vld [vmem:[%s10 + $0x10] sm:$0xff]
        %v4570 = vld [vmem:[%s10 + $0x18] sm:$0xff]
        %v4571 = vld [vmem:[%s10 + $0x20] sm:$0xff]
        %v4572 = vld [vmem:[%s10 + $0x28] sm:$0xff]
        %v4573 = vld [vmem:[%s10 + $0x30] sm:$0xff]
        %v4574 = vld [vmem:[%s10 + $0x38] sm:$0xff]
        %v4575 = vld [vmem:[%s10 + $0x40] sm:$0xff]
        %v4576 = vld [vmem:[%s10 + $0x48] sm:$0xff]
        %v4577 = vld [vmem:[%s10 + $0x50] sm:$0xff]
        %v4578 = vld [vmem:[%s10 + $0x58] sm:$0xff]
        %v4579 = vld [vmem:[%s10 + $0x60] sm:$0xff]
        %v4580 = vld [vmem:[%s10 + $0x68] sm:$0xff]
        %v4581 = vld [vmem:[%s10 + $0x70] sm:$0xff]
        %v4582 = vld [vmem:[%s10 + $0x78] sm:$0xff]
        %4584 = vset.pattern.permute.xlu0 0
        %4585 = vperm.xlu0 %4584, %v4567
        %v4586 = vpop.permute.xlu0 %4585
        %4589 = vset.pattern.permute.xlu0 0
        %4590 = vperm.xlu0 %4589, %v4568
        %v4591 = vpop.permute.xlu0 %4590
        %4594 = vset.pattern.permute.xlu0 0
        %4595 = vperm.xlu0 %4594, %v4569
        %v4596 = vpop.permute.xlu0 %4595
        %4599 = vset.pattern.permute.xlu0 0
        %4600 = vperm.xlu0 %4599, %v4570
        %v4601 = vpop.permute.xlu0 %4600
        %4604 = vset.pattern.permute.xlu0 0
        %4605 = vperm.xlu0 %4604, %v4571
        %v4606 = vpop.permute.xlu0 %4605
        %4609 = vset.pattern.permute.xlu0 0
        %4610 = vperm.xlu0 %4609, %v4572
        %v4611 = vpop.permute.xlu0 %4610
        %4614 = vset.pattern.permute.xlu0 0
        %4615 = vperm.xlu0 %4614, %v4573
        %v4616 = vpop.permute.xlu0 %4615
        %4619 = vset.pattern.permute.xlu0 0
        %4620 = vperm.xlu0 %4619, %v4574
        %v4621 = vpop.permute.xlu0 %4620
        %4624 = vset.pattern.permute.xlu0 0
        %4625 = vperm.xlu0 %4624, %v4575
        %v4626 = vpop.permute.xlu0 %4625
        %4629 = vset.pattern.permute.xlu0 0
        %4630 = vperm.xlu0 %4629, %v4576
        %v4631 = vpop.permute.xlu0 %4630
        %4634 = vset.pattern.permute.xlu0 0
        %4635 = vperm.xlu0 %4634, %v4577
        %v4636 = vpop.permute.xlu0 %4635
        %4639 = vset.pattern.permute.xlu0 0
        %4640 = vperm.xlu0 %4639, %v4578
        %v4641 = vpop.permute.xlu0 %4640
        %4644 = vset.pattern.permute.xlu0 0
        %4645 = vperm.xlu0 %4644, %v4579
        %v4646 = vpop.permute.xlu0 %4645
        %4649 = vset.pattern.permute.xlu0 0
        %4650 = vperm.xlu0 %4649, %v4580
        %v4651 = vpop.permute.xlu0 %4650
        %4654 = vset.pattern.permute.xlu0 0
        %4655 = vperm.xlu0 %4654, %v4581
        %v4656 = vpop.permute.xlu0 %4655
        %4659 = vset.pattern.permute.xlu0 0
        %4660 = vperm.xlu0 %4659, %v4582
        %v4661 = vpop.permute.xlu0 %4660
        %4663 = vmatprep.subr.mxu0 0.0
        %4664 = vmatpush1.msra.mxu0 %v4551
        %4665 = vmatprep.subr.mxu0 0.0
        %4666 = vmatpush1.msra.mxu0 %v4552
        %4667 = vmatprep.subr.mxu0 0.0
        %4668 = vmatpush1.msra.mxu0 %v4553
        %4669 = vmatprep.subr.mxu0 0.0
        %4670 = vmatpush1.msra.mxu0 %v4554
        %4671 = vmatprep.subr.mxu0 0.0
        %4672 = vmatpush1.msra.mxu0 %v4555
        %4673 = vmatprep.subr.mxu0 0.0
        %4674 = vmatpush1.msra.mxu0 %v4556
        %4675 = vmatprep.subr.mxu0 0.0
        %4676 = vmatpush1.msra.mxu0 %v4557
        %4677 = vmatprep.subr.mxu0 0.0
        %4678 = vmatpush1.msra.mxu0 %v4558
        %4679 = vmatprep.subr.mxu0 0.0
        %4680 = vmatpush1.msra.mxu0 %v4559
        %4681 = vmatprep.subr.mxu0 0.0
        %4682 = vmatpush1.msra.mxu0 %v4560
        %4683 = vmatprep.subr.mxu0 0.0
        %4684 = vmatpush1.msra.mxu0 %v4561
        %4685 = vmatprep.subr.mxu0 0.0
        %4686 = vmatpush1.msra.mxu0 %v4562
        %4687 = vmatprep.subr.mxu0 0.0
        %4688 = vmatpush1.msra.mxu0 %v4563
        %4689 = vmatprep.subr.mxu0 0.0
        %4690 = vmatpush1.msra.mxu0 %v4564
        %4691 = vmatprep.subr.mxu0 0.0
        %4692 = vmatpush1.msra.mxu0 %v4565
        %4693 = vmatprep.subr.mxu0 0.0
        %4694 = vmatpush1.msra.mxu0 %v4566
        %4695 = vmatprep.subr.mxu0 0.0
        %4696 = vmatpush1.msra.mxu0 0.0
        %4697 = vmatprep.subr.mxu0 0.0
        %4698 = vmatpush1.msra.mxu0 0.0
        %4699 = vmatprep.subr.mxu0 0.0
        %4700 = vmatpush1.msra.mxu0 0.0
        %4701 = vmatprep.subr.mxu0 0.0
        %4702 = vmatpush1.msra.mxu0 0.0
        %4703 = vmatprep.subr.mxu0 0.0
        %4704 = vmatpush1.msra.mxu0 0.0
        %4705 = vmatprep.subr.mxu0 0.0
        %4706 = vmatpush1.msra.mxu0 0.0
        %4707 = vmatprep.subr.mxu0 0.0
        %4708 = vmatpush1.msra.mxu0 0.0
        %4709 = vmatprep.subr.mxu0 0.0
        %4710 = vmatpush1.msra.mxu0 0.0
        %4711 = vmatprep.subr.mxu0 0.0
        %4712 = vmatpush1.msra.mxu0 0.0
        %4713 = vmatprep.subr.mxu0 0.0
        %4714 = vmatpush1.msra.mxu0 0.0
        %4715 = vmatprep.subr.mxu0 0.0
        %4716 = vmatpush1.msra.mxu0 0.0
        %4717 = vmatprep.subr.mxu0 0.0
        %4718 = vmatpush1.msra.mxu0 0.0
        %4719 = vmatprep.subr.mxu0 0.0
        %4720 = vmatpush1.msra.mxu0 0.0
        %4721 = vmatprep.subr.mxu0 0.0
        %4722 = vmatpush1.msra.mxu0 0.0
        %4723 = vmatprep.subr.mxu0 0.0
        %4724 = vmatpush1.msra.mxu0 0.0
        %4725 = vmatprep.subr.mxu0 0.0
        %4726 = vmatpush1.msra.mxu0 0.0
        %4727 = vmatprep.mubr.f32.mxu0 0.0
        %4728 = vmatmul.mubr.f32.gmra.mrb[0].mxu0 %v4535
        %v4729 = vpop.f32.mrb[0].mxu0
        %v4730 = vadd.f32 %v4586, %v4729
        %v4731 = vpop.f32.mrb[0].mxu0
        %4732 = vmatprep.mubr.f32.mxu0 0.0
        %4733 = vmatmul.mubr.f32.gmra.mrb[0].mxu0 %v4536
        %v4734 = vpop.f32.mrb[0].mxu0
        %v4735 = vadd.f32 %v4591, %v4734
        %v4736 = vpop.f32.mrb[0].mxu0
        %4737 = vmatprep.mubr.f32.mxu0 0.0
        %4738 = vmatmul.mubr.f32.gmra.mrb[0].mxu0 %v4537
        %v4739 = vpop.f32.mrb[0].mxu0
        %v4740 = vadd.f32 %v4596, %v4739
        %v4741 = vpop.f32.mrb[0].mxu0
        %4742 = vmatprep.mubr.f32.mxu0 0.0
        %4743 = vmatmul.mubr.f32.gmra.mrb[0].mxu0 %v4538
        %v4744 = vpop.f32.mrb[0].mxu0
        %v4745 = vadd.f32 %v4601, %v4744
        %v4746 = vpop.f32.mrb[0].mxu0
        %4747 = vmatprep.mubr.f32.mxu0 0.0
        %4748 = vmatmul.mubr.f32.gmra.mrb[0].mxu0 %v4539
        %v4749 = vpop.f32.mrb[0].mxu0
        %v4750 = vadd.f32 %v4606, %v4749
        %v4751 = vpop.f32.mrb[0].mxu0
        %4752 = vmatprep.mubr.f32.mxu0 0.0
        %4753 = vmatmul.mubr.f32.gmra.mrb[0].mxu0 %v4540
        %v4754 = vpop.f32.mrb[0].mxu0
        %v4755 = vadd.f32 %v4611, %v4754
        %v4756 = vpop.f32.mrb[0].mxu0
        %4757 = vmatprep.mubr.f32.mxu0 0.0
        %4758 = vmatmul.mubr.f32.gmra.mrb[0].mxu0 %v4541
        %v4759 = vpop.f32.mrb[0].mxu0
        %v4760 = vadd.f32 %v4616, %v4759
        %v4761 = vpop.f32.mrb[0].mxu0
        %4762 = vmatprep.mubr.f32.mxu0 0.0
        %4763 = vmatmul.mubr.f32.gmra.mrb[0].mxu0 %v4542
        %v4764 = vpop.f32.mrb[0].mxu0
        %v4765 = vadd.f32 %v4621, %v4764
        %v4766 = vpop.f32.mrb[0].mxu0
        %4767 = vmatprep.mubr.f32.mxu0 0.0
        %4768 = vmatmul.mubr.f32.gmra.mrb[0].mxu0 %v4543
        %v4769 = vpop.f32.mrb[0].mxu0
        %v4770 = vadd.f32 %v4626, %v4769
        %v4771 = vpop.f32.mrb[0].mxu0
        %4772 = vmatprep.mubr.f32.mxu0 0.0
        %4773 = vmatmul.mubr.f32.gmra.mrb[0].mxu0 %v4544
        %v4774 = vpop.f32.mrb[0].mxu0
        %v4775 = vadd.f32 %v4631, %v4774
        %v4776 = vpop.f32.mrb[0].mxu0
        %4777 = vmatprep.mubr.f32.mxu0 0.0
        %4778 = vmatmul.mubr.f32.gmra.mrb[0].mxu0 %v4545
        %v4779 = vpop.f32.mrb[0].mxu0
        %v4780 = vadd.f32 %v4636, %v4779
        %v4781 = vpop.f32.mrb[0].mxu0
        %4782 = vmatprep.mubr.f32.mxu0 0.0
        %4783 = vmatmul.mubr.f32.gmra.mrb[0].mxu0 %v4546
        %v4784 = vpop.f32.mrb[0].mxu0
        %v4785 = vadd.f32 %v4641, %v4784
        %v4786 = vpop.f32.mrb[0].mxu0
        %4787 = vmatprep.mubr.f32.mxu0 0.0
        %4788 = vmatmul.mubr.f32.gmra.mrb[0].mxu0 %v4547
        %v4789 = vpop.f32.mrb[0].mxu0
        %v4790 = vadd.f32 %v4646, %v4789
        %v4791 = vpop.f32.mrb[0].mxu0
        %4792 = vmatprep.mubr.f32.mxu0 0.0
        %4793 = vmatmul.mubr.f32.gmra.mrb[0].mxu0 %v4548
        %v4794 = vpop.f32.mrb[0].mxu0
        %v4795 = vadd.f32 %v4651, %v4794
        %v4796 = vpop.f32.mrb[0].mxu0
        %4797 = vmatprep.mubr.f32.mxu0 0.0
        %4798 = vmatmul.mubr.f32.gmra.mrb[0].mxu0 %v4549
        %v4799 = vpop.f32.mrb[0].mxu0
        %v4800 = vadd.f32 %v4656, %v4799
        %v4801 = vpop.f32.mrb[0].mxu0
        %4802 = vmatprep.mubr.f32.mxu0 0.0
        %4803 = vmatmul.mubr.f32.gmra.mrb[0].mxu0 %v4550
        %v4804 = vpop.f32.mrb[0].mxu0
        %v4805 = vadd.f32 %v4661, %v4804
        %v4806 = vpop.f32.mrb[0].mxu0
        %4807 = vdwg.mxu0
        %v4808 = vld [vmem:[%s650] sm:$0xff]
        %v4809 = vld [vmem:[%s650 + $0x8] sm:$0xff]
        %v4810 = vld [vmem:[%s650 + $0x10] sm:$0xff]
        %v4811 = vld [vmem:[%s650 + $0x18] sm:$0xff]
        %v4812 = vld [vmem:[%s650 + $0x20] sm:$0xff]
        %v4813 = vld [vmem:[%s650 + $0x28] sm:$0xff]
        %v4814 = vld [vmem:[%s650 + $0x30] sm:$0xff]
        %v4815 = vld [vmem:[%s650 + $0x38] sm:$0xff]
        %v4816 = vld [vmem:[%s650 + $0x40] sm:$0xff]
        %v4817 = vld [vmem:[%s650 + $0x48] sm:$0xff]
        %v4818 = vld [vmem:[%s650 + $0x50] sm:$0xff]
        %v4819 = vld [vmem:[%s650 + $0x58] sm:$0xff]
        %v4820 = vld [vmem:[%s650 + $0x60] sm:$0xff]
        %v4821 = vld [vmem:[%s650 + $0x68] sm:$0xff]
        %v4822 = vld [vmem:[%s650 + $0x70] sm:$0xff]
        %v4823 = vld [vmem:[%s650 + $0x78] sm:$0xff]
        %v4824 = vadd.f32 %v4808, %v4730
        %v4825 = vadd.f32 %v4809, %v4735
        %v4826 = vadd.f32 %v4810, %v4740
        %v4827 = vadd.f32 %v4811, %v4745
        %v4828 = vadd.f32 %v4812, %v4750
        %v4829 = vadd.f32 %v4813, %v4755
        %v4830 = vadd.f32 %v4814, %v4760
        %v4831 = vadd.f32 %v4815, %v4765
        %v4832 = vadd.f32 %v4816, %v4770
        %v4833 = vadd.f32 %v4817, %v4775
        %v4834 = vadd.f32 %v4818, %v4780
        %v4835 = vadd.f32 %v4819, %v4785
        %v4836 = vadd.f32 %v4820, %v4790
        %v4837 = vadd.f32 %v4821, %v4795
        %v4838 = vadd.f32 %v4822, %v4800
        %v4839 = vadd.f32 %v4823, %v4805
        %4840 = vst [vmem:[%s696] sm:$0xff] %v4824
        %4841 = vst [vmem:[%s696 + $0x8] sm:$0xff] %v4825
        %4842 = vst [vmem:[%s696 + $0x10] sm:$0xff] %v4826
        %4843 = vst [vmem:[%s696 + $0x18] sm:$0xff] %v4827
        %4844 = vst [vmem:[%s696 + $0x20] sm:$0xff] %v4828
        %4845 = vst [vmem:[%s696 + $0x28] sm:$0xff] %v4829
        %4846 = vst [vmem:[%s696 + $0x30] sm:$0xff] %v4830
        %4847 = vst [vmem:[%s696 + $0x38] sm:$0xff] %v4831
        %4848 = vst [vmem:[%s696 + $0x40] sm:$0xff] %v4832
        %4849 = vst [vmem:[%s696 + $0x48] sm:$0xff] %v4833
        %4850 = vst [vmem:[%s696 + $0x50] sm:$0xff] %v4834
        %4851 = vst [vmem:[%s696 + $0x58] sm:$0xff] %v4835
        %4852 = vst [vmem:[%s696 + $0x60] sm:$0xff] %v4836
        %4853 = vst [vmem:[%s696 + $0x68] sm:$0xff] %v4837
        %4854 = vst [vmem:[%s696 + $0x70] sm:$0xff] %v4838
        %4855 = vst [vmem:[%s696 + $0x78] sm:$0xff] %v4839
        %s4856 = sand.u32 %s296, 1
        %s4857 = sand.u32 %s296, 1
        %s4858 = smul.addr %s4857, 128
        %s4859 = scalar_lea.vmem [#allocation7], %s4858
        // Predicated region
        $region145: #{cross_attention.1} parent=131 // pred_check
          %p4860 = pneg %p306
        $region146: #{cross_attention.1} parent=131 // pred_check_branch
          %4862 = sbr.rel (%p4860) target = $region148
        $region147: #{cross_attention.1} parent=131 // pred_region
          %s4863 = smul.addr %s26, 32
          %s4864 = sadd.s32 %s27, %s4863
          %s4865 = smul.addr %s4864, 8
          %s4866 = scalar_lea.vmem %s11, %s4865
          // Predicated region
          $region149: #{cross_attention.1} parent=147 // pred_check
            _
          $region150: #{cross_attention.1} parent=147 // pred_check_branch
            %4868 = sbr.rel (0) target = $region152
          $region151: #{cross_attention.1} parent=147 // pred_region
            // Predicated region
            $region153: #{cross_attention.1} parent=151 // pred_check
              _
            $region154: #{cross_attention.1} parent=151 // pred_check_branch
              %4870 = sbr.rel (0) target = $region156
            $region155: #{cross_attention.1} parent=151 // pred_region
              // Predicated region
              $region168: #{cross_attention.1} parent=155 // pred_check
                _
              $region169: #{cross_attention.1} parent=155 // pred_check_branch
                %4915 = sbr.rel (0) target = $region171
              $region170: #{cross_attention.1} parent=155 // pred_region
                loop: start=0, step=1, limit=1
                $region172: #{cross_attention.1} parent=170 // loop_pre_header
                  _
                $region173: #{cross_attention.1} parent=170 // loop_header
                  %s4917 = sphi 0, %s4921
                  %p4918 = scmp.ge.s32.totalorder %s4917, 1
                  %s4922 = sphi %s4859, %s4859
                  %s4923 = sphi %s4866, %s4866
                $region174: #{cross_attention.1} parent=170 // loop_header_branch
                  %4920 = sbr.rel (%p4918) target = $region178
                $region175: #{cross_attention.1} parent=170 // loop_body
                  %v4924 = vld [vmem:[%s4922] sm:$0xff]
                  %4925 = vst [vmem:[%s4923] sm:$0xff] %v4924
                  %v4926 = vld [vmem:[%s4922 + $0x8] sm:$0xff]
                  %4927 = vst [vmem:[%s4923 + $0x10] sm:$0xff] %v4926
                  %v4928 = vld [vmem:[%s4922 + $0x10] sm:$0xff]
                  %4929 = vst [vmem:[%s4923 + $0x20] sm:$0xff] %v4928
                  %v4930 = vld [vmem:[%s4922 + $0x18] sm:$0xff]
                  %4931 = vst [vmem:[%s4923 + $0x30] sm:$0xff] %v4930
                  %v4932 = vld [vmem:[%s4922 + $0x20] sm:$0xff]
                  %4933 = vst [vmem:[%s4923 + $0x40] sm:$0xff] %v4932
                  %v4934 = vld [vmem:[%s4922 + $0x28] sm:$0xff]
                  %4935 = vst [vmem:[%s4923 + $0x50] sm:$0xff] %v4934
                  %v4936 = vld [vmem:[%s4922 + $0x30] sm:$0xff]
                  %4937 = vst [vmem:[%s4923 + $0x60] sm:$0xff] %v4936
                  %v4938 = vld [vmem:[%s4922 + $0x38] sm:$0xff]
                  %4939 = vst [vmem:[%s4923 + $0x70] sm:$0xff] %v4938
                  %v4940 = vld [vmem:[%s4922 + $0x40] sm:$0xff]
                  %4941 = vst [vmem:[%s4923 + $0x80] sm:$0xff] %v4940
                  %v4942 = vld [vmem:[%s4922 + $0x48] sm:$0xff]
                  %4943 = vst [vmem:[%s4923 + $0x90] sm:$0xff] %v4942
                  %v4944 = vld [vmem:[%s4922 + $0x50] sm:$0xff]
                  %4945 = vst [vmem:[%s4923 + $0xa0] sm:$0xff] %v4944
                  %v4946 = vld [vmem:[%s4922 + $0x58] sm:$0xff]
                  %4947 = vst [vmem:[%s4923 + $0xb0] sm:$0xff] %v4946
                  %v4948 = vld [vmem:[%s4922 + $0x60] sm:$0xff]
                  %4949 = vst [vmem:[%s4923 + $0xc0] sm:$0xff] %v4948
                  %v4950 = vld [vmem:[%s4922 + $0x68] sm:$0xff]
                  %4951 = vst [vmem:[%s4923 + $0xd0] sm:$0xff] %v4950
                  %v4952 = vld [vmem:[%s4922 + $0x70] sm:$0xff]
                  %4953 = vst [vmem:[%s4923 + $0xe0] sm:$0xff] %v4952
                  %v4954 = vld [vmem:[%s4922 + $0x78] sm:$0xff]
                  %4955 = vst [vmem:[%s4923 + $0xf0] sm:$0xff] %v4954
                $region176: #{cross_attention.1} parent=170 // loop_footer
                  %s4921 = sadd.s32 1, %s4917
                $region177: #{cross_attention.1} parent=170 // loop_footer_branch
                  %4916 = sbr.rel target = $region173
                $region178: #{cross_attention.1} parent=170 // loop_exit
                  _
              $region171: #{cross_attention.1} parent=155 // pred_fallthru
                _
              // Predicated region
              $region179: #{cross_attention.1} parent=155 // pred_check
                _
              $region180: #{cross_attention.1} parent=155 // pred_check_branch
                %4957 = sbr.rel target = $region182
              $region181: #{cross_attention.1} parent=155 // pred_region
                _
              $region182: #{cross_attention.1} parent=155 // pred_fallthru
                _
            $region156: #{cross_attention.1} parent=151 // pred_fallthru
              _
            // Predicated region
            $region157: #{cross_attention.1} parent=151 // pred_check
              _
            $region158: #{cross_attention.1} parent=151 // pred_check_branch
              %4872 = sbr.rel target = $region160
            $region159: #{cross_attention.1} parent=151 // pred_region
              loop: start=0, step=1, limit=1
              $region161: #{cross_attention.1} parent=159 // loop_pre_header
                _
              $region162: #{cross_attention.1} parent=159 // loop_header
                %s4875 = sphi 0, %s4879
                %p4876 = scmp.ge.s32.totalorder %s4875, 1
                %s4880 = sphi %s4859, %s4859
                %s4881 = sphi %s4866, %s4866
              $region163: #{cross_attention.1} parent=159 // loop_header_branch
                %4878 = sbr.rel (%p4876) target = $region167
              $region164: #{cross_attention.1} parent=159 // loop_body
                %v4882 = vld [vmem:[%s4880] sm:$0xff]
                %4883 = vst [vmem:[%s4881] sm:$0xff] %v4882
                %v4884 = vld [vmem:[%s4880 + $0x8] sm:$0xff]
                %4885 = vst [vmem:[%s4881 + $0x10] sm:$0xff] %v4884
                %v4886 = vld [vmem:[%s4880 + $0x10] sm:$0xff]
                %4887 = vst [vmem:[%s4881 + $0x20] sm:$0xff] %v4886
                %v4888 = vld [vmem:[%s4880 + $0x18] sm:$0xff]
                %4889 = vst [vmem:[%s4881 + $0x30] sm:$0xff] %v4888
                %v4890 = vld [vmem:[%s4880 + $0x20] sm:$0xff]
                %4891 = vst [vmem:[%s4881 + $0x40] sm:$0xff] %v4890
                %v4892 = vld [vmem:[%s4880 + $0x28] sm:$0xff]
                %4893 = vst [vmem:[%s4881 + $0x50] sm:$0xff] %v4892
                %v4894 = vld [vmem:[%s4880 + $0x30] sm:$0xff]
                %4895 = vst [vmem:[%s4881 + $0x60] sm:$0xff] %v4894
                %v4896 = vld [vmem:[%s4880 + $0x38] sm:$0xff]
                %4897 = vst [vmem:[%s4881 + $0x70] sm:$0xff] %v4896
                %v4898 = vld [vmem:[%s4880 + $0x40] sm:$0xff]
                %4899 = vst [vmem:[%s4881 + $0x80] sm:$0xff] %v4898
                %v4900 = vld [vmem:[%s4880 + $0x48] sm:$0xff]
                %4901 = vst [vmem:[%s4881 + $0x90] sm:$0xff] %v4900
                %v4902 = vld [vmem:[%s4880 + $0x50] sm:$0xff]
                %4903 = vst [vmem:[%s4881 + $0xa0] sm:$0xff] %v4902
                %v4904 = vld [vmem:[%s4880 + $0x58] sm:$0xff]
                %4905 = vst [vmem:[%s4881 + $0xb0] sm:$0xff] %v4904
                %v4906 = vld [vmem:[%s4880 + $0x60] sm:$0xff]
                %4907 = vst [vmem:[%s4881 + $0xc0] sm:$0xff] %v4906
                %v4908 = vld [vmem:[%s4880 + $0x68] sm:$0xff]
                %4909 = vst [vmem:[%s4881 + $0xd0] sm:$0xff] %v4908
                %v4910 = vld [vmem:[%s4880 + $0x70] sm:$0xff]
                %4911 = vst [vmem:[%s4881 + $0xe0] sm:$0xff] %v4910
                %v4912 = vld [vmem:[%s4880 + $0x78] sm:$0xff]
                %4913 = vst [vmem:[%s4881 + $0xf0] sm:$0xff] %v4912
              $region165: #{cross_attention.1} parent=159 // loop_footer
                %s4879 = sadd.s32 1, %s4875
              $region166: #{cross_attention.1} parent=159 // loop_footer_branch
                %4874 = sbr.rel target = $region162
              $region167: #{cross_attention.1} parent=159 // loop_exit
                _
            $region160: #{cross_attention.1} parent=151 // pred_fallthru
              _
          $region152: #{cross_attention.1} parent=147 // pred_fallthru
            _
          %4958 = vnop
        $region148: #{cross_attention.1} parent=131 // pred_fallthru
          _
      $region132: #{cross_attention.1} parent=5 // pred_fallthru
        _
      %p4959 = scmp.le.s32.totalorder 2, %s17
      // Predicated region
      $region183: #{cross_attention.1} parent=5 // pred_check
        %p4960 = pneg %p4959
      $region184: #{cross_attention.1} parent=5 // pred_check_branch
        %4962 = sbr.rel (%p4960) target = $region186
      $region185: #{cross_attention.1} parent=5 // pred_region
        %s4963 = ssub.s32 %s17, 2
        // Predicated region
        $region187: #{cross_attention.1} parent=185 // pred_check
          %p4964 = pneg %p312
        $region188: #{cross_attention.1} parent=185 // pred_check_branch
          %4966 = sbr.rel (%p4964) target = $region190
        $region189: #{cross_attention.1} parent=185 // pred_region
          %s4967 = sand.u32 %s297, 1
          %s4968 = sand.u32 %s297, 1
          %s4969 = smul.addr %s4968, 128
          %s4970 = scalar_lea.vmem [#allocation7], %s4969
        $region190: #{cross_attention.1} parent=185 // pred_fallthru
          _
      $region186: #{cross_attention.1} parent=5 // pred_fallthru
        _
    $region6: #{cross_attention.1} parent=1 // loop_footer
      %s21 = sadd.s32 1, %s17
    $region7: #{cross_attention.1} parent=1 // loop_footer_branch
      %16 = sbr.rel target = $region3
    $region8: #{cross_attention.1} parent=1 // loop_exit
      _

</llo_original>
